<compile_context>
chip_gen: v5e
topology: v5e:2x2
jax: 0.10.0
libtpu: 0.0.40
codegen_flags: <defaults>
</compile_context>

<pallas_src>
import functools

import jax
import jax.numpy as jnp
from jax.experimental import pallas as pl
from jax.experimental.pallas import tpu as pltpu


_VMEM_LIMIT = 32 * 1024 * 1024  # explicit scoped-VMEM budget, safe on v5e/v6e/v7x


def _conv_plan(c, h, w):
    """(H_l, W_l, Cin_l, Cout_l) for the 4 conv+pool stages."""
    return ((h, w, c, 32),
            (h // 2, w // 2, 32, 32),
            (h // 4, w // 4, 32, 64),
            (h // 8, w // 8, 64, 64))


# -----------------------------------------------------------------------------
# Fully fused forward kernel (per batch tile of Nt images)
# -----------------------------------------------------------------------------
def _fused_forward_kernel(x_ref,
                          cw1, cb1, cw2, cb2, cw3, cb3, cw4, cb4,
                          hw1, hb1, hw2, hb2,
                          o_ref,
                          s1, s2, s3, s4,
                          *, plan, nt, hf):
    conv_w = (cw1, cw2, cw3, cw4)
    conv_b = (cb1, cb2, cb3, cb4)
    scratch = (s1, s2, s3, s4)

    # Stage-1 input: (H, Nt, W*C) -> (H*Nt, W*C); rows (y, n), cols (x, c).
    h0, w0, c0, _ = plan[0]
    act = x_ref[...].reshape(h0 * nt, w0 * c0)

    for li, (hl, wl, cin, cout) in enumerate(plan):
        s_ref, w_ref, b_ref = scratch[li], conv_w[li], conv_b[li]
        k = wl * cin
        m = hl * nt

        # Stage input staged into a y-padded VMEM scratch (rows: (y+1, n)).
        s_ref[pl.ds(0, nt), :] = jnp.zeros((nt, k), jnp.float32)
        s_ref[pl.ds((hl + 1) * nt, nt), :] = jnp.zeros((nt, k), jnp.float32)
        s_ref[pl.ds(nt, m), :] = act

        # conv3x3(pad=1): three banded MXU matmuls (one per kernel row dy),
        # bf16 operands, f32 accumulation; batch is folded into M = hl*nt.
        acc = jnp.dot(s_ref[pl.ds(0, m), :].astype(jnp.bfloat16), w_ref[0],
                      preferred_element_type=jnp.float32)
        acc = acc + jnp.dot(s_ref[pl.ds(nt, m), :].astype(jnp.bfloat16), w_ref[1],
                            preferred_element_type=jnp.float32)
        acc = acc + jnp.dot(s_ref[pl.ds(2 * nt, m), :].astype(jnp.bfloat16), w_ref[2],
                            preferred_element_type=jnp.float32)

        # Bias + ReLU + 2x2/stride-2 maxpool, all on register values.
        z = jnp.maximum(acc + b_ref[...], 0.0)                 # (m, wl*cout)
        half = (wl // 2) * cout
        v = jnp.maximum(z[:, :half], z[:, half:])              # x-pool (col halves)
        rows = []
        for yo in range(hl // 2):                              # y-pool (row slabs)
            rows.append(jnp.maximum(v[2 * yo * nt:(2 * yo + 1) * nt, :],
                                    v[(2 * yo + 1) * nt:(2 * yo + 2) * nt, :]))
        act = rows[0] if len(rows) == 1 else jnp.concatenate(rows, axis=0)
        # act: ((hl//2)*nt, (wl//2)*cout), rows (y, n), cols (x, c) -> next stage

    # Fused policy+value head; hidden (Nt, 1024) never leaves registers/VMEM.
    hacc = jnp.dot(act[0:nt, :].astype(jnp.bfloat16), hw1[0],
                   preferred_element_type=jnp.float32)
    for y in range(1, hf):
        hacc = hacc + jnp.dot(act[y * nt:(y + 1) * nt, :].astype(jnp.bfloat16),
                              hw1[y], preferred_element_type=jnp.float32)
    hid = jnp.maximum(hacc + hb1[...], 0.0)
    out = jnp.dot(hid.astype(jnp.bfloat16), hw2[...],
                  preferred_element_type=jnp.float32) + hb2[...]
    o_ref[...] = out                                           # (Nt, 128) lane-dense


def _pick_batch_tile(n, h, w):
    """Images folded into the matmul M dim.  Prefer tiles that divide N, keep
    >=2 grid steps (both v7x TensorCores busy) and bound the stage-1 f32
    accumulator to ~2 MiB."""
    cap = max(1, (2 * 1024 * 1024) // (h * w * 32 * 4))
    for t in (16, 8, 4, 2):
        if t <= cap and n % t == 0 and (n // t) >= 2:
            return t
    return 1


def fused_forward(xg, params, *, plan, nt, hf):
    g = xg.shape[0]
    h0, w0, c0, _ = plan[0]
    cw, cb = params["conv_w"], params["conv_b"]
    hw1, hb1, hw2, hb2 = params["hw1"], params["hb1"], params["hw2"], params["hb2"]
    f_row = hw1.shape[1]
    p_pad = hw2.shape[1]

    in_specs = [pl.BlockSpec((None, h0, nt, w0 * c0), lambda i: (i, 0, 0, 0))]
    for (hl, wl, cin, cout) in plan:
        in_specs.append(pl.BlockSpec((3, wl * cin, wl * cout), lambda i: (0, 0, 0)))
        in_specs.append(pl.BlockSpec((1, wl * cout), lambda i: (0, 0)))
    in_specs += [
        pl.BlockSpec((hf, f_row, hw1.shape[2]), lambda i: (0, 0, 0)),
        pl.BlockSpec((1, hb1.shape[1]), lambda i: (0, 0)),
        pl.BlockSpec((hw2.shape[0], p_pad), lambda i: (0, 0)),
        pl.BlockSpec((1, p_pad), lambda i: (0, 0)),
    ]
    scratch_shapes = [pltpu.VMEM(((hl + 2) * nt, wl * cin), jnp.float32)
                      for (hl, wl, cin, cout) in plan]

    kernel = functools.partial(_fused_forward_kernel, plan=plan, nt=nt, hf=hf)
    return pl.pallas_call(
        kernel,
        out_shape=jax.ShapeDtypeStruct((g, nt, p_pad), jnp.float32),
        grid=(g,),
        in_specs=in_specs,
        out_specs=pl.BlockSpec((None, nt, p_pad), lambda i: (i, 0, 0)),
        scratch_shapes=scratch_shapes,
        compiler_params=pltpu.CompilerParams(
            dimension_semantics=("parallel",),
            vmem_limit_bytes=_VMEM_LIMIT),
    )(xg, cw[0], cb[0], cw[1], cb[1], cw[2], cb[2], cw[3], cb[3],
      hw1, hb1, hw2, hb2)


def model_forward(params, state_nchw, *, outputs_count):
    """state_nchw: (N, C, H, W) f32 -> (policy (N, outputs), value (N, 1))."""
    n, c, h, w = state_nchw.shape
    assert h % 16 == 0 and w % 16 == 0, "spatial dims must be divisible by 16"
    plan = _conv_plan(c, h, w)
    hf = h // 16
    nt = _pick_batch_tile(n, h, w)
    g = n // nt
    # Single layout transform: (N,C,H,W) -> (G, H, Nt, W*C); rows y-major /
    # image-minor inside a tile, channels minor in the lane dim.
    xg = (state_nchw.reshape(g, nt, c, h, w)
          .transpose(0, 3, 1, 4, 2)
          .reshape(g, h, nt, w * c))
    out = fused_forward(xg, params, plan=plan, nt=nt, hf=hf)   # (G, Nt, 128)
    out = out.reshape(n, -1)
    policy = out[:, :outputs_count]
    value = out[:, outputs_count:outputs_count + 1]
    return policy, value


# -----------------------------------------------------------------------------
# Parameter construction (synthetic init matching the PyTorch module's shapes;
# conv weights HWIO, linear weights (in, out) -- porting torch weights only
# needs the obvious transposes before calling the builders below).
# -----------------------------------------------------------------------------
def _banded_conv_weight(w_hwio, wl):
    """(3,3,Cin,Cout) -> (3, wl*Cin, wl*Cout) bf16 banded matrices.  Output
    columns ordered (x_out%2, x_out//2, cout) so the horizontal pool half is a
    max of two contiguous column halves; out-of-range x taps are dropped
    (implicit zero padding in x)."""
    cin, cout = w_hwio.shape[2], w_hwio.shape[3]
    wo = wl // 2
    big = jnp.zeros((3, wl * cin, wl * cout), jnp.float32)
    for xo in range(wl):
        col = (xo % 2) * (wo * cout) + (xo // 2) * cout
        for dx in range(3):
            xi = xo + dx - 1
            if 0 <= xi < wl:
                big = big.at[:, xi * cin:(xi + 1) * cin, col:col + cout].set(
                    w_hwio[:, dx])
    return big.astype(jnp.bfloat16)


def init_params(key, input_shape, outputs_count):
    c, h, w = input_shape
    assert h % 16 == 0 and w % 16 == 0, "spatial dims must be divisible by 16"
    hf, wf = h // 16, w // 16
    feat = hf * wf * 64
    plan = _conv_plan(c, h, w)
    keys = jax.random.split(key, 12)

    def uni(k, shape, bound):
        return jax.random.uniform(k, shape, jnp.float32, -bound, bound)

    raw_conv, conv_w, conv_b = [], [], []
    for i, (hl, wl, cin, cout) in enumerate(plan):
        xb = (6.0 / (cin * 9 + cout * 9)) ** 0.5        # xavier_uniform (as in module)
        wk = uni(keys[2 * i], (3, 3, cin, cout), xb)     # HWIO
        bk = uni(keys[2 * i + 1], (cout,), (cin * 9) ** -0.5)
        raw_conv.append((wk, bk))
        conv_w.append(_banded_conv_weight(wk, wl))
        conv_b.append(jnp.tile(bk, wl).reshape(1, wl * cout).astype(jnp.float32))

    def lin(k, fin, fout):
        k1, k2 = jax.random.split(k)
        b = fin ** -0.5
        return uni(k1, (fin, fout), b), uni(k2, (fout,), b)

    pol1_w, pol1_b = lin(keys[8], feat, 512)
    pol2_w, pol2_b = lin(keys[9], 512, outputs_count)
    val1_w, val1_b = lin(keys[10], feat, 512)
    val2_w, val2_b = lin(keys[11], 512, 1)
    raw = {"conv": raw_conv,
           "lin": {"pol1": (pol1_w, pol1_b), "pol2": (pol2_w, pol2_b),
                   "val1": (val1_w, val1_b), "val2": (val2_w, val2_b)}}

    # Fused head: features -> 1024 hidden -> (outputs+1), padded to 128 lanes.
    w1 = jnp.concatenate([pol1_w, val1_w], axis=1)               # (feat, 1024)
    b1 = jnp.concatenate([pol1_b, val1_b]).reshape(1, 1024)
    # Permute rows from NCHW-flatten order (c, y, x) to the kernel's per-row
    # (x, c) feature layout, split into hf spatial-row blocks.
    hw1 = (w1.reshape(64, hf, wf, 1024).transpose(1, 2, 0, 3)
             .reshape(hf, wf * 64, 1024)).astype(jnp.bfloat16)

    p_pad = ((outputs_count + 1 + 127) // 128) * 128
    hw2 = jnp.zeros((1024, p_pad), jnp.float32)
    hw2 = hw2.at[:512, :outputs_count].set(pol2_w)
    hw2 = hw2.at[512:, outputs_count].set(val2_w[:, 0])
    hb2 = jnp.zeros((1, p_pad), jnp.float32)
    hb2 = hb2.at[0, :outputs_count].set(pol2_b)
    hb2 = hb2.at[0, outputs_count].set(val2_b[0])

    params = {"conv_w": conv_w, "conv_b": conv_b,
              "hw1": hw1, "hb1": b1.astype(jnp.float32),
              "hw2": hw2.astype(jnp.bfloat16), "hb2": hb2}
    return params, raw


# -----------------------------------------------------------------------------
# Pure-JAX reference (same bf16 operand rounding) for a self-check.
# -----------------------------------------------------------------------------
def reference_forward(raw, x_nchw):
    bf = jnp.bfloat16
    a = jnp.transpose(x_nchw, (0, 2, 3, 1))              # NHWC, f32
    for (wk, bk) in raw["conv"]:
        y = jax.lax.conv_general_dilated(
            a.astype(bf), wk.astype(bf), window_strides=(1, 1),
            padding=((1, 1), (1, 1)),
            dimension_numbers=("NHWC", "HWIO", "NHWC"),
            preferred_element_type=jnp.float32)
        y = jnp.maximum(y + bk, 0.0)
        n_, hh, ww, cc = y.shape
        a = y.reshape(n_, hh // 2, 2, ww // 2, 2, cc).max(axis=(2, 4))
    n_ = a.shape[0]
    feat = jnp.transpose(a, (0, 3, 1, 2)).reshape(n_, -1)  # NCHW flatten

    def mm(x_, w_):
        return jnp.dot(x_.astype(bf), w_.astype(bf),
                       preferred_element_type=jnp.float32)

    p1w, p1b = raw["lin"]["pol1"]; p2w, p2b = raw["lin"]["pol2"]
    v1w, v1b = raw["lin"]["val1"]; v2w, v2b = raw["lin"]["val2"]
    pol = mm(jnp.maximum(mm(feat, p1w) + p1b, 0.0), p2w) + p2b
    val = mm(jnp.maximum(mm(feat, v1w) + v1b, 0.0), v2w) + v2b
    return pol, val


# -----------------------------------------------------------------------------
if __name__ == "__main__":
    input_shape = (4, 16, 16)      # (C, H, W); spatial divisible by 2**4
    outputs_count = 4
    batch = 2

    key = jax.random.PRNGKey(0)
    k_params, k_x = jax.random.split(key)
    params, raw = init_params(k_params, input_shape, outputs_count)
    x = jax.random.normal(k_x, (batch,) + input_shape, jnp.float32)

    fwd = jax.jit(functools.partial(model_forward, outputs_count=outputs_count))
    policy, value = fwd(params, x)
    jax.block_until_ready(policy)
    jax.block_until_ready(value)

    assert policy.shape == (batch, outputs_count), policy.shape
    assert value.shape == (batch, 1), value.shape
    assert bool(jnp.all(jnp.isfinite(policy))) and bool(jnp.all(jnp.isfinite(value)))

    pol_ref, val_ref = jax.jit(reference_forward)(raw, x)
    err_p = float(jnp.max(jnp.abs(policy - pol_ref)))
    err_v = float(jnp.max(jnp.abs(value - val_ref)))
    assert err_p < 2e-2 and err_v < 2e-2, (err_p, err_v)

    print("KERNEL_OK")
</pallas_src>

<mosaic_0001>
module attributes {stable_mosaic.version = 11 : i64} {
  func.func @_fused_forward_kernel(%arg0: i32, %arg1: memref<1x16x1x64xf32, #tpu.memory_space<vmem>>, %arg2: memref<3x64x512xbf16, #tpu.memory_space<vmem>>, %arg3: memref<1x512xf32, #tpu.memory_space<vmem>>, %arg4: memref<3x256x256xbf16, #tpu.memory_space<vmem>>, %arg5: memref<1x256xf32, #tpu.memory_space<vmem>>, %arg6: memref<3x128x256xbf16, #tpu.memory_space<vmem>>, %arg7: memref<1x256xf32, #tpu.memory_space<vmem>>, %arg8: memref<3x128x128xbf16, #tpu.memory_space<vmem>>, %arg9: memref<1x128xf32, #tpu.memory_space<vmem>>, %arg10: memref<1x64x1024xbf16, #tpu.memory_space<vmem>>, %arg11: memref<1x1024xf32, #tpu.memory_space<vmem>>, %arg12: memref<1024x128xbf16, #tpu.memory_space<vmem>>, %arg13: memref<1x128xf32, #tpu.memory_space<vmem>>, %arg14: memref<1x1x128xf32, #tpu.memory_space<vmem>>, %arg15: memref<18x64xf32, #tpu.memory_space<vmem>>, %arg16: memref<10x256xf32, #tpu.memory_space<vmem>>, %arg17: memref<6x128xf32, #tpu.memory_space<vmem>>, %arg18: memref<4x128xf32, #tpu.memory_space<vmem>>) attributes {dimension_semantics = [#tpu.dimension_semantics<parallel>], iteration_bounds = array<i64: 2>, scalar_prefetch = 0 : i64, scratch_operands = 4 : i64, tpu.core_type = #tpu.core_type<tc>, window_params = [{transform_indices = @transform_0, window_bounds = array<i64: 1, 16, 1, 64>}, {pipeline_mode = #tpu.pipeline_mode<synchronous>, transform_indices = @transform_1, window_bounds = array<i64: 3, 64, 512>}, {pipeline_mode = #tpu.pipeline_mode<synchronous>, transform_indices = @transform_2, window_bounds = array<i64: 1, 512>}, {pipeline_mode = #tpu.pipeline_mode<synchronous>, transform_indices = @transform_3, window_bounds = array<i64: 3, 256, 256>}, {pipeline_mode = #tpu.pipeline_mode<synchronous>, transform_indices = @transform_4, window_bounds = array<i64: 1, 256>}, {pipeline_mode = #tpu.pipeline_mode<synchronous>, transform_indices = @transform_5, window_bounds = array<i64: 3, 128, 256>}, {pipeline_mode = #tpu.pipeline_mode<synchronous>, transform_indices = @transform_6, window_bounds = array<i64: 1, 256>}, {pipeline_mode = #tpu.pipeline_mode<synchronous>, transform_indices = @transform_7, window_bounds = array<i64: 3, 128, 128>}, {pipeline_mode = #tpu.pipeline_mode<synchronous>, transform_indices = @transform_8, window_bounds = array<i64: 1, 128>}, {pipeline_mode = #tpu.pipeline_mode<synchronous>, transform_indices = @transform_9, window_bounds = array<i64: 1, 64, 1024>}, {pipeline_mode = #tpu.pipeline_mode<synchronous>, transform_indices = @transform_10, window_bounds = array<i64: 1, 1024>}, {pipeline_mode = #tpu.pipeline_mode<synchronous>, transform_indices = @transform_11, window_bounds = array<i64: 1024, 128>}, {pipeline_mode = #tpu.pipeline_mode<synchronous>, transform_indices = @transform_12, window_bounds = array<i64: 1, 128>}, {transform_indices = @transform_13, window_bounds = array<i64: 1, 1, 128>}]} {
    %c0 = arith.constant 0 : index
    %c0_0 = arith.constant 0 : index
    %c0_1 = arith.constant 0 : index
    %c0_2 = arith.constant 0 : index
    %0 = vector.load %arg1[%c0, %c0_0, %c0_1, %c0_2] : memref<1x16x1x64xf32, #tpu.memory_space<vmem>>, vector<1x16x1x64xf32>
    %1 = vector.shape_cast %0 : vector<1x16x1x64xf32> to vector<16x1x64xf32>
    %2 = vector.shape_cast %1 : vector<16x1x64xf32> to vector<16x64xf32>
    %cst = arith.constant 0.000000e+00 : f32
    %3 = vector.broadcast %cst : f32 to vector<1x64xf32>
    %c0_3 = arith.constant 0 : index
    %c0_4 = arith.constant 0 : index
    %4 = vector.load %arg15[%c0_3, %c0_4] : memref<18x64xf32, #tpu.memory_space<vmem>>, vector<1x64xf32>
    tpu.vector_store %arg15[%c0_3, %c0_4], %3 {strides = array<i32>} : memref<18x64xf32, #tpu.memory_space<vmem>>, vector<1x64xf32>,
    %cst_5 = arith.constant 0.000000e+00 : f32
    %5 = vector.broadcast %cst_5 : f32 to vector<1x64xf32>
    %c17 = arith.constant 17 : index
    %c0_6 = arith.constant 0 : index
    %6 = vector.load %arg15[%c17, %c0_6] : memref<18x64xf32, #tpu.memory_space<vmem>>, vector<1x64xf32>
    tpu.vector_store %arg15[%c17, %c0_6], %5 {strides = array<i32>} : memref<18x64xf32, #tpu.memory_space<vmem>>, vector<1x64xf32>,
    %c1 = arith.constant 1 : index
    %c0_7 = arith.constant 0 : index
    %7 = vector.load %arg15[%c1, %c0_7] : memref<18x64xf32, #tpu.memory_space<vmem>>, vector<16x64xf32>
    tpu.vector_store %arg15[%c1, %c0_7], %2 {strides = array<i32>} : memref<18x64xf32, #tpu.memory_space<vmem>>, vector<16x64xf32>,
    %c0_8 = arith.constant 0 : index
    %c0_9 = arith.constant 0 : index
    %8 = vector.load %arg15[%c0_8, %c0_9] : memref<18x64xf32, #tpu.memory_space<vmem>>, vector<16x64xf32>
    %9 = arith.truncf %8 : vector<16x64xf32> to vector<16x64xbf16>
    %c0_10 = arith.constant 0 : index
    %c0_11 = arith.constant 0 : index
    %c0_12 = arith.constant 0 : index
    %10 = vector.load %arg2[%c0_10, %c0_11, %c0_12] : memref<3x64x512xbf16, #tpu.memory_space<vmem>>, vector<1x64x512xbf16>
    %11 = vector.shape_cast %10 : vector<1x64x512xbf16> to vector<64x512xbf16>
    %cst_13 = arith.constant dense<0.000000e+00> : vector<16x512xf32>
    %12 = tpu.matmul %9, %11, %cst_13 {dimension_numbers = #tpu.dot_dimension_numbers<[1], [0], [0], [1], [0, 0, 1, 1], [], []>} : vector<16x64xbf16>, vector<64x512xbf16>, vector<16x512xf32> -> vector<16x512xf32>
    %c1_14 = arith.constant 1 : index
    %c0_15 = arith.constant 0 : index
    %13 = vector.load %arg15[%c1_14, %c0_15] : memref<18x64xf32, #tpu.memory_space<vmem>>, vector<16x64xf32>
    %14 = arith.truncf %13 : vector<16x64xf32> to vector<16x64xbf16>
    %c1_16 = arith.constant 1 : index
    %c0_17 = arith.constant 0 : index
    %c0_18 = arith.constant 0 : index
    %15 = vector.load %arg2[%c1_16, %c0_17, %c0_18] : memref<3x64x512xbf16, #tpu.memory_space<vmem>>, vector<1x64x512xbf16>
    %16 = vector.shape_cast %15 : vector<1x64x512xbf16> to vector<64x512xbf16>
    %cst_19 = arith.constant dense<0.000000e+00> : vector<16x512xf32>
    %17 = tpu.matmul %14, %16, %cst_19 {dimension_numbers = #tpu.dot_dimension_numbers<[1], [0], [0], [1], [0, 0, 1, 1], [], []>} : vector<16x64xbf16>, vector<64x512xbf16>, vector<16x512xf32> -> vector<16x512xf32>
    %18 = arith.addf %12, %17 : vector<16x512xf32>
    %c2 = arith.constant 2 : index
    %c0_20 = arith.constant 0 : index
    %19 = vector.load %arg15[%c2, %c0_20] : memref<18x64xf32, #tpu.memory_space<vmem>>, vector<16x64xf32>
    %20 = arith.truncf %19 : vector<16x64xf32> to vector<16x64xbf16>
    %c2_21 = arith.constant 2 : index
    %c0_22 = arith.constant 0 : index
    %c0_23 = arith.constant 0 : index
    %21 = vector.load %arg2[%c2_21, %c0_22, %c0_23] : memref<3x64x512xbf16, #tpu.memory_space<vmem>>, vector<1x64x512xbf16>
    %22 = vector.shape_cast %21 : vector<1x64x512xbf16> to vector<64x512xbf16>
    %cst_24 = arith.constant dense<0.000000e+00> : vector<16x512xf32>
    %23 = tpu.matmul %20, %22, %cst_24 {dimension_numbers = #tpu.dot_dimension_numbers<[1], [0], [0], [1], [0, 0, 1, 1], [], []>} : vector<16x64xbf16>, vector<64x512xbf16>, vector<16x512xf32> -> vector<16x512xf32>
    %24 = arith.addf %18, %23 : vector<16x512xf32>
    %c0_25 = arith.constant 0 : index
    %c0_26 = arith.constant 0 : index
    %25 = vector.load %arg3[%c0_25, %c0_26] : memref<1x512xf32, #tpu.memory_space<vmem>>, vector<1x512xf32>
    %26 = vector.broadcast %25 : vector<1x512xf32> to vector<16x512xf32>
    %27 = arith.addf %24, %26 : vector<16x512xf32>
    %cst_27 = arith.constant 0.000000e+00 : f32
    %28 = vector.broadcast %cst_27 : f32 to vector<16x512xf32>
    %29 = arith.maximumf %27, %28 : vector<16x512xf32>
    %30 = vector.extract_strided_slice %29 {offsets = [0, 0], sizes = [16, 256], strides = [1, 1]} : vector<16x512xf32> to vector<16x256xf32>
    %31 = vector.extract_strided_slice %29 {offsets = [0, 256], sizes = [16, 256], strides = [1, 1]} : vector<16x512xf32> to vector<16x256xf32>
    %32 = arith.maximumf %30, %31 : vector<16x256xf32>
    %33 = vector.extract_strided_slice %32 {offsets = [0, 0], sizes = [1, 256], strides = [1, 1]} : vector<16x256xf32> to vector<1x256xf32>
    %34 = vector.extract_strided_slice %32 {offsets = [1, 0], sizes = [1, 256], strides = [1, 1]} : vector<16x256xf32> to vector<1x256xf32>
    %35 = arith.maximumf %33, %34 : vector<1x256xf32>
    %36 = vector.extract_strided_slice %32 {offsets = [2, 0], sizes = [1, 256], strides = [1, 1]} : vector<16x256xf32> to vector<1x256xf32>
    %37 = vector.extract_strided_slice %32 {offsets = [3, 0], sizes = [1, 256], strides = [1, 1]} : vector<16x256xf32> to vector<1x256xf32>
    %38 = arith.maximumf %36, %37 : vector<1x256xf32>
    %39 = vector.extract_strided_slice %32 {offsets = [4, 0], sizes = [1, 256], strides = [1, 1]} : vector<16x256xf32> to vector<1x256xf32>
    %40 = vector.extract_strided_slice %32 {offsets = [5, 0], sizes = [1, 256], strides = [1, 1]} : vector<16x256xf32> to vector<1x256xf32>
    %41 = arith.maximumf %39, %40 : vector<1x256xf32>
    %42 = vector.extract_strided_slice %32 {offsets = [6, 0], sizes = [1, 256], strides = [1, 1]} : vector<16x256xf32> to vector<1x256xf32>
    %43 = vector.extract_strided_slice %32 {offsets = [7, 0], sizes = [1, 256], strides = [1, 1]} : vector<16x256xf32> to vector<1x256xf32>
    %44 = arith.maximumf %42, %43 : vector<1x256xf32>
    %45 = vector.extract_strided_slice %32 {offsets = [8, 0], sizes = [1, 256], strides = [1, 1]} : vector<16x256xf32> to vector<1x256xf32>
    %46 = vector.extract_strided_slice %32 {offsets = [9, 0], sizes = [1, 256], strides = [1, 1]} : vector<16x256xf32> to vector<1x256xf32>
    %47 = arith.maximumf %45, %46 : vector<1x256xf32>
    %48 = vector.extract_strided_slice %32 {offsets = [10, 0], sizes = [1, 256], strides = [1, 1]} : vector<16x256xf32> to vector<1x256xf32>
    %49 = vector.extract_strided_slice %32 {offsets = [11, 0], sizes = [1, 256], strides = [1, 1]} : vector<16x256xf32> to vector<1x256xf32>
    %50 = arith.maximumf %48, %49 : vector<1x256xf32>
    %51 = vector.extract_strided_slice %32 {offsets = [12, 0], sizes = [1, 256], strides = [1, 1]} : vector<16x256xf32> to vector<1x256xf32>
    %52 = vector.extract_strided_slice %32 {offsets = [13, 0], sizes = [1, 256], strides = [1, 1]} : vector<16x256xf32> to vector<1x256xf32>
    %53 = arith.maximumf %51, %52 : vector<1x256xf32>
    %54 = vector.extract_strided_slice %32 {offsets = [14, 0], sizes = [1, 256], strides = [1, 1]} : vector<16x256xf32> to vector<1x256xf32>
    %55 = vector.extract_strided_slice %32 {offsets = [15, 0], sizes = [1, 256], strides = [1, 1]} : vector<16x256xf32> to vector<1x256xf32>
    %56 = arith.maximumf %54, %55 : vector<1x256xf32>
    %57 = tpu.concatenate %35, %38, %41, %44, %47, %50, %53, %56 in 0 : vector<1x256xf32>, vector<1x256xf32>, vector<1x256xf32>, vector<1x256xf32>, vector<1x256xf32>, vector<1x256xf32>, vector<1x256xf32>, vector<1x256xf32> -> vector<8x256xf32>
    %cst_28 = arith.constant 0.000000e+00 : f32
    %58 = vector.broadcast %cst_28 : f32 to vector<1x256xf32>
    %c0_29 = arith.constant 0 : index
    %c0_30 = arith.constant 0 : index
    %59 = vector.load %arg16[%c0_29, %c0_30] : memref<10x256xf32, #tpu.memory_space<vmem>>, vector<1x256xf32>
    tpu.vector_store %arg16[%c0_29, %c0_30], %58 {strides = array<i32>} : memref<10x256xf32, #tpu.memory_space<vmem>>, vector<1x256xf32>,
    %cst_31 = arith.constant 0.000000e+00 : f32
    %60 = vector.broadcast %cst_31 : f32 to vector<1x256xf32>
    %c9 = arith.constant 9 : index
    %c0_32 = arith.constant 0 : index
    %61 = vector.load %arg16[%c9, %c0_32] : memref<10x256xf32, #tpu.memory_space<vmem>>, vector<1x256xf32>
    tpu.vector_store %arg16[%c9, %c0_32], %60 {strides = array<i32>} : memref<10x256xf32, #tpu.memory_space<vmem>>, vector<1x256xf32>,
    %c1_33 = arith.constant 1 : index
    %c0_34 = arith.constant 0 : index
    %62 = vector.load %arg16[%c1_33, %c0_34] : memref<10x256xf32, #tpu.memory_space<vmem>>, vector<8x256xf32>
    tpu.vector_store %arg16[%c1_33, %c0_34], %57 {strides = array<i32>} : memref<10x256xf32, #tpu.memory_space<vmem>>, vector<8x256xf32>,
    %c0_35 = arith.constant 0 : index
    %c0_36 = arith.constant 0 : index
    %63 = vector.load %arg16[%c0_35, %c0_36] : memref<10x256xf32, #tpu.memory_space<vmem>>, vector<8x256xf32>
    %64 = arith.truncf %63 : vector<8x256xf32> to vector<8x256xbf16>
    %c0_37 = arith.constant 0 : index
    %c0_38 = arith.constant 0 : index
    %c0_39 = arith.constant 0 : index
    %65 = vector.load %arg4[%c0_37, %c0_38, %c0_39] : memref<3x256x256xbf16, #tpu.memory_space<vmem>>, vector<1x256x256xbf16>
    %66 = vector.shape_cast %65 : vector<1x256x256xbf16> to vector<256x256xbf16>
    %cst_40 = arith.constant dense<0.000000e+00> : vector<8x256xf32>
    %67 = tpu.matmul %64, %66, %cst_40 {dimension_numbers = #tpu.dot_dimension_numbers<[1], [0], [0], [1], [0, 0, 1, 1], [], []>} : vector<8x256xbf16>, vector<256x256xbf16>, vector<8x256xf32> -> vector<8x256xf32>
    %c1_41 = arith.constant 1 : index
    %c0_42 = arith.constant 0 : index
    %68 = vector.load %arg16[%c1_41, %c0_42] : memref<10x256xf32, #tpu.memory_space<vmem>>, vector<8x256xf32>
    %69 = arith.truncf %68 : vector<8x256xf32> to vector<8x256xbf16>
    %c1_43 = arith.constant 1 : index
    %c0_44 = arith.constant 0 : index
    %c0_45 = arith.constant 0 : index
    %70 = vector.load %arg4[%c1_43, %c0_44, %c0_45] : memref<3x256x256xbf16, #tpu.memory_space<vmem>>, vector<1x256x256xbf16>
    %71 = vector.shape_cast %70 : vector<1x256x256xbf16> to vector<256x256xbf16>
    %cst_46 = arith.constant dense<0.000000e+00> : vector<8x256xf32>
    %72 = tpu.matmul %69, %71, %cst_46 {dimension_numbers = #tpu.dot_dimension_numbers<[1], [0], [0], [1], [0, 0, 1, 1], [], []>} : vector<8x256xbf16>, vector<256x256xbf16>, vector<8x256xf32> -> vector<8x256xf32>
    %73 = arith.addf %67, %72 : vector<8x256xf32>
    %c2_47 = arith.constant 2 : index
    %c0_48 = arith.constant 0 : index
    %74 = vector.load %arg16[%c2_47, %c0_48] : memref<10x256xf32, #tpu.memory_space<vmem>>, vector<8x256xf32>
    %75 = arith.truncf %74 : vector<8x256xf32> to vector<8x256xbf16>
    %c2_49 = arith.constant 2 : index
    %c0_50 = arith.constant 0 : index
    %c0_51 = arith.constant 0 : index
    %76 = vector.load %arg4[%c2_49, %c0_50, %c0_51] : memref<3x256x256xbf16, #tpu.memory_space<vmem>>, vector<1x256x256xbf16>
    %77 = vector.shape_cast %76 : vector<1x256x256xbf16> to vector<256x256xbf16>
    %cst_52 = arith.constant dense<0.000000e+00> : vector<8x256xf32>
    %78 = tpu.matmul %75, %77, %cst_52 {dimension_numbers = #tpu.dot_dimension_numbers<[1], [0], [0], [1], [0, 0, 1, 1], [], []>} : vector<8x256xbf16>, vector<256x256xbf16>, vector<8x256xf32> -> vector<8x256xf32>
    %79 = arith.addf %73, %78 : vector<8x256xf32>
    %c0_53 = arith.constant 0 : index
    %c0_54 = arith.constant 0 : index
    %80 = vector.load %arg5[%c0_53, %c0_54] : memref<1x256xf32, #tpu.memory_space<vmem>>, vector<1x256xf32>
    %81 = vector.broadcast %80 : vector<1x256xf32> to vector<8x256xf32>
    %82 = arith.addf %79, %81 : vector<8x256xf32>
    %cst_55 = arith.constant 0.000000e+00 : f32
    %83 = vector.broadcast %cst_55 : f32 to vector<8x256xf32>
    %84 = arith.maximumf %82, %83 : vector<8x256xf32>
    %85 = vector.extract_strided_slice %84 {offsets = [0, 0], sizes = [8, 128], strides = [1, 1]} : vector<8x256xf32> to vector<8x128xf32>
    %86 = vector.extract_strided_slice %84 {offsets = [0, 128], sizes = [8, 128], strides = [1, 1]} : vector<8x256xf32> to vector<8x128xf32>
    %87 = arith.maximumf %85, %86 : vector<8x128xf32>
    %88 = vector.extract_strided_slice %87 {offsets = [0, 0], sizes = [1, 128], strides = [1, 1]} : vector<8x128xf32> to vector<1x128xf32>
    %89 = vector.extract_strided_slice %87 {offsets = [1, 0], sizes = [1, 128], strides = [1, 1]} : vector<8x128xf32> to vector<1x128xf32>
    %90 = arith.maximumf %88, %89 : vector<1x128xf32>
    %91 = vector.extract_strided_slice %87 {offsets = [2, 0], sizes = [1, 128], strides = [1, 1]} : vector<8x128xf32> to vector<1x128xf32>
    %92 = vector.extract_strided_slice %87 {offsets = [3, 0], sizes = [1, 128], strides = [1, 1]} : vector<8x128xf32> to vector<1x128xf32>
    %93 = arith.maximumf %91, %92 : vector<1x128xf32>
    %94 = vector.extract_strided_slice %87 {offsets = [4, 0], sizes = [1, 128], strides = [1, 1]} : vector<8x128xf32> to vector<1x128xf32>
    %95 = vector.extract_strided_slice %87 {offsets = [5, 0], sizes = [1, 128], strides = [1, 1]} : vector<8x128xf32> to vector<1x128xf32>
    %96 = arith.maximumf %94, %95 : vector<1x128xf32>
    %97 = vector.extract_strided_slice %87 {offsets = [6, 0], sizes = [1, 128], strides = [1, 1]} : vector<8x128xf32> to vector<1x128xf32>
    %98 = vector.extract_strided_slice %87 {offsets = [7, 0], sizes = [1, 128], strides = [1, 1]} : vector<8x128xf32> to vector<1x128xf32>
    %99 = arith.maximumf %97, %98 : vector<1x128xf32>
    %100 = tpu.concatenate %90, %93, %96, %99 in 0 : vector<1x128xf32>, vector<1x128xf32>, vector<1x128xf32>, vector<1x128xf32> -> vector<4x128xf32>
    %cst_56 = arith.constant 0.000000e+00 : f32
    %101 = vector.broadcast %cst_56 : f32 to vector<1x128xf32>
    %c0_57 = arith.constant 0 : index
    %c0_58 = arith.constant 0 : index
    %102 = vector.load %arg17[%c0_57, %c0_58] : memref<6x128xf32, #tpu.memory_space<vmem>>, vector<1x128xf32>
    tpu.vector_store %arg17[%c0_57, %c0_58], %101 {strides = array<i32>} : memref<6x128xf32, #tpu.memory_space<vmem>>, vector<1x128xf32>,
    %cst_59 = arith.constant 0.000000e+00 : f32
    %103 = vector.broadcast %cst_59 : f32 to vector<1x128xf32>
    %c5 = arith.constant 5 : index
    %c0_60 = arith.constant 0 : index
    %104 = vector.load %arg17[%c5, %c0_60] : memref<6x128xf32, #tpu.memory_space<vmem>>, vector<1x128xf32>
    tpu.vector_store %arg17[%c5, %c0_60], %103 {strides = array<i32>} : memref<6x128xf32, #tpu.memory_space<vmem>>, vector<1x128xf32>,
    %c1_61 = arith.constant 1 : index
    %c0_62 = arith.constant 0 : index
    %105 = vector.load %arg17[%c1_61, %c0_62] : memref<6x128xf32, #tpu.memory_space<vmem>>, vector<4x128xf32>
    tpu.vector_store %arg17[%c1_61, %c0_62], %100 {strides = array<i32>} : memref<6x128xf32, #tpu.memory_space<vmem>>, vector<4x128xf32>,
    %c0_63 = arith.constant 0 : index
    %c0_64 = arith.constant 0 : index
    %106 = vector.load %arg17[%c0_63, %c0_64] : memref<6x128xf32, #tpu.memory_space<vmem>>, vector<4x128xf32>
    %107 = arith.truncf %106 : vector<4x128xf32> to vector<4x128xbf16>
    %c0_65 = arith.constant 0 : index
    %c0_66 = arith.constant 0 : index
    %c0_67 = arith.constant 0 : index
    %108 = vector.load %arg6[%c0_65, %c0_66, %c0_67] : memref<3x128x256xbf16, #tpu.memory_space<vmem>>, vector<1x128x256xbf16>
    %109 = vector.shape_cast %108 : vector<1x128x256xbf16> to vector<128x256xbf16>
    %cst_68 = arith.constant dense<0.000000e+00> : vector<4x256xf32>
    %110 = tpu.matmul %107, %109, %cst_68 {dimension_numbers = #tpu.dot_dimension_numbers<[1], [0], [0], [1], [0, 0, 1, 1], [], []>} : vector<4x128xbf16>, vector<128x256xbf16>, vector<4x256xf32> -> vector<4x256xf32>
    %c1_69 = arith.constant 1 : index
    %c0_70 = arith.constant 0 : index
    %111 = vector.load %arg17[%c1_69, %c0_70] : memref<6x128xf32, #tpu.memory_space<vmem>>, vector<4x128xf32>
    %112 = arith.truncf %111 : vector<4x128xf32> to vector<4x128xbf16>
    %c1_71 = arith.constant 1 : index
    %c0_72 = arith.constant 0 : index
    %c0_73 = arith.constant 0 : index
    %113 = vector.load %arg6[%c1_71, %c0_72, %c0_73] : memref<3x128x256xbf16, #tpu.memory_space<vmem>>, vector<1x128x256xbf16>
    %114 = vector.shape_cast %113 : vector<1x128x256xbf16> to vector<128x256xbf16>
    %cst_74 = arith.constant dense<0.000000e+00> : vector<4x256xf32>
    %115 = tpu.matmul %112, %114, %cst_74 {dimension_numbers = #tpu.dot_dimension_numbers<[1], [0], [0], [1], [0, 0, 1, 1], [], []>} : vector<4x128xbf16>, vector<128x256xbf16>, vector<4x256xf32> -> vector<4x256xf32>
    %116 = arith.addf %110, %115 : vector<4x256xf32>
    %c2_75 = arith.constant 2 : index
    %c0_76 = arith.constant 0 : index
    %117 = vector.load %arg17[%c2_75, %c0_76] : memref<6x128xf32, #tpu.memory_space<vmem>>, vector<4x128xf32>
    %118 = arith.truncf %117 : vector<4x128xf32> to vector<4x128xbf16>
    %c2_77 = arith.constant 2 : index
    %c0_78 = arith.constant 0 : index
    %c0_79 = arith.constant 0 : index
    %119 = vector.load %arg6[%c2_77, %c0_78, %c0_79] : memref<3x128x256xbf16, #tpu.memory_space<vmem>>, vector<1x128x256xbf16>
    %120 = vector.shape_cast %119 : vector<1x128x256xbf16> to vector<128x256xbf16>
    %cst_80 = arith.constant dense<0.000000e+00> : vector<4x256xf32>
    %121 = tpu.matmul %118, %120, %cst_80 {dimension_numbers = #tpu.dot_dimension_numbers<[1], [0], [0], [1], [0, 0, 1, 1], [], []>} : vector<4x128xbf16>, vector<128x256xbf16>, vector<4x256xf32> -> vector<4x256xf32>
    %122 = arith.addf %116, %121 : vector<4x256xf32>
    %c0_81 = arith.constant 0 : index
    %c0_82 = arith.constant 0 : index
    %123 = vector.load %arg7[%c0_81, %c0_82] : memref<1x256xf32, #tpu.memory_space<vmem>>, vector<1x256xf32>
    %124 = vector.broadcast %123 : vector<1x256xf32> to vector<4x256xf32>
    %125 = arith.addf %122, %124 : vector<4x256xf32>
    %cst_83 = arith.constant 0.000000e+00 : f32
    %126 = vector.broadcast %cst_83 : f32 to vector<4x256xf32>
    %127 = arith.maximumf %125, %126 : vector<4x256xf32>
    %128 = vector.extract_strided_slice %127 {offsets = [0, 0], sizes = [4, 128], strides = [1, 1]} : vector<4x256xf32> to vector<4x128xf32>
    %129 = vector.extract_strided_slice %127 {offsets = [0, 128], sizes = [4, 128], strides = [1, 1]} : vector<4x256xf32> to vector<4x128xf32>
    %130 = arith.maximumf %128, %129 : vector<4x128xf32>
    %131 = vector.extract_strided_slice %130 {offsets = [0, 0], sizes = [1, 128], strides = [1, 1]} : vector<4x128xf32> to vector<1x128xf32>
    %132 = vector.extract_strided_slice %130 {offsets = [1, 0], sizes = [1, 128], strides = [1, 1]} : vector<4x128xf32> to vector<1x128xf32>
    %133 = arith.maximumf %131, %132 : vector<1x128xf32>
    %134 = vector.extract_strided_slice %130 {offsets = [2, 0], sizes = [1, 128], strides = [1, 1]} : vector<4x128xf32> to vector<1x128xf32>
    %135 = vector.extract_strided_slice %130 {offsets = [3, 0], sizes = [1, 128], strides = [1, 1]} : vector<4x128xf32> to vector<1x128xf32>
    %136 = arith.maximumf %134, %135 : vector<1x128xf32>
    %137 = tpu.concatenate %133, %136 in 0 : vector<1x128xf32>, vector<1x128xf32> -> vector<2x128xf32>
    %cst_84 = arith.constant 0.000000e+00 : f32
    %138 = vector.broadcast %cst_84 : f32 to vector<1x128xf32>
    %c0_85 = arith.constant 0 : index
    %c0_86 = arith.constant 0 : index
    %139 = vector.load %arg18[%c0_85, %c0_86] : memref<4x128xf32, #tpu.memory_space<vmem>>, vector<1x128xf32>
    tpu.vector_store %arg18[%c0_85, %c0_86], %138 {strides = array<i32>} : memref<4x128xf32, #tpu.memory_space<vmem>>, vector<1x128xf32>,
    %cst_87 = arith.constant 0.000000e+00 : f32
    %140 = vector.broadcast %cst_87 : f32 to vector<1x128xf32>
    %c3 = arith.constant 3 : index
    %c0_88 = arith.constant 0 : index
    %141 = vector.load %arg18[%c3, %c0_88] : memref<4x128xf32, #tpu.memory_space<vmem>>, vector<1x128xf32>
    tpu.vector_store %arg18[%c3, %c0_88], %140 {strides = array<i32>} : memref<4x128xf32, #tpu.memory_space<vmem>>, vector<1x128xf32>,
    %c1_89 = arith.constant 1 : index
    %c0_90 = arith.constant 0 : index
    %142 = vector.load %arg18[%c1_89, %c0_90] : memref<4x128xf32, #tpu.memory_space<vmem>>, vector<2x128xf32>
    tpu.vector_store %arg18[%c1_89, %c0_90], %137 {strides = array<i32>} : memref<4x128xf32, #tpu.memory_space<vmem>>, vector<2x128xf32>,
    %c0_91 = arith.constant 0 : index
    %c0_92 = arith.constant 0 : index
    %143 = vector.load %arg18[%c0_91, %c0_92] : memref<4x128xf32, #tpu.memory_space<vmem>>, vector<2x128xf32>
    %144 = arith.truncf %143 : vector<2x128xf32> to vector<2x128xbf16>
    %c0_93 = arith.constant 0 : index
    %c0_94 = arith.constant 0 : index
    %c0_95 = arith.constant 0 : index
    %145 = vector.load %arg8[%c0_93, %c0_94, %c0_95] : memref<3x128x128xbf16, #tpu.memory_space<vmem>>, vector<1x128x128xbf16>
    %146 = vector.shape_cast %145 : vector<1x128x128xbf16> to vector<128x128xbf16>
    %cst_96 = arith.constant dense<0.000000e+00> : vector<2x128xf32>
    %147 = tpu.matmul %144, %146, %cst_96 {dimension_numbers = #tpu.dot_dimension_numbers<[1], [0], [0], [1], [0, 0, 1, 1], [], []>} : vector<2x128xbf16>, vector<128x128xbf16>, vector<2x128xf32> -> vector<2x128xf32>
    %c1_97 = arith.constant 1 : index
    %c0_98 = arith.constant 0 : index
    %148 = vector.load %arg18[%c1_97, %c0_98] : memref<4x128xf32, #tpu.memory_space<vmem>>, vector<2x128xf32>
    %149 = arith.truncf %148 : vector<2x128xf32> to vector<2x128xbf16>
    %c1_99 = arith.constant 1 : index
    %c0_100 = arith.constant 0 : index
    %c0_101 = arith.constant 0 : index
    %150 = vector.load %arg8[%c1_99, %c0_100, %c0_101] : memref<3x128x128xbf16, #tpu.memory_space<vmem>>, vector<1x128x128xbf16>
    %151 = vector.shape_cast %150 : vector<1x128x128xbf16> to vector<128x128xbf16>
    %cst_102 = arith.constant dense<0.000000e+00> : vector<2x128xf32>
    %152 = tpu.matmul %149, %151, %cst_102 {dimension_numbers = #tpu.dot_dimension_numbers<[1], [0], [0], [1], [0, 0, 1, 1], [], []>} : vector<2x128xbf16>, vector<128x128xbf16>, vector<2x128xf32> -> vector<2x128xf32>
    %153 = arith.addf %147, %152 : vector<2x128xf32>
    %c2_103 = arith.constant 2 : index
    %c0_104 = arith.constant 0 : index
    %154 = vector.load %arg18[%c2_103, %c0_104] : memref<4x128xf32, #tpu.memory_space<vmem>>, vector<2x128xf32>
    %155 = arith.truncf %154 : vector<2x128xf32> to vector<2x128xbf16>
    %c2_105 = arith.constant 2 : index
    %c0_106 = arith.constant 0 : index
    %c0_107 = arith.constant 0 : index
    %156 = vector.load %arg8[%c2_105, %c0_106, %c0_107] : memref<3x128x128xbf16, #tpu.memory_space<vmem>>, vector<1x128x128xbf16>
    %157 = vector.shape_cast %156 : vector<1x128x128xbf16> to vector<128x128xbf16>
    %cst_108 = arith.constant dense<0.000000e+00> : vector<2x128xf32>
    %158 = tpu.matmul %155, %157, %cst_108 {dimension_numbers = #tpu.dot_dimension_numbers<[1], [0], [0], [1], [0, 0, 1, 1], [], []>} : vector<2x128xbf16>, vector<128x128xbf16>, vector<2x128xf32> -> vector<2x128xf32>
    %159 = arith.addf %153, %158 : vector<2x128xf32>
    %c0_109 = arith.constant 0 : index
    %c0_110 = arith.constant 0 : index
    %160 = vector.load %arg9[%c0_109, %c0_110] : memref<1x128xf32, #tpu.memory_space<vmem>>, vector<1x128xf32>
    %161 = vector.broadcast %160 : vector<1x128xf32> to vector<2x128xf32>
    %162 = arith.addf %159, %161 : vector<2x128xf32>
    %cst_111 = arith.constant 0.000000e+00 : f32
    %163 = vector.broadcast %cst_111 : f32 to vector<2x128xf32>
    %164 = arith.maximumf %162, %163 : vector<2x128xf32>
    %165 = vector.extract_strided_slice %164 {offsets = [0, 0], sizes = [2, 64], strides = [1, 1]} : vector<2x128xf32> to vector<2x64xf32>
    %166 = vector.extract_strided_slice %164 {offsets = [0, 64], sizes = [2, 64], strides = [1, 1]} : vector<2x128xf32> to vector<2x64xf32>
    %167 = arith.maximumf %165, %166 : vector<2x64xf32>
    %168 = vector.extract_strided_slice %167 {offsets = [0, 0], sizes = [1, 64], strides = [1, 1]} : vector<2x64xf32> to vector<1x64xf32>
    %169 = vector.extract_strided_slice %167 {offsets = [1, 0], sizes = [1, 64], strides = [1, 1]} : vector<2x64xf32> to vector<1x64xf32>
    %170 = arith.maximumf %168, %169 : vector<1x64xf32>
    %171 = arith.truncf %170 : vector<1x64xf32> to vector<1x64xbf16>
    %c0_112 = arith.constant 0 : index
    %c0_113 = arith.constant 0 : index
    %c0_114 = arith.constant 0 : index
    %172 = vector.load %arg10[%c0_112, %c0_113, %c0_114] : memref<1x64x1024xbf16, #tpu.memory_space<vmem>>, vector<1x64x1024xbf16>
    %173 = vector.shape_cast %172 : vector<1x64x1024xbf16> to vector<64x1024xbf16>
    %cst_115 = arith.constant dense<0.000000e+00> : vector<1x1024xf32>
    %174 = tpu.matmul %171, %173, %cst_115 {dimension_numbers = #tpu.dot_dimension_numbers<[1], [0], [0], [1], [0, 0, 1, 1], [], []>} : vector<1x64xbf16>, vector<64x1024xbf16>, vector<1x1024xf32> -> vector<1x1024xf32>
    %c0_116 = arith.constant 0 : index
    %c0_117 = arith.constant 0 : index
    %175 = vector.load %arg11[%c0_116, %c0_117] : memref<1x1024xf32, #tpu.memory_space<vmem>>, vector<1x1024xf32>
    %176 = arith.addf %174, %175 : vector<1x1024xf32>
    %cst_118 = arith.constant 0.000000e+00 : f32
    %177 = vector.broadcast %cst_118 : f32 to vector<1x1024xf32>
    %178 = arith.maximumf %176, %177 : vector<1x1024xf32>
    %179 = arith.truncf %178 : vector<1x1024xf32> to vector<1x1024xbf16>
    %c0_119 = arith.constant 0 : index
    %c0_120 = arith.constant 0 : index
    %180 = vector.load %arg12[%c0_119, %c0_120] : memref<1024x128xbf16, #tpu.memory_space<vmem>>, vector<1024x128xbf16>
    %cst_121 = arith.constant dense<0.000000e+00> : vector<1x128xf32>
    %181 = tpu.matmul %179, %180, %cst_121 {dimension_numbers = #tpu.dot_dimension_numbers<[1], [0], [0], [1], [0, 0, 1, 1], [], []>} : vector<1x1024xbf16>, vector<1024x128xbf16>, vector<1x128xf32> -> vector<1x128xf32>
    %c0_122 = arith.constant 0 : index
    %c0_123 = arith.constant 0 : index
    %182 = vector.load %arg13[%c0_122, %c0_123] : memref<1x128xf32, #tpu.memory_space<vmem>>, vector<1x128xf32>
    %183 = arith.addf %181, %182 : vector<1x128xf32>
    %c0_124 = arith.constant 0 : index
    %c0_125 = arith.constant 0 : index
    %c0_126 = arith.constant 0 : index
    %184 = vector.load %arg14[%c0_124, %c0_125, %c0_126] : memref<1x1x128xf32, #tpu.memory_space<vmem>>, vector<1x1x128xf32>
    %185 = vector.shape_cast %184 : vector<1x1x128xf32> to vector<1x128xf32>
    %186 = vector.shape_cast %183 : vector<1x128xf32> to vector<1x1x128xf32>
    tpu.vector_store %arg14[%c0_124, %c0_125, %c0_126], %186 {strides = array<i32>} : memref<1x1x128xf32, #tpu.memory_space<vmem>>, vector<1x1x128xf32>,
    return
  }
  func.func @transform_0(%arg0: i32) -> (i32, i32, i32, i32) {
    %c0_i32 = arith.constant 0 : i32
    %c0_i32_0 = arith.constant 0 : i32
    %c0_i32_1 = arith.constant 0 : i32
    %c0_i32_2 = arith.constant 0 : i32
    return %arg0, %c0_i32, %c0_i32_0, %c0_i32_1 : i32, i32, i32, i32
  }
  func.func @transform_1(%arg0: i32) -> (i32, i32, i32) {
    %c0_i32 = arith.constant 0 : i32
    %c0_i32_0 = arith.constant 0 : i32
    %c0_i32_1 = arith.constant 0 : i32
    %c0_i32_2 = arith.constant 0 : i32
    return %c0_i32, %c0_i32_0, %c0_i32_1 : i32, i32, i32
  }
  func.func @transform_2(%arg0: i32) -> (i32, i32) {
    %c0_i32 = arith.constant 0 : i32
    %c0_i32_0 = arith.constant 0 : i32
    %c0_i32_1 = arith.constant 0 : i32
    return %c0_i32, %c0_i32_0 : i32, i32
  }
  func.func @transform_3(%arg0: i32) -> (i32, i32, i32) {
    %c0_i32 = arith.constant 0 : i32
    %c0_i32_0 = arith.constant 0 : i32
    %c0_i32_1 = arith.constant 0 : i32
    %c0_i32_2 = arith.constant 0 : i32
    return %c0_i32, %c0_i32_0, %c0_i32_1 : i32, i32, i32
  }
  func.func @transform_4(%arg0: i32) -> (i32, i32) {
    %c0_i32 = arith.constant 0 : i32
    %c0_i32_0 = arith.constant 0 : i32
    %c0_i32_1 = arith.constant 0 : i32
    return %c0_i32, %c0_i32_0 : i32, i32
  }
  func.func @transform_5(%arg0: i32) -> (i32, i32, i32) {
    %c0_i32 = arith.constant 0 : i32
    %c0_i32_0 = arith.constant 0 : i32
    %c0_i32_1 = arith.constant 0 : i32
    %c0_i32_2 = arith.constant 0 : i32
    return %c0_i32, %c0_i32_0, %c0_i32_1 : i32, i32, i32
  }
  func.func @transform_6(%arg0: i32) -> (i32, i32) {
    %c0_i32 = arith.constant 0 : i32
    %c0_i32_0 = arith.constant 0 : i32
    %c0_i32_1 = arith.constant 0 : i32
    return %c0_i32, %c0_i32_0 : i32, i32
  }
  func.func @transform_7(%arg0: i32) -> (i32, i32, i32) {
    %c0_i32 = arith.constant 0 : i32
    %c0_i32_0 = arith.constant 0 : i32
    %c0_i32_1 = arith.constant 0 : i32
    %c0_i32_2 = arith.constant 0 : i32
    return %c0_i32, %c0_i32_0, %c0_i32_1 : i32, i32, i32
  }
  func.func @transform_8(%arg0: i32) -> (i32, i32) {
    %c0_i32 = arith.constant 0 : i32
    %c0_i32_0 = arith.constant 0 : i32
    %c0_i32_1 = arith.constant 0 : i32
    return %c0_i32, %c0_i32_0 : i32, i32
  }
  func.func @transform_9(%arg0: i32) -> (i32, i32, i32) {
    %c0_i32 = arith.constant 0 : i32
    %c0_i32_0 = arith.constant 0 : i32
    %c0_i32_1 = arith.constant 0 : i32
    %c0_i32_2 = arith.constant 0 : i32
    return %c0_i32, %c0_i32_0, %c0_i32_1 : i32, i32, i32
  }
  func.func @transform_10(%arg0: i32) -> (i32, i32) {
    %c0_i32 = arith.constant 0 : i32
    %c0_i32_0 = arith.constant 0 : i32
    %c0_i32_1 = arith.constant 0 : i32
    return %c0_i32, %c0_i32_0 : i32, i32
  }
  func.func @transform_11(%arg0: i32) -> (i32, i32) {
    %c0_i32 = arith.constant 0 : i32
    %c0_i32_0 = arith.constant 0 : i32
    %c0_i32_1 = arith.constant 0 : i32
    return %c0_i32, %c0_i32_0 : i32, i32
  }
  func.func @transform_12(%arg0: i32) -> (i32, i32) {
    %c0_i32 = arith.constant 0 : i32
    %c0_i32_0 = arith.constant 0 : i32
    %c0_i32_1 = arith.constant 0 : i32
    return %c0_i32, %c0_i32_0 : i32, i32
  }
  func.func @transform_13(%arg0: i32) -> (i32, i32, i32) {
    %c0_i32 = arith.constant 0 : i32
    %c0_i32_0 = arith.constant 0 : i32
    %c0_i32_1 = arith.constant 0 : i32
    return %arg0, %c0_i32, %c0_i32_0 : i32, i32, i32
  }
}

</mosaic_0001>

<llo_original>
// kernel: model_forward.1
$region0: #{model_forward.1}
  #allocation0 [shape = 'u32[]', space=smem, size = 0x4, offset = 0x4, fixed_abs, tag = 'smem constant byte address 0x4 - core index']
  #allocation1 [shape = 'u32[72,128]{1,0:T(1,128)}', space=vmem, size = 0x9000, scoped, tag = 'internal scratch']
  #allocation2 [shape = 'f32[18,64]{1,0:T(8,128)}', space=vmem, size = 0x3000, scoped, tag = 'scratch operand']
  #allocation3 [shape = 'f32[10,256]{1,0:T(8,128)}', space=vmem, size = 0x4000, scoped, tag = 'scratch operand']
  #allocation4 [shape = 'f32[6,128]{1,0:T(8,128)}', space=vmem, size = 0x1000, scoped, tag = 'scratch operand']
  #allocation5 [shape = 'f32[4,128]{1,0:T(4,128)}', space=vmem, size = 0x800, scoped, tag = 'scratch operand']
  %s0 = inlined_call_operand.vmem [shape: f32[2,16,1,64], index: 0, kind: input, shape index: {}]
  %s1 = inlined_call_operand.vmem [shape: bf16[3,64,512], index: 1, kind: input, shape index: {}]
  %s2 = inlined_call_operand.vmem [shape: f32[1,512], index: 2, kind: input, shape index: {}]
  %s3 = inlined_call_operand.hbm [shape: bf16[3,256,256], index: 3, kind: input, shape index: {}]
  %s4 = inlined_call_operand.vmem [shape: f32[1,256], index: 4, kind: input, shape index: {}]
  %s5 = inlined_call_operand.hbm [shape: bf16[3,128,256], index: 5, kind: input, shape index: {}]
  %s6 = inlined_call_operand.vmem [shape: f32[1,256], index: 6, kind: input, shape index: {}]
  %s7 = inlined_call_operand.hbm [shape: bf16[3,128,128], index: 7, kind: input, shape index: {}]
  %s8 = inlined_call_operand.vmem [shape: f32[1,128], index: 8, kind: input, shape index: {}]
  %s9 = inlined_call_operand.hbm [shape: bf16[1,64,1024], index: 9, kind: input, shape index: {}]
  %s10 = inlined_call_operand.vmem [shape: f32[1,1024], index: 10, kind: input, shape index: {}]
  %s11 = inlined_call_operand.hbm [shape: bf16[1024,128], index: 11, kind: input, shape index: {}]
  %s12 = inlined_call_operand.vmem [shape: f32[1,128], index: 12, kind: input, shape index: {}]
  %s13 = inlined_call_operand.vmem [shape: f32[2,1,128], index: 13, kind: output, shape index: {}]
  %s14 = sld [smem:[#allocation0]]
  $region105: #{model_forward.1} parent=0
    _
  %s16 = ssub.s32 1, %s14
  %s17 = scalar_select 0, %s16, %s14
  $region1: #{model_forward.1} parent=0
    #allocation6 [shape = 'u8[393216]{0}', space=vmem, size = 0x60000, scoped, tag = 'input window, operand 3, single buffered']
    #allocation7 [shape = 's32[2]{0}', space=sflag, size = 0x8, scoped, tag = 'scoped memory for model_forward.1']
    #allocation8 [shape = 'u8[196608]{0}', space=vmem, size = 0x30000, scoped, tag = 'input window, operand 5, single buffered']
    #allocation9 [shape = 's32[1]{0}', space=sflag, size = 0x4, scoped, tag = 'scoped memory for model_forward.1']
    #allocation10 [shape = 'u8[98304]{0}', space=vmem, size = 0x18000, scoped, tag = 'input window, operand 7, single buffered']
    #allocation11 [shape = 'u8[131072]{0}', space=vmem, size = 0x20000, scoped, tag = 'input window, operand 9, single buffered']
    #allocation12 [shape = 's32[1]{0}', space=sflag, size = 0x4, scoped, tag = 'scoped memory for model_forward.1']
    #allocation13 [shape = 'u8[262144]{0}', space=vmem, size = 0x40000, scoped, tag = 'input window, operand 11, single buffered']
    %18 = vsyncpa [#allocation7], 0
    %19 = vsyncpa [#allocation9], 0
    %20 = vsyncpa [#allocation12], 0
    loop: start=0, step=1, limit=4
    $region2: #{model_forward.1} parent=1 // loop_pre_header
      _
    $region3: #{model_forward.1} parent=1 // loop_header
      %s22 = sphi 0, %s26
      %p23 = scmp.ge.s32.totalorder %s22, 4
      %s32 = sphi 0, %s34
      %s35 = sphi 0, %s32
      %s36 = sphi 0, %s35
      %s52 = sphi 0, %s36
      %s56 = sphi 0, %s56
      %s58 = sphi 0, %s56
      %s59 = sphi 0, %s58
      %s73 = sphi 0, %s59
      %s77 = sphi 0, %s77
      %s79 = sphi 0, %s77
      %s80 = sphi 0, %s79
      %s94 = sphi 0, %s80
      %s98 = sphi 0, %s98
      %s100 = sphi 0, %s98
      %s101 = sphi 0, %s100
      %s115 = sphi 0, %s101
      %s119 = sphi 0, %s119
      %s121 = sphi 0, %s119
      %s122 = sphi 0, %s121
      %s136 = sphi 0, %s122
      %s140 = sphi 0, %s140
      %s142 = sphi 0, %s140
      %s143 = sphi 0, %s142
      %s157 = sphi 0, %s143
      %s161 = sphi 0, %s161
      %s163 = sphi 0, %s161
      %s164 = sphi 0, %s163
      %s178 = sphi 0, %s164
      %s182 = sphi 0, %s182
      %s184 = sphi 0, %s182
      %s185 = sphi 0, %s184
      %s199 = sphi 0, %s185
      %s203 = sphi 0, %s203
      %s205 = sphi 0, %s203
      %s206 = sphi 0, %s205
      %s220 = sphi 0, %s206
      %s224 = sphi 0, %s224
      %s226 = sphi 0, %s224
      %s227 = sphi 0, %s226
      %s241 = sphi 0, %s227
      %s245 = sphi 0, %s245
      %s247 = sphi 0, %s245
      %s248 = sphi 0, %s247
      %s262 = sphi 0, %s248
      %s266 = sphi 0, %s266
      %s268 = sphi 0, %s266
      %s269 = sphi 0, %s268
      %s283 = sphi 0, %s269
      %s287 = sphi 0, %s287
      %s289 = sphi 0, %s287
      %s290 = sphi 0, %s289
      %s304 = sphi 0, %s290
      %s310 = sphi 0, %s312
      %s313 = sphi 0, %s310
      %s314 = sphi 0, %s313
      %s330 = sphi 0, %s314
    $region4: #{model_forward.1} parent=1 // loop_header_branch
      %25 = sbr.rel (%p23) target = $region8
    $region5: #{model_forward.1} parent=1 // loop_body
      %s27 = ssub.s32 %s22, 1
      %s28 = ssub.s32 %s22, 2
      %s29 = sadd.s32 %s22, 1
      %s30 = ssub.s32 %s22, %s29
      %p31 = scmp.eq.s32.totalorder %s30, 0
      %s33 = sadd.s32 %s32, 1
      %s34 = scalar_select %p31, %s32, %s33
      %p37 = pneg %p31
      %p38 = scmp.eq.s32.totalorder %s22, 1
      %p39 = por %p37, %p38
      %p40 = scmp.ne.s32.totalorder %s32, %s35
      %p41 = scmp.eq.s32.totalorder %s22, 0
      %p42 = por %p40, %p41
      %p43 = scmp.ne.s32.totalorder %s32, %s35
      %p44 = scmp.eq.s32.totalorder %s27, 1
      %p45 = por %p43, %p44
      %p46 = scmp.ne.s32.totalorder %s35, %s36
      %p47 = scmp.eq.s32.totalorder %s27, 0
      %p48 = por %p46, %p47
      %p49 = scmp.ne.s32.totalorder %s35, %s36
      %p50 = scmp.eq.s32.totalorder %s28, 1
      %p51 = por %p49, %p50
      %p53 = scmp.ne.s32.totalorder %s36, %s52
      %p54 = scmp.eq.s32.totalorder %s28, 0
      %p55 = por %p53, %p54
      %s57 = sadd.s32 %s56, 1
      %p60 = scmp.eq.s32.totalorder %s22, 1
      %p61 = scmp.ne.s32.totalorder %s56, %s58
      %p62 = scmp.eq.s32.totalorder %s22, 0
      %p63 = por %p61, %p62
      %p64 = scmp.ne.s32.totalorder %s56, %s58
      %p65 = scmp.eq.s32.totalorder %s27, 1
      %p66 = por %p64, %p65
      %p67 = scmp.ne.s32.totalorder %s58, %s59
      %p68 = scmp.eq.s32.totalorder %s27, 0
      %p69 = por %p67, %p68
      %p70 = scmp.ne.s32.totalorder %s58, %s59
      %p71 = scmp.eq.s32.totalorder %s28, 1
      %p72 = por %p70, %p71
      %p74 = scmp.ne.s32.totalorder %s59, %s73
      %p75 = scmp.eq.s32.totalorder %s28, 0
      %p76 = por %p74, %p75
      %s78 = sadd.s32 %s77, 1
      %p81 = scmp.eq.s32.totalorder %s22, 1
      %p82 = scmp.ne.s32.totalorder %s77, %s79
      %p83 = scmp.eq.s32.totalorder %s22, 0
      %p84 = por %p82, %p83
      %p85 = scmp.ne.s32.totalorder %s77, %s79
      %p86 = scmp.eq.s32.totalorder %s27, 1
      %p87 = por %p85, %p86
      %p88 = scmp.ne.s32.totalorder %s79, %s80
      %p89 = scmp.eq.s32.totalorder %s27, 0
      %p90 = por %p88, %p89
      %p91 = scmp.ne.s32.totalorder %s79, %s80
      %p92 = scmp.eq.s32.totalorder %s28, 1
      %p93 = por %p91, %p92
      %p95 = scmp.ne.s32.totalorder %s80, %s94
      %p96 = scmp.eq.s32.totalorder %s28, 0
      %p97 = por %p95, %p96
      %s99 = sadd.s32 %s98, 1
      %p102 = scmp.eq.s32.totalorder %s22, 1
      %p103 = scmp.ne.s32.totalorder %s98, %s100
      %p104 = scmp.eq.s32.totalorder %s22, 0
      %p105 = por %p103, %p104
      %p106 = scmp.ne.s32.totalorder %s98, %s100
      %p107 = scmp.eq.s32.totalorder %s27, 1
      %p108 = por %p106, %p107
      %p109 = scmp.ne.s32.totalorder %s100, %s101
      %p110 = scmp.eq.s32.totalorder %s27, 0
      %p111 = por %p109, %p110
      %p112 = scmp.ne.s32.totalorder %s100, %s101
      %p113 = scmp.eq.s32.totalorder %s28, 1
      %p114 = por %p112, %p113
      %p116 = scmp.ne.s32.totalorder %s101, %s115
      %p117 = scmp.eq.s32.totalorder %s28, 0
      %p118 = por %p116, %p117
      %s120 = sadd.s32 %s119, 1
      %p123 = scmp.eq.s32.totalorder %s22, 1
      %p124 = scmp.ne.s32.totalorder %s119, %s121
      %p125 = scmp.eq.s32.totalorder %s22, 0
      %p126 = por %p124, %p125
      %p127 = scmp.ne.s32.totalorder %s119, %s121
      %p128 = scmp.eq.s32.totalorder %s27, 1
      %p129 = por %p127, %p128
      %p130 = scmp.ne.s32.totalorder %s121, %s122
      %p131 = scmp.eq.s32.totalorder %s27, 0
      %p132 = por %p130, %p131
      %p133 = scmp.ne.s32.totalorder %s121, %s122
      %p134 = scmp.eq.s32.totalorder %s28, 1
      %p135 = por %p133, %p134
      %p137 = scmp.ne.s32.totalorder %s122, %s136
      %p138 = scmp.eq.s32.totalorder %s28, 0
      %p139 = por %p137, %p138
      %s141 = sadd.s32 %s140, 1
      %p144 = scmp.eq.s32.totalorder %s22, 1
      %p145 = scmp.ne.s32.totalorder %s140, %s142
      %p146 = scmp.eq.s32.totalorder %s22, 0
      %p147 = por %p145, %p146
      %p148 = scmp.ne.s32.totalorder %s140, %s142
      %p149 = scmp.eq.s32.totalorder %s27, 1
      %p150 = por %p148, %p149
      %p151 = scmp.ne.s32.totalorder %s142, %s143
      %p152 = scmp.eq.s32.totalorder %s27, 0
      %p153 = por %p151, %p152
      %p154 = scmp.ne.s32.totalorder %s142, %s143
      %p155 = scmp.eq.s32.totalorder %s28, 1
      %p156 = por %p154, %p155
      %p158 = scmp.ne.s32.totalorder %s143, %s157
      %p159 = scmp.eq.s32.totalorder %s28, 0
      %p160 = por %p158, %p159
      %s162 = sadd.s32 %s161, 1
      %p165 = scmp.eq.s32.totalorder %s22, 1
      %p166 = scmp.ne.s32.totalorder %s161, %s163
      %p167 = scmp.eq.s32.totalorder %s22, 0
      %p168 = por %p166, %p167
      %p169 = scmp.ne.s32.totalorder %s161, %s163
      %p170 = scmp.eq.s32.totalorder %s27, 1
      %p171 = por %p169, %p170
      %p172 = scmp.ne.s32.totalorder %s163, %s164
      %p173 = scmp.eq.s32.totalorder %s27, 0
      %p174 = por %p172, %p173
      %p175 = scmp.ne.s32.totalorder %s163, %s164
      %p176 = scmp.eq.s32.totalorder %s28, 1
      %p177 = por %p175, %p176
      %p179 = scmp.ne.s32.totalorder %s164, %s178
      %p180 = scmp.eq.s32.totalorder %s28, 0
      %p181 = por %p179, %p180
      %s183 = sadd.s32 %s182, 1
      %p186 = scmp.eq.s32.totalorder %s22, 1
      %p187 = scmp.ne.s32.totalorder %s182, %s184
      %p188 = scmp.eq.s32.totalorder %s22, 0
      %p189 = por %p187, %p188
      %p190 = scmp.ne.s32.totalorder %s182, %s184
      %p191 = scmp.eq.s32.totalorder %s27, 1
      %p192 = por %p190, %p191
      %p193 = scmp.ne.s32.totalorder %s184, %s185
      %p194 = scmp.eq.s32.totalorder %s27, 0
      %p195 = por %p193, %p194
      %p196 = scmp.ne.s32.totalorder %s184, %s185
      %p197 = scmp.eq.s32.totalorder %s28, 1
      %p198 = por %p196, %p197
      %p200 = scmp.ne.s32.totalorder %s185, %s199
      %p201 = scmp.eq.s32.totalorder %s28, 0
      %p202 = por %p200, %p201
      %s204 = sadd.s32 %s203, 1
      %p207 = scmp.eq.s32.totalorder %s22, 1
      %p208 = scmp.ne.s32.totalorder %s203, %s205
      %p209 = scmp.eq.s32.totalorder %s22, 0
      %p210 = por %p208, %p209
      %p211 = scmp.ne.s32.totalorder %s203, %s205
      %p212 = scmp.eq.s32.totalorder %s27, 1
      %p213 = por %p211, %p212
      %p214 = scmp.ne.s32.totalorder %s205, %s206
      %p215 = scmp.eq.s32.totalorder %s27, 0
      %p216 = por %p214, %p215
      %p217 = scmp.ne.s32.totalorder %s205, %s206
      %p218 = scmp.eq.s32.totalorder %s28, 1
      %p219 = por %p217, %p218
      %p221 = scmp.ne.s32.totalorder %s206, %s220
      %p222 = scmp.eq.s32.totalorder %s28, 0
      %p223 = por %p221, %p222
      %s225 = sadd.s32 %s224, 1
      %p228 = scmp.eq.s32.totalorder %s22, 1
      %p229 = scmp.ne.s32.totalorder %s224, %s226
      %p230 = scmp.eq.s32.totalorder %s22, 0
      %p231 = por %p229, %p230
      %p232 = scmp.ne.s32.totalorder %s224, %s226
      %p233 = scmp.eq.s32.totalorder %s27, 1
      %p234 = por %p232, %p233
      %p235 = scmp.ne.s32.totalorder %s226, %s227
      %p236 = scmp.eq.s32.totalorder %s27, 0
      %p237 = por %p235, %p236
      %p238 = scmp.ne.s32.totalorder %s226, %s227
      %p239 = scmp.eq.s32.totalorder %s28, 1
      %p240 = por %p238, %p239
      %p242 = scmp.ne.s32.totalorder %s227, %s241
      %p243 = scmp.eq.s32.totalorder %s28, 0
      %p244 = por %p242, %p243
      %s246 = sadd.s32 %s245, 1
      %p249 = scmp.eq.s32.totalorder %s22, 1
      %p250 = scmp.ne.s32.totalorder %s245, %s247
      %p251 = scmp.eq.s32.totalorder %s22, 0
      %p252 = por %p250, %p251
      %p253 = scmp.ne.s32.totalorder %s245, %s247
      %p254 = scmp.eq.s32.totalorder %s27, 1
      %p255 = por %p253, %p254
      %p256 = scmp.ne.s32.totalorder %s247, %s248
      %p257 = scmp.eq.s32.totalorder %s27, 0
      %p258 = por %p256, %p257
      %p259 = scmp.ne.s32.totalorder %s247, %s248
      %p260 = scmp.eq.s32.totalorder %s28, 1
      %p261 = por %p259, %p260
      %p263 = scmp.ne.s32.totalorder %s248, %s262
      %p264 = scmp.eq.s32.totalorder %s28, 0
      %p265 = por %p263, %p264
      %s267 = sadd.s32 %s266, 1
      %p270 = scmp.eq.s32.totalorder %s22, 1
      %p271 = scmp.ne.s32.totalorder %s266, %s268
      %p272 = scmp.eq.s32.totalorder %s22, 0
      %p273 = por %p271, %p272
      %p274 = scmp.ne.s32.totalorder %s266, %s268
      %p275 = scmp.eq.s32.totalorder %s27, 1
      %p276 = por %p274, %p275
      %p277 = scmp.ne.s32.totalorder %s268, %s269
      %p278 = scmp.eq.s32.totalorder %s27, 0
      %p279 = por %p277, %p278
      %p280 = scmp.ne.s32.totalorder %s268, %s269
      %p281 = scmp.eq.s32.totalorder %s28, 1
      %p282 = por %p280, %p281
      %p284 = scmp.ne.s32.totalorder %s269, %s283
      %p285 = scmp.eq.s32.totalorder %s28, 0
      %p286 = por %p284, %p285
      %s288 = sadd.s32 %s287, 1
      %p291 = scmp.eq.s32.totalorder %s22, 1
      %p292 = scmp.ne.s32.totalorder %s287, %s289
      %p293 = scmp.eq.s32.totalorder %s22, 0
      %p294 = por %p292, %p293
      %p295 = scmp.ne.s32.totalorder %s287, %s289
      %p296 = scmp.eq.s32.totalorder %s27, 1
      %p297 = por %p295, %p296
      %p298 = scmp.ne.s32.totalorder %s289, %s290
      %p299 = scmp.eq.s32.totalorder %s27, 0
      %p300 = por %p298, %p299
      %p301 = scmp.ne.s32.totalorder %s289, %s290
      %p302 = scmp.eq.s32.totalorder %s28, 1
      %p303 = por %p301, %p302
      %p305 = scmp.ne.s32.totalorder %s290, %s304
      %p306 = scmp.eq.s32.totalorder %s28, 0
      %p307 = por %p305, %p306
      %s308 = ssub.s32 %s22, %s29
      %p309 = scmp.eq.s32.totalorder %s308, 0
      %s311 = sadd.s32 %s310, 1
      %s312 = scalar_select %p309, %s310, %s311
      %p315 = pneg %p309
      %p316 = scmp.eq.s32.totalorder %s22, 1
      %p317 = por %p315, %p316
      %p318 = scmp.ne.s32.totalorder %s310, %s313
      %p319 = scmp.eq.s32.totalorder %s22, 0
      %p320 = por %p318, %p319
      %p321 = scmp.ne.s32.totalorder %s310, %s313
      %p322 = scmp.eq.s32.totalorder %s27, 1
      %p323 = por %p321, %p322
      %p324 = scmp.ne.s32.totalorder %s313, %s314
      %p325 = scmp.eq.s32.totalorder %s27, 0
      %p326 = por %p324, %p325
      %p327 = scmp.ne.s32.totalorder %s313, %s314
      %p328 = scmp.eq.s32.totalorder %s28, 1
      %p329 = por %p327, %p328
      %p331 = scmp.ne.s32.totalorder %s314, %s330
      %p332 = scmp.eq.s32.totalorder %s28, 0
      %p333 = por %p331, %p332
      %p334 = scmp.le.s32.totalorder 1, %s22
      %p335 = scmp.lt.s32.totalorder %s22, 3
      %p336 = pnand %p334, %p335
      %p337 = pneg %p336
      // Predicated region
      $region9: #{model_forward.1} parent=5 // pred_check
        _
      $region10: #{model_forward.1} parent=5 // pred_check_branch
        %339 = sbr.rel (%p336) target = $region12
      $region11: #{model_forward.1} parent=5 // pred_region
        %s340 = ssub.s32 %s22, 1
        // Predicated region
        $region13: #{model_forward.1} parent=11 // pred_check
          %p341 = pneg %p69
        $region14: #{model_forward.1} parent=11 // pred_check_branch
          %343 = sbr.rel (%p341) target = $region16
        $region15: #{model_forward.1} parent=11 // pred_region
          _
        $region16: #{model_forward.1} parent=11 // pred_fallthru
          _
        // Predicated region
        $region17: #{model_forward.1} parent=11 // pred_check
          %p344 = pneg %p90
        $region18: #{model_forward.1} parent=11 // pred_check_branch
          %346 = sbr.rel (%p344) target = $region20
        $region19: #{model_forward.1} parent=11 // pred_region
          _
        $region20: #{model_forward.1} parent=11 // pred_fallthru
          _
        // Predicated region
        $region21: #{model_forward.1} parent=11 // pred_check
          %p347 = pneg %p111
        $region22: #{model_forward.1} parent=11 // pred_check_branch
          %349 = sbr.rel (%p347) target = $region24
        $region23: #{model_forward.1} parent=11 // pred_region
          %351 = vsyncadd [#allocation7], 0
          %s352 = sshll.u32 %s3, 4
          %s353 = int_to_ptr.hbm [resolvable:$true] %s352
          %s354 = sshll.u32 [#allocation6], 4
          %s355 = int_to_ptr.vmem [resolvable:$true] %s354
          %360 = dma.hbm_to_vmem [thread:$0]  %s353, 12288, %s355, [#allocation7], 128, 128, 8
        $region24: #{model_forward.1} parent=11 // pred_fallthru
          _
        // Predicated region
        $region25: #{model_forward.1} parent=11 // pred_check
          %p361 = pneg %p132
        $region26: #{model_forward.1} parent=11 // pred_check_branch
          %363 = sbr.rel (%p361) target = $region28
        $region27: #{model_forward.1} parent=11 // pred_region
          _
        $region28: #{model_forward.1} parent=11 // pred_fallthru
          _
        // Predicated region
        $region29: #{model_forward.1} parent=11 // pred_check
          %p364 = pneg %p153
        $region30: #{model_forward.1} parent=11 // pred_check_branch
          %366 = sbr.rel (%p364) target = $region32
        $region31: #{model_forward.1} parent=11 // pred_region
          %368 = vsyncadd [#allocation9], 0
          %s369 = sshll.u32 %s5, 4
          %s370 = int_to_ptr.hbm [resolvable:$true] %s369
          %s371 = sshll.u32 [#allocation8], 4
          %s372 = int_to_ptr.vmem [resolvable:$true] %s371
          %377 = dma.hbm_to_vmem [thread:$0]  %s370, 6144, %s372, [#allocation9], 128, 128, 8
        $region32: #{model_forward.1} parent=11 // pred_fallthru
          _
        // Predicated region
        $region33: #{model_forward.1} parent=11 // pred_check
          %p378 = pneg %p174
        $region34: #{model_forward.1} parent=11 // pred_check_branch
          %380 = sbr.rel (%p378) target = $region36
        $region35: #{model_forward.1} parent=11 // pred_region
          _
        $region36: #{model_forward.1} parent=11 // pred_fallthru
          _
        // Predicated region
        $region37: #{model_forward.1} parent=11 // pred_check
          %p381 = pneg %p195
        $region38: #{model_forward.1} parent=11 // pred_check_branch
          %383 = sbr.rel (%p381) target = $region40
        $region39: #{model_forward.1} parent=11 // pred_region
          %385 = vsyncadd [#allocation9], 0
          %s386 = sshll.u32 %s7, 4
          %s387 = int_to_ptr.hbm [resolvable:$true] %s386
          %s388 = sshll.u32 [#allocation10], 4
          %s389 = int_to_ptr.vmem [resolvable:$true] %s388
          %394 = dma.hbm_to_vmem [thread:$0]  %s387, 3072, %s389, [#allocation9], 64, 64, 4
        $region40: #{model_forward.1} parent=11 // pred_fallthru
          _
        // Predicated region
        $region41: #{model_forward.1} parent=11 // pred_check
          %p395 = pneg %p216
        $region42: #{model_forward.1} parent=11 // pred_check_branch
          %397 = sbr.rel (%p395) target = $region44
        $region43: #{model_forward.1} parent=11 // pred_region
          _
        $region44: #{model_forward.1} parent=11 // pred_fallthru
          _
        // Predicated region
        $region45: #{model_forward.1} parent=11 // pred_check
          %p398 = pneg %p237
        $region46: #{model_forward.1} parent=11 // pred_check_branch
          %400 = sbr.rel (%p398) target = $region48
        $region47: #{model_forward.1} parent=11 // pred_region
          %402 = vsyncadd [#allocation12], 0
          %s403 = sshll.u32 %s9, 4
          %s404 = int_to_ptr.hbm [resolvable:$true] %s403
          %s405 = sshll.u32 [#allocation11], 4
          %s406 = int_to_ptr.vmem [resolvable:$true] %s405
          %411 = dma.hbm_to_vmem [thread:$0]  %s404, 4096, %s406, [#allocation12], 512, 512, 32
        $region48: #{model_forward.1} parent=11 // pred_fallthru
          _
        // Predicated region
        $region49: #{model_forward.1} parent=11 // pred_check
          %p412 = pneg %p258
        $region50: #{model_forward.1} parent=11 // pred_check_branch
          %414 = sbr.rel (%p412) target = $region52
        $region51: #{model_forward.1} parent=11 // pred_region
          _
        $region52: #{model_forward.1} parent=11 // pred_fallthru
          _
        // Predicated region
        $region53: #{model_forward.1} parent=11 // pred_check
          %p415 = pneg %p279
        $region54: #{model_forward.1} parent=11 // pred_check_branch
          %417 = sbr.rel (%p415) target = $region56
        $region55: #{model_forward.1} parent=11 // pred_region
          %419 = vsyncadd [#allocation12], 0
          %s420 = sshll.u32 %s11, 4
          %s421 = int_to_ptr.hbm [resolvable:$true] %s420
          %s422 = sshll.u32 [#allocation13], 4
          %s423 = int_to_ptr.vmem [resolvable:$true] %s422
          %428 = dma.hbm_to_vmem [thread:$0]  %s421, 8192, %s423, [#allocation12], 64, 64, 4
        $region56: #{model_forward.1} parent=11 // pred_fallthru
          _
        // Predicated region
        $region57: #{model_forward.1} parent=11 // pred_check
          %p429 = pneg %p300
        $region58: #{model_forward.1} parent=11 // pred_check_branch
          %431 = sbr.rel (%p429) target = $region60
        $region59: #{model_forward.1} parent=11 // pred_region
          _
        $region60: #{model_forward.1} parent=11 // pred_fallthru
          _
      $region12: #{model_forward.1} parent=5 // pred_fallthru
        _
      %p432 = scmp.lt.s32.totalorder %s22, 2
      // Predicated region
      $region61: #{model_forward.1} parent=5 // pred_check
        %p433 = pneg %p432
      $region62: #{model_forward.1} parent=5 // pred_check_branch
        %435 = sbr.rel (%p433) target = $region64
      $region63: #{model_forward.1} parent=5 // pred_region
        // Predicated region
        $region65: #{model_forward.1} parent=63 // pred_check
          %p436 = pneg %p42
        $region66: #{model_forward.1} parent=63 // pred_check_branch
          %438 = sbr.rel (%p436) target = $region68
        $region67: #{model_forward.1} parent=63 // pred_region
          %p439 = scmp.lt.s32.totalorder %s22, 1
          %s440 = scalar_select %p439, %s22, 1
          %s441 = smul.addr %s440, 16
          %s442 = scalar_lea.vmem %s0, %s441
        $region68: #{model_forward.1} parent=63 // pred_fallthru
          _
      $region64: #{model_forward.1} parent=5 // pred_fallthru
        _
      %p443 = scmp.le.s32.totalorder 1, %s22
      %p444 = scmp.lt.s32.totalorder %s22, 3
      %p445 = pnand %p443, %p444
      %p446 = pneg %p445
      // Predicated region
      $region69: #{model_forward.1} parent=5 // pred_check
        _
      $region70: #{model_forward.1} parent=5 // pred_check_branch
        %448 = sbr.rel (%p445) target = $region72
      $region71: #{model_forward.1} parent=5 // pred_region
        %s449 = ssub.s32 %s22, 1
        // Predicated region
        $region73: #{model_forward.1} parent=71 // pred_check
          %p450 = pneg %p111
        $region74: #{model_forward.1} parent=71 // pred_check_branch
          %452 = sbr.rel (%p450) target = $region76
        $region75: #{model_forward.1} parent=71 // pred_region
          %454 = dma.done [#allocation7], 12288
        $region76: #{model_forward.1} parent=71 // pred_fallthru
          _
        // Predicated region
        $region77: #{model_forward.1} parent=71 // pred_check
          %p455 = pneg %p153
        $region78: #{model_forward.1} parent=71 // pred_check_branch
          %457 = sbr.rel (%p455) target = $region80
        $region79: #{model_forward.1} parent=71 // pred_region
          %459 = dma.done [#allocation9], 6144
        $region80: #{model_forward.1} parent=71 // pred_fallthru
          _
        // Predicated region
        $region81: #{model_forward.1} parent=71 // pred_check
          %p460 = pneg %p195
        $region82: #{model_forward.1} parent=71 // pred_check_branch
          %462 = sbr.rel (%p460) target = $region84
        $region83: #{model_forward.1} parent=71 // pred_region
          %464 = dma.done [#allocation9], 3072
        $region84: #{model_forward.1} parent=71 // pred_fallthru
          _
        // Predicated region
        $region85: #{model_forward.1} parent=71 // pred_check
          %p465 = pneg %p237
        $region86: #{model_forward.1} parent=71 // pred_check_branch
          %467 = sbr.rel (%p465) target = $region88
        $region87: #{model_forward.1} parent=71 // pred_region
          %469 = dma.done [#allocation12], 4096
        $region88: #{model_forward.1} parent=71 // pred_fallthru
          _
        // Predicated region
        $region89: #{model_forward.1} parent=71 // pred_check
          %p470 = pneg %p279
        $region90: #{model_forward.1} parent=71 // pred_check_branch
          %472 = sbr.rel (%p470) target = $region92
        $region91: #{model_forward.1} parent=71 // pred_region
          %474 = dma.done [#allocation12], 8192
        $region92: #{model_forward.1} parent=71 // pred_fallthru
          _
        %p475 = scmp.lt.s32.totalorder %s27, 1
        %s476 = scalar_select %p475, %s27, 1
        %s477 = smul.addr %s476, 16
        %s478 = scalar_lea.vmem %s0, %s477
        %p479 = pneg %p48
        %p480 = pneg %p45
        %p481 = pneg %p69
        %p482 = pneg %p66
        %p483 = pneg %p90
        %p484 = pneg %p87
        %p485 = pneg %p111
        %p486 = pneg %p108
        %p487 = pneg %p132
        %p488 = pneg %p129
        %p489 = pneg %p153
        %p490 = pneg %p150
        %p491 = pneg %p174
        %p492 = pneg %p171
        %p493 = pneg %p195
        %p494 = pneg %p192
        %p495 = pneg %p216
        %p496 = pneg %p213
        %p497 = pneg %p237
        %p498 = pneg %p234
        %p499 = pneg %p258
        %p500 = pneg %p255
        %p501 = pneg %p279
        %p502 = pneg %p276
        %p503 = pneg %p300
        %p504 = pneg %p297
        %p505 = pneg %p326
        %p506 = pneg %p323
        %p507 = scmp.lt.s32.totalorder %s27, 1
        %s508 = scalar_select %p507, %s27, 1
        %s509 = scalar_lea.vmem %s13, %s508
        %p510 = scmp.lt.s32.totalorder %s27, 1
        %s511 = scalar_select %p510, %s27, 1
        %s512 = smul.addr %s511, 16
        %s513 = scalar_lea.vmem %s0, %s512
        %p514 = scmp.lt.s32.totalorder %s27, 1
        %s515 = scalar_select %p514, %s27, 1
        %s516 = scalar_lea.vmem %s13, %s515
        %v518 = vld [vmem:[%s513] sm:$0x1]
        %v519 = vld [vmem:[%s513 + $0x1] sm:$0x1]
        %v520 = vld [vmem:[%s513 + $0x2] sm:$0x1]
        %v521 = vld [vmem:[%s513 + $0x3] sm:$0x1]
        %v522 = vld [vmem:[%s513 + $0x4] sm:$0x1]
        %v523 = vld [vmem:[%s513 + $0x5] sm:$0x1]
        %v524 = vld [vmem:[%s513 + $0x6] sm:$0x1]
        %v525 = vld [vmem:[%s513 + $0x7] sm:$0x1]
        %v526 = vld [vmem:[%s513 + $0x8] sm:$0x1]
        %v527 = vld [vmem:[%s513 + $0x9] sm:$0x1]
        %v528 = vld [vmem:[%s513 + $0xa] sm:$0x1]
        %v529 = vld [vmem:[%s513 + $0xb] sm:$0x1]
        %v530 = vld [vmem:[%s513 + $0xc] sm:$0x1]
        %v531 = vld [vmem:[%s513 + $0xd] sm:$0x1]
        %v532 = vld [vmem:[%s513 + $0xe] sm:$0x1]
        %v533 = vld [vmem:[%s513 + $0xf] sm:$0x1]
        %vm534 = vcmask 516096
        %535 = vst.msk [vmem:[#allocation2] sm:$0x1] %vm534, 0.0
        %536 = vst.msk [vmem:[#allocation2 + $0x11] sm:$0x1] %vm534, 0.0
        %553 = vst [vmem:[#allocation1] ss:$9 sm:$0xff] %v518
        %s554 = scalar_lea.vmem [#allocation1], 1
        %555 = vst [vmem:[%s554] ss:$9 sm:$0xff] %v519
        %s556 = scalar_lea.vmem [#allocation1], 2
        %557 = vst [vmem:[%s556] ss:$9 sm:$0xff] %v520
        %s558 = scalar_lea.vmem [#allocation1], 3
        %559 = vst [vmem:[%s558] ss:$9 sm:$0xff] %v521
        %s560 = scalar_lea.vmem [#allocation1], 4
        %561 = vst [vmem:[%s560] ss:$9 sm:$0xff] %v522
        %s562 = scalar_lea.vmem [#allocation1], 5
        %563 = vst [vmem:[%s562] ss:$9 sm:$0xff] %v523
        %s564 = scalar_lea.vmem [#allocation1], 6
        %565 = vst [vmem:[%s564] ss:$9 sm:$0xff] %v524
        %s566 = scalar_lea.vmem [#allocation1], 7
        %567 = vst [vmem:[%s566] ss:$9 sm:$0xff] %v525
        %v568 = vld [vmem:[#allocation1] sm:$0xff]
        %569 = vst [vmem:[#allocation1] ss:$9 sm:$0xff] %v526
        %570 = vst [vmem:[%s554] ss:$9 sm:$0xff] %v527
        %571 = vst [vmem:[%s556] ss:$9 sm:$0xff] %v528
        %572 = vst [vmem:[%s558] ss:$9 sm:$0xff] %v529
        %573 = vst [vmem:[%s560] ss:$9 sm:$0xff] %v530
        %574 = vst [vmem:[%s562] ss:$9 sm:$0xff] %v531
        %575 = vst [vmem:[%s564] ss:$9 sm:$0xff] %v532
        %576 = vst [vmem:[%s566] ss:$9 sm:$0xff] %v533
        %v577 = vld [vmem:[#allocation1] sm:$0xff]
        %vm580 = vcmask 523264
        %581 = vst.msk [vmem:[#allocation2 + $0x1] sm:$0xff] %vm580, %v568
        %582 = vst.msk [vmem:[#allocation2 + $0x9] sm:$0xff] %vm580, %v577
        %v583 = vld [vmem:[#allocation2] sm:$0xff]
        %v584 = vld [vmem:[#allocation2 + $0x8] sm:$0xff]
        %v585 = vpack.c.bf16 %v584, %v583
        %v586 = vld [vmem:[%s1] sm:$0xff]
        %v587 = vld [vmem:[%s1 + $0x8] sm:$0xff]
        %v588 = vld [vmem:[%s1 + $0x10] sm:$0xff]
        %v589 = vld [vmem:[%s1 + $0x18] sm:$0xff]
        %v590 = vld [vmem:[%s1 + $0x20] sm:$0xff]
        %v591 = vld [vmem:[%s1 + $0x28] sm:$0xff]
        %v592 = vld [vmem:[%s1 + $0x30] sm:$0xff]
        %v593 = vld [vmem:[%s1 + $0x38] sm:$0xff]
        %v594 = vld [vmem:[%s1 + $0x40] sm:$0xff]
        %v595 = vld [vmem:[%s1 + $0x48] sm:$0xff]
        %v596 = vld [vmem:[%s1 + $0x50] sm:$0xff]
        %v597 = vld [vmem:[%s1 + $0x58] sm:$0xff]
        %v598 = vld [vmem:[%s1 + $0x60] sm:$0xff]
        %v599 = vld [vmem:[%s1 + $0x68] sm:$0xff]
        %v600 = vld [vmem:[%s1 + $0x70] sm:$0xff]
        %v601 = vld [vmem:[%s1 + $0x78] sm:$0xff]
        %v602 = vld [vmem:[#allocation2 + $0x1] sm:$0xff]
        %v603 = vld [vmem:[#allocation2 + $0x9] sm:$0xff]
        %v604 = vpack.c.bf16 %v603, %v602
        %s605 = scalar_lea.vmem %s1, 128
        %v606 = vld [vmem:[%s605] sm:$0xff]
        %v607 = vld [vmem:[%s605 + $0x8] sm:$0xff]
        %v608 = vld [vmem:[%s605 + $0x10] sm:$0xff]
        %v609 = vld [vmem:[%s605 + $0x18] sm:$0xff]
        %v610 = vld [vmem:[%s605 + $0x20] sm:$0xff]
        %v611 = vld [vmem:[%s605 + $0x28] sm:$0xff]
        %v612 = vld [vmem:[%s605 + $0x30] sm:$0xff]
        %v613 = vld [vmem:[%s605 + $0x38] sm:$0xff]
        %v614 = vld [vmem:[%s605 + $0x40] sm:$0xff]
        %v615 = vld [vmem:[%s605 + $0x48] sm:$0xff]
        %v616 = vld [vmem:[%s605 + $0x50] sm:$0xff]
        %v617 = vld [vmem:[%s605 + $0x58] sm:$0xff]
        %v618 = vld [vmem:[%s605 + $0x60] sm:$0xff]
        %v619 = vld [vmem:[%s605 + $0x68] sm:$0xff]
        %v620 = vld [vmem:[%s605 + $0x70] sm:$0xff]
        %v621 = vld [vmem:[%s605 + $0x78] sm:$0xff]
        %v638 = vunpack.c.l.b16 %v606
        %v639 = vunpack.c.h.b16 %v606
        %v640 = vunpack.c.l.b16 %v607
        %v641 = vunpack.c.h.b16 %v607
        %v642 = vunpack.c.l.b16 %v608
        %v643 = vunpack.c.h.b16 %v608
        %v644 = vunpack.c.l.b16 %v609
        %v645 = vunpack.c.h.b16 %v609
        %v646 = vunpack.c.l.b16 %v610
        %v647 = vunpack.c.h.b16 %v610
        %v648 = vunpack.c.l.b16 %v611
        %v649 = vunpack.c.h.b16 %v611
        %v650 = vunpack.c.l.b16 %v612
        %v651 = vunpack.c.h.b16 %v612
        %v652 = vunpack.c.l.b16 %v613
        %v653 = vunpack.c.h.b16 %v613
        %v654 = vunpack.c.l.b16 %v614
        %v655 = vunpack.c.h.b16 %v614
        %v656 = vunpack.c.l.b16 %v615
        %v657 = vunpack.c.h.b16 %v615
        %v658 = vunpack.c.l.b16 %v616
        %v659 = vunpack.c.h.b16 %v616
        %v660 = vunpack.c.l.b16 %v617
        %v661 = vunpack.c.h.b16 %v617
        %v662 = vunpack.c.l.b16 %v618
        %v663 = vunpack.c.h.b16 %v618
        %v664 = vunpack.c.l.b16 %v619
        %v665 = vunpack.c.h.b16 %v619
        %v666 = vunpack.c.l.b16 %v620
        %v667 = vunpack.c.h.b16 %v620
        %v668 = vunpack.c.l.b16 %v621
        %v669 = vunpack.c.h.b16 %v621
        %v670 = vpack.c.b16 %v642, %v638
        %v671 = vpack.c.b16 %v643, %v639
        %v672 = vpack.c.b16 %v644, %v640
        %v673 = vpack.c.b16 %v645, %v641
        %v674 = vpack.c.b16 %v650, %v646
        %v675 = vpack.c.b16 %v651, %v647
        %v676 = vpack.c.b16 %v652, %v648
        %v677 = vpack.c.b16 %v653, %v649
        %v678 = vpack.c.b16 %v658, %v654
        %v679 = vpack.c.b16 %v659, %v655
        %v680 = vpack.c.b16 %v660, %v656
        %v681 = vpack.c.b16 %v661, %v657
        %v682 = vpack.c.b16 %v666, %v662
        %v683 = vpack.c.b16 %v667, %v663
        %v684 = vpack.c.b16 %v668, %v664
        %v685 = vpack.c.b16 %v669, %v665
        %v703 = vsel %vm580, %v604, 0
        %705 = vmatpush.bf16.msra.mxu0 0
        %706 = vmatpush.bf16.msra.mxu0 0
        %707 = vmatpush.bf16.msra.mxu0 0
        %708 = vmatpush.bf16.msra.mxu0 0
        %709 = vmatpush.bf16.msra.mxu0 %v682
        %710 = vmatpush.bf16.msra.mxu0 %v678
        %711 = vmatpush.bf16.msra.mxu0 %v674
        %712 = vmatpush.bf16.msra.mxu0 %v670
        %713 = vmatmul.bf16.gmra.mxu0 %v703
        %v714 = vpop.f32.mrf.mxu0
        %v715 = vadd.f32 0.0, %v714
        %v716 = vpop.f32.mrf.mxu0
        %v717 = vadd.f32 0.0, %v716
        %718 = vdwg.mxu0
        %719 = vmatpush.bf16.msra.mxu0 0
        %720 = vmatpush.bf16.msra.mxu0 0
        %721 = vmatpush.bf16.msra.mxu0 0
        %722 = vmatpush.bf16.msra.mxu0 0
        %723 = vmatpush.bf16.msra.mxu0 %v683
        %724 = vmatpush.bf16.msra.mxu0 %v679
        %725 = vmatpush.bf16.msra.mxu0 %v675
        %726 = vmatpush.bf16.msra.mxu0 %v671
        %727 = vmatmul.bf16.gmra.mxu0 %v703
        %v728 = vpop.f32.mrf.mxu0
        %v729 = vadd.f32 0.0, %v728
        %v730 = vpop.f32.mrf.mxu0
        %v731 = vadd.f32 0.0, %v730
        %732 = vdwg.mxu0
        %733 = vmatpush.bf16.msra.mxu0 0
        %734 = vmatpush.bf16.msra.mxu0 0
        %735 = vmatpush.bf16.msra.mxu0 0
        %736 = vmatpush.bf16.msra.mxu0 0
        %737 = vmatpush.bf16.msra.mxu0 %v684
        %738 = vmatpush.bf16.msra.mxu0 %v680
        %739 = vmatpush.bf16.msra.mxu0 %v676
        %740 = vmatpush.bf16.msra.mxu0 %v672
        %741 = vmatmul.bf16.gmra.mxu0 %v703
        %v742 = vpop.f32.mrf.mxu0
        %v743 = vadd.f32 0.0, %v742
        %v744 = vpop.f32.mrf.mxu0
        %v745 = vadd.f32 0.0, %v744
        %746 = vdwg.mxu0
        %747 = vmatpush.bf16.msra.mxu0 0
        %748 = vmatpush.bf16.msra.mxu0 0
        %749 = vmatpush.bf16.msra.mxu0 0
        %750 = vmatpush.bf16.msra.mxu0 0
        %751 = vmatpush.bf16.msra.mxu0 %v685
        %752 = vmatpush.bf16.msra.mxu0 %v681
        %753 = vmatpush.bf16.msra.mxu0 %v677
        %754 = vmatpush.bf16.msra.mxu0 %v673
        %755 = vmatmul.bf16.gmra.mxu0 %v703
        %v756 = vpop.f32.mrf.mxu0
        %v757 = vadd.f32 0.0, %v756
        %v758 = vpop.f32.mrf.mxu0
        %v759 = vadd.f32 0.0, %v758
        %760 = vdwg.mxu0
        %v777 = vunpack.c.l.b16 %v586
        %v778 = vunpack.c.h.b16 %v586
        %v779 = vunpack.c.l.b16 %v587
        %v780 = vunpack.c.h.b16 %v587
        %v781 = vunpack.c.l.b16 %v588
        %v782 = vunpack.c.h.b16 %v588
        %v783 = vunpack.c.l.b16 %v589
        %v784 = vunpack.c.h.b16 %v589
        %v785 = vunpack.c.l.b16 %v590
        %v786 = vunpack.c.h.b16 %v590
        %v787 = vunpack.c.l.b16 %v591
        %v788 = vunpack.c.h.b16 %v591
        %v789 = vunpack.c.l.b16 %v592
        %v790 = vunpack.c.h.b16 %v592
        %v791 = vunpack.c.l.b16 %v593
        %v792 = vunpack.c.h.b16 %v593
        %v793 = vunpack.c.l.b16 %v594
        %v794 = vunpack.c.h.b16 %v594
        %v795 = vunpack.c.l.b16 %v595
        %v796 = vunpack.c.h.b16 %v595
        %v797 = vunpack.c.l.b16 %v596
        %v798 = vunpack.c.h.b16 %v596
        %v799 = vunpack.c.l.b16 %v597
        %v800 = vunpack.c.h.b16 %v597
        %v801 = vunpack.c.l.b16 %v598
        %v802 = vunpack.c.h.b16 %v598
        %v803 = vunpack.c.l.b16 %v599
        %v804 = vunpack.c.h.b16 %v599
        %v805 = vunpack.c.l.b16 %v600
        %v806 = vunpack.c.h.b16 %v600
        %v807 = vunpack.c.l.b16 %v601
        %v808 = vunpack.c.h.b16 %v601
        %v809 = vpack.c.b16 %v781, %v777
        %v810 = vpack.c.b16 %v782, %v778
        %v811 = vpack.c.b16 %v783, %v779
        %v812 = vpack.c.b16 %v784, %v780
        %v813 = vpack.c.b16 %v789, %v785
        %v814 = vpack.c.b16 %v790, %v786
        %v815 = vpack.c.b16 %v791, %v787
        %v816 = vpack.c.b16 %v792, %v788
        %v817 = vpack.c.b16 %v797, %v793
        %v818 = vpack.c.b16 %v798, %v794
        %v819 = vpack.c.b16 %v799, %v795
        %v820 = vpack.c.b16 %v800, %v796
        %v821 = vpack.c.b16 %v805, %v801
        %v822 = vpack.c.b16 %v806, %v802
        %v823 = vpack.c.b16 %v807, %v803
        %v824 = vpack.c.b16 %v808, %v804
        %v842 = vsel %vm580, %v585, 0
        %844 = vmatpush.bf16.msra.mxu0 0
        %845 = vmatpush.bf16.msra.mxu0 0
        %846 = vmatpush.bf16.msra.mxu0 0
        %847 = vmatpush.bf16.msra.mxu0 0
        %848 = vmatpush.bf16.msra.mxu0 %v821
        %849 = vmatpush.bf16.msra.mxu0 %v817
        %850 = vmatpush.bf16.msra.mxu0 %v813
        %851 = vmatpush.bf16.msra.mxu0 %v809
        %852 = vmatmul.bf16.gmra.mxu0 %v842
        %v853 = vpop.f32.mrf.mxu0
        %v854 = vadd.f32 %v715, %v853
        %v855 = vpop.f32.mrf.mxu0
        %v856 = vadd.f32 %v717, %v855
        %857 = vdwg.mxu0
        %858 = vmatpush.bf16.msra.mxu0 0
        %859 = vmatpush.bf16.msra.mxu0 0
        %860 = vmatpush.bf16.msra.mxu0 0
        %861 = vmatpush.bf16.msra.mxu0 0
        %862 = vmatpush.bf16.msra.mxu0 %v822
        %863 = vmatpush.bf16.msra.mxu0 %v818
        %864 = vmatpush.bf16.msra.mxu0 %v814
        %865 = vmatpush.bf16.msra.mxu0 %v810
        %866 = vmatmul.bf16.gmra.mxu0 %v842
        %v867 = vpop.f32.mrf.mxu0
        %v868 = vadd.f32 %v729, %v867
        %v869 = vpop.f32.mrf.mxu0
        %v870 = vadd.f32 %v731, %v869
        %871 = vdwg.mxu0
        %872 = vmatpush.bf16.msra.mxu0 0
        %873 = vmatpush.bf16.msra.mxu0 0
        %874 = vmatpush.bf16.msra.mxu0 0
        %875 = vmatpush.bf16.msra.mxu0 0
        %876 = vmatpush.bf16.msra.mxu0 %v823
        %877 = vmatpush.bf16.msra.mxu0 %v819
        %878 = vmatpush.bf16.msra.mxu0 %v815
        %879 = vmatpush.bf16.msra.mxu0 %v811
        %880 = vmatmul.bf16.gmra.mxu0 %v842
        %v881 = vpop.f32.mrf.mxu0
        %v882 = vadd.f32 %v743, %v881
        %v883 = vpop.f32.mrf.mxu0
        %v884 = vadd.f32 %v745, %v883
        %885 = vdwg.mxu0
        %886 = vmatpush.bf16.msra.mxu0 0
        %887 = vmatpush.bf16.msra.mxu0 0
        %888 = vmatpush.bf16.msra.mxu0 0
        %889 = vmatpush.bf16.msra.mxu0 0
        %890 = vmatpush.bf16.msra.mxu0 %v824
        %891 = vmatpush.bf16.msra.mxu0 %v820
        %892 = vmatpush.bf16.msra.mxu0 %v816
        %893 = vmatpush.bf16.msra.mxu0 %v812
        %894 = vmatmul.bf16.gmra.mxu0 %v842
        %v895 = vpop.f32.mrf.mxu0
        %v896 = vadd.f32 %v757, %v895
        %v897 = vpop.f32.mrf.mxu0
        %v898 = vadd.f32 %v759, %v897
        %899 = vdwg.mxu0
        %v900 = vld [vmem:[#allocation2 + $0x2] sm:$0xff]
        %v901 = vld [vmem:[#allocation2 + $0xa] sm:$0xff]
        %v902 = vpack.c.bf16 %v901, %v900
        %s903 = scalar_lea.vmem %s1, 256
        %v904 = vld [vmem:[%s903] sm:$0xff]
        %v905 = vld [vmem:[%s903 + $0x8] sm:$0xff]
        %v906 = vld [vmem:[%s903 + $0x10] sm:$0xff]
        %v907 = vld [vmem:[%s903 + $0x18] sm:$0xff]
        %v908 = vld [vmem:[%s903 + $0x20] sm:$0xff]
        %v909 = vld [vmem:[%s903 + $0x28] sm:$0xff]
        %v910 = vld [vmem:[%s903 + $0x30] sm:$0xff]
        %v911 = vld [vmem:[%s903 + $0x38] sm:$0xff]
        %v912 = vld [vmem:[%s903 + $0x40] sm:$0xff]
        %v913 = vld [vmem:[%s903 + $0x48] sm:$0xff]
        %v914 = vld [vmem:[%s903 + $0x50] sm:$0xff]
        %v915 = vld [vmem:[%s903 + $0x58] sm:$0xff]
        %v916 = vld [vmem:[%s903 + $0x60] sm:$0xff]
        %v917 = vld [vmem:[%s903 + $0x68] sm:$0xff]
        %v918 = vld [vmem:[%s903 + $0x70] sm:$0xff]
        %v919 = vld [vmem:[%s903 + $0x78] sm:$0xff]
        %v936 = vunpack.c.l.b16 %v904
        %v937 = vunpack.c.h.b16 %v904
        %v938 = vunpack.c.l.b16 %v905
        %v939 = vunpack.c.h.b16 %v905
        %v940 = vunpack.c.l.b16 %v906
        %v941 = vunpack.c.h.b16 %v906
        %v942 = vunpack.c.l.b16 %v907
        %v943 = vunpack.c.h.b16 %v907
        %v944 = vunpack.c.l.b16 %v908
        %v945 = vunpack.c.h.b16 %v908
        %v946 = vunpack.c.l.b16 %v909
        %v947 = vunpack.c.h.b16 %v909
        %v948 = vunpack.c.l.b16 %v910
        %v949 = vunpack.c.h.b16 %v910
        %v950 = vunpack.c.l.b16 %v911
        %v951 = vunpack.c.h.b16 %v911
        %v952 = vunpack.c.l.b16 %v912
        %v953 = vunpack.c.h.b16 %v912
        %v954 = vunpack.c.l.b16 %v913
        %v955 = vunpack.c.h.b16 %v913
        %v956 = vunpack.c.l.b16 %v914
        %v957 = vunpack.c.h.b16 %v914
        %v958 = vunpack.c.l.b16 %v915
        %v959 = vunpack.c.h.b16 %v915
        %v960 = vunpack.c.l.b16 %v916
        %v961 = vunpack.c.h.b16 %v916
        %v962 = vunpack.c.l.b16 %v917
        %v963 = vunpack.c.h.b16 %v917
        %v964 = vunpack.c.l.b16 %v918
        %v965 = vunpack.c.h.b16 %v918
        %v966 = vunpack.c.l.b16 %v919
        %v967 = vunpack.c.h.b16 %v919
        %v968 = vpack.c.b16 %v940, %v936
        %v969 = vpack.c.b16 %v941, %v937
        %v970 = vpack.c.b16 %v942, %v938
        %v971 = vpack.c.b16 %v943, %v939
        %v972 = vpack.c.b16 %v948, %v944
        %v973 = vpack.c.b16 %v949, %v945
        %v974 = vpack.c.b16 %v950, %v946
        %v975 = vpack.c.b16 %v951, %v947
        %v976 = vpack.c.b16 %v956, %v952
        %v977 = vpack.c.b16 %v957, %v953
        %v978 = vpack.c.b16 %v958, %v954
        %v979 = vpack.c.b16 %v959, %v955
        %v980 = vpack.c.b16 %v964, %v960
        %v981 = vpack.c.b16 %v965, %v961
        %v982 = vpack.c.b16 %v966, %v962
        %v983 = vpack.c.b16 %v967, %v963
        %v1001 = vsel %vm580, %v902, 0
        %1003 = vmatpush.bf16.msra.mxu0 0
        %1004 = vmatpush.bf16.msra.mxu0 0
        %1005 = vmatpush.bf16.msra.mxu0 0
        %1006 = vmatpush.bf16.msra.mxu0 0
        %1007 = vmatpush.bf16.msra.mxu0 %v980
        %1008 = vmatpush.bf16.msra.mxu0 %v976
        %1009 = vmatpush.bf16.msra.mxu0 %v972
        %1010 = vmatpush.bf16.msra.mxu0 %v968
        %1011 = vmatmul.bf16.gmra.mxu0 %v1001
        %v1012 = vpop.f32.mrf.mxu0
        %v1013 = vadd.f32 0.0, %v1012
        %v1014 = vpop.f32.mrf.mxu0
        %v1015 = vadd.f32 0.0, %v1014
        %1016 = vdwg.mxu0
        %1017 = vmatpush.bf16.msra.mxu0 0
        %1018 = vmatpush.bf16.msra.mxu0 0
        %1019 = vmatpush.bf16.msra.mxu0 0
        %1020 = vmatpush.bf16.msra.mxu0 0
        %1021 = vmatpush.bf16.msra.mxu0 %v981
        %1022 = vmatpush.bf16.msra.mxu0 %v977
        %1023 = vmatpush.bf16.msra.mxu0 %v973
        %1024 = vmatpush.bf16.msra.mxu0 %v969
        %1025 = vmatmul.bf16.gmra.mxu0 %v1001
        %v1026 = vpop.f32.mrf.mxu0
        %v1027 = vadd.f32 0.0, %v1026
        %v1028 = vpop.f32.mrf.mxu0
        %v1029 = vadd.f32 0.0, %v1028
        %1030 = vdwg.mxu0
        %1031 = vmatpush.bf16.msra.mxu0 0
        %1032 = vmatpush.bf16.msra.mxu0 0
        %1033 = vmatpush.bf16.msra.mxu0 0
        %1034 = vmatpush.bf16.msra.mxu0 0
        %1035 = vmatpush.bf16.msra.mxu0 %v982
        %1036 = vmatpush.bf16.msra.mxu0 %v978
        %1037 = vmatpush.bf16.msra.mxu0 %v974
        %1038 = vmatpush.bf16.msra.mxu0 %v970
        %1039 = vmatmul.bf16.gmra.mxu0 %v1001
        %v1040 = vpop.f32.mrf.mxu0
        %v1041 = vadd.f32 0.0, %v1040
        %v1042 = vpop.f32.mrf.mxu0
        %v1043 = vadd.f32 0.0, %v1042
        %1044 = vdwg.mxu0
        %1045 = vmatpush.bf16.msra.mxu0 0
        %1046 = vmatpush.bf16.msra.mxu0 0
        %1047 = vmatpush.bf16.msra.mxu0 0
        %1048 = vmatpush.bf16.msra.mxu0 0
        %1049 = vmatpush.bf16.msra.mxu0 %v983
        %1050 = vmatpush.bf16.msra.mxu0 %v979
        %1051 = vmatpush.bf16.msra.mxu0 %v975
        %1052 = vmatpush.bf16.msra.mxu0 %v971
        %1053 = vmatmul.bf16.gmra.mxu0 %v1001
        %v1054 = vpop.f32.mrf.mxu0
        %v1055 = vadd.f32 0.0, %v1054
        %v1056 = vpop.f32.mrf.mxu0
        %v1057 = vadd.f32 0.0, %v1056
        %1058 = vdwg.mxu0
        %v1059 = vadd.f32 %v854, %v1013
        %v1060 = vadd.f32 %v868, %v1027
        %v1061 = vadd.f32 %v882, %v1041
        %v1062 = vadd.f32 %v896, %v1055
        %v1063 = vadd.f32 %v856, %v1015
        %v1064 = vadd.f32 %v870, %v1029
        %v1065 = vadd.f32 %v884, %v1043
        %v1066 = vadd.f32 %v898, %v1057
        %v1067 = vld [vmem:[%s2] sm:$0xf]
        %v1069 = vperm.slane %v1067, 0
        %v1070 = vperm.slane %v1067, 1
        %v1071 = vperm.slane %v1067, 2
        %v1072 = vperm.slane %v1067, 3
        %v1077 = vadd.f32 %v1059, %v1069
        %v1078 = vadd.f32 %v1060, %v1070
        %v1079 = vadd.f32 %v1061, %v1071
        %v1080 = vadd.f32 %v1062, %v1072
        %v1081 = vadd.f32 %v1063, %v1069
        %v1082 = vadd.f32 %v1064, %v1070
        %v1083 = vadd.f32 %v1065, %v1071
        %v1084 = vadd.f32 %v1066, %v1072
        %v1085 = vmax.f32 %v1077, 0.0
        %v1086 = vmax.f32 %v1078, 0.0
        %v1087 = vmax.f32 %v1079, 0.0
        %v1088 = vmax.f32 %v1080, 0.0
        %v1089 = vmax.f32 %v1081, 0.0
        %v1090 = vmax.f32 %v1082, 0.0
        %v1091 = vmax.f32 %v1083, 0.0
        %v1092 = vmax.f32 %v1084, 0.0
        %v1093 = vmax.f32 %v1085, %v1087
        %v1094 = vmax.f32 %v1086, %v1088
        %v1095 = vmax.f32 %v1089, %v1091
        %v1096 = vmax.f32 %v1090, %v1092
        %v1099 = vrot.slane %v1093, 1
        %v1100 = vrot.slane %v1094, 1
        %v1103 = vmax.f32 %v1093, %v1099
        %v1104 = vmax.f32 %v1094, %v1100
        %v1107 = vrot.slane %v1095, 1
        %v1108 = vrot.slane %v1096, 1
        %v1111 = vmax.f32 %v1095, %v1107
        %v1112 = vmax.f32 %v1096, %v1108
        %v1115 = vrot.slane %v1103, 1
        %v1116 = vrot.slane %v1104, 1
        %v1119 = vrot.slane %v1103, 2
        %v1120 = vrot.slane %v1104, 2
        %v1123 = vrot.slane %v1103, 3
        %v1124 = vrot.slane %v1104, 3
        %v1129 = vrot.slane %v1111, 4
        %v1130 = vrot.slane %v1112, 4
        %v1133 = vrot.slane %v1111, 5
        %v1134 = vrot.slane %v1112, 5
        %v1137 = vrot.slane %v1111, 6
        %v1138 = vrot.slane %v1112, 6
        %v1141 = vrot.slane %v1111, 7
        %v1142 = vrot.slane %v1112, 7
        %vm1145 = vcmask 1040384
        %v1146 = vsel %vm1145, %v1103, %v1115
        %v1147 = vsel %vm1145, %v1104, %v1116
        %vm1148 = vcmask 1041408
        %v1149 = vsel %vm1148, %v1146, %v1119
        %v1150 = vsel %vm1148, %v1147, %v1120
        %vm1151 = vcmask 1042432
        %v1152 = vsel %vm1151, %v1149, %v1123
        %v1153 = vsel %vm1151, %v1150, %v1124
        %vm1154 = vcmask 1043456
        %v1155 = vsel %vm1154, %v1152, %v1129
        %v1156 = vsel %vm1154, %v1153, %v1130
        %vm1157 = vcmask 1044480
        %v1158 = vsel %vm1157, %v1155, %v1133
        %v1159 = vsel %vm1157, %v1156, %v1134
        %vm1160 = vcmask 1045504
        %v1161 = vsel %vm1160, %v1158, %v1137
        %v1162 = vsel %vm1160, %v1159, %v1138
        %vm1163 = vcmask 1046528
        %v1164 = vsel %vm1163, %v1161, %v1141
        %v1165 = vsel %vm1163, %v1162, %v1142
        %v1166 = vlaneseq
        %vm1167 = vcmp.ge.s32.totalorder %v1166, 0
        %vm1168 = vcmp.lt.s32.totalorder %v1166, 256
        %vm1169 = vmand %vm1167, %vm1168
        %1170 = vst.msk [vmem:[#allocation3] ss:$8 sm:$0x3] %vm1169, 0.0
        %1171 = vst.msk [vmem:[#allocation3] ss:$8 sm:$0x0] %vm1169, 0.0
        %s1172 = scalar_lea.vmem [#allocation3], 17
        %1173 = vst.msk [vmem:[%s1172] ss:$8 sm:$0x3] %vm1169, 0.0
        %1174 = vst.msk [vmem:[%s1172] ss:$8 sm:$0x0] %vm1169, 0.0
        %v1177 = vrot.slane %v1164, 7
        %v1178 = vrot.slane %v1165, 7
        %1181 = vst [vmem:[#allocation3] sm:$0xfe] %v1177
        %1182 = vst [vmem:[#allocation3 + $0x8] sm:$0xfe] %v1178
        %1183 = vst [vmem:[#allocation3 + $0x10] sm:$0x1] %v1177
        %1184 = vst [vmem:[#allocation3 + $0x18] sm:$0x1] %v1178
        %v1185 = vld [vmem:[#allocation3] sm:$0xff]
        %v1186 = vld [vmem:[#allocation3 + $0x8] sm:$0xff]
        %v1187 = vpack.c.bf16 %v1185, %v1185
        %v1188 = vpack.c.bf16 %v1186, %v1186
        %v1189 = vld [vmem:[#allocation6] sm:$0xff]
        %v1190 = vld [vmem:[#allocation6 + $0x8] sm:$0xff]
        %v1191 = vld [vmem:[#allocation6 + $0x10] sm:$0xff]
        %v1192 = vld [vmem:[#allocation6 + $0x18] sm:$0xff]
        %v1193 = vld [vmem:[#allocation6 + $0x20] sm:$0xff]
        %v1194 = vld [vmem:[#allocation6 + $0x28] sm:$0xff]
        %v1195 = vld [vmem:[#allocation6 + $0x30] sm:$0xff]
        %v1196 = vld [vmem:[#allocation6 + $0x38] sm:$0xff]
        %v1197 = vld [vmem:[#allocation6 + $0x40] sm:$0xff]
        %v1198 = vld [vmem:[#allocation6 + $0x48] sm:$0xff]
        %v1199 = vld [vmem:[#allocation6 + $0x50] sm:$0xff]
        %v1200 = vld [vmem:[#allocation6 + $0x58] sm:$0xff]
        %v1201 = vld [vmem:[#allocation6 + $0x60] sm:$0xff]
        %v1202 = vld [vmem:[#allocation6 + $0x68] sm:$0xff]
        %v1203 = vld [vmem:[#allocation6 + $0x70] sm:$0xff]
        %v1204 = vld [vmem:[#allocation6 + $0x78] sm:$0xff]
        %v1205 = vld [vmem:[#allocation6 + $0x80] sm:$0xff]
        %v1206 = vld [vmem:[#allocation6 + $0x88] sm:$0xff]
        %v1207 = vld [vmem:[#allocation6 + $0x90] sm:$0xff]
        %v1208 = vld [vmem:[#allocation6 + $0x98] sm:$0xff]
        %v1209 = vld [vmem:[#allocation6 + $0xa0] sm:$0xff]
        %v1210 = vld [vmem:[#allocation6 + $0xa8] sm:$0xff]
        %v1211 = vld [vmem:[#allocation6 + $0xb0] sm:$0xff]
        %v1212 = vld [vmem:[#allocation6 + $0xb8] sm:$0xff]
        %v1213 = vld [vmem:[#allocation6 + $0xc0] sm:$0xff]
        %v1214 = vld [vmem:[#allocation6 + $0xc8] sm:$0xff]
        %v1215 = vld [vmem:[#allocation6 + $0xd0] sm:$0xff]
        %v1216 = vld [vmem:[#allocation6 + $0xd8] sm:$0xff]
        %v1217 = vld [vmem:[#allocation6 + $0xe0] sm:$0xff]
        %v1218 = vld [vmem:[#allocation6 + $0xe8] sm:$0xff]
        %v1219 = vld [vmem:[#allocation6 + $0xf0] sm:$0xff]
        %v1220 = vld [vmem:[#allocation6 + $0xf8] sm:$0xff]
        %v1221 = vld [vmem:[#allocation3] sm:$0xfe]
        %v1222 = vld [vmem:[#allocation3 + $0x8] sm:$0xfe]
        %v1223 = vld [vmem:[#allocation3 + $0x10] sm:$0x1]
        %v1224 = vld [vmem:[#allocation3 + $0x18] sm:$0x1]
        %v1225 = vpack.c.bf16 %v1223, %v1221
        %v1226 = vpack.c.bf16 %v1224, %v1222
        %s1227 = scalar_lea.vmem [#allocation6], 256
        %v1228 = vld [vmem:[%s1227] sm:$0xff]
        %v1229 = vld [vmem:[%s1227 + $0x8] sm:$0xff]
        %v1230 = vld [vmem:[%s1227 + $0x10] sm:$0xff]
        %v1231 = vld [vmem:[%s1227 + $0x18] sm:$0xff]
        %v1232 = vld [vmem:[%s1227 + $0x20] sm:$0xff]
        %v1233 = vld [vmem:[%s1227 + $0x28] sm:$0xff]
        %v1234 = vld [vmem:[%s1227 + $0x30] sm:$0xff]
        %v1235 = vld [vmem:[%s1227 + $0x38] sm:$0xff]
        %v1236 = vld [vmem:[%s1227 + $0x40] sm:$0xff]
        %v1237 = vld [vmem:[%s1227 + $0x48] sm:$0xff]
        %v1238 = vld [vmem:[%s1227 + $0x50] sm:$0xff]
        %v1239 = vld [vmem:[%s1227 + $0x58] sm:$0xff]
        %v1240 = vld [vmem:[%s1227 + $0x60] sm:$0xff]
        %v1241 = vld [vmem:[%s1227 + $0x68] sm:$0xff]
        %v1242 = vld [vmem:[%s1227 + $0x70] sm:$0xff]
        %v1243 = vld [vmem:[%s1227 + $0x78] sm:$0xff]
        %v1244 = vld [vmem:[%s1227 + $0x80] sm:$0xff]
        %v1245 = vld [vmem:[%s1227 + $0x88] sm:$0xff]
        %v1246 = vld [vmem:[%s1227 + $0x90] sm:$0xff]
        %v1247 = vld [vmem:[%s1227 + $0x98] sm:$0xff]
        %v1248 = vld [vmem:[%s1227 + $0xa0] sm:$0xff]
        %v1249 = vld [vmem:[%s1227 + $0xa8] sm:$0xff]
        %v1250 = vld [vmem:[%s1227 + $0xb0] sm:$0xff]
        %v1251 = vld [vmem:[%s1227 + $0xb8] sm:$0xff]
        %v1252 = vld [vmem:[%s1227 + $0xc0] sm:$0xff]
        %v1253 = vld [vmem:[%s1227 + $0xc8] sm:$0xff]
        %v1254 = vld [vmem:[%s1227 + $0xd0] sm:$0xff]
        %v1255 = vld [vmem:[%s1227 + $0xd8] sm:$0xff]
        %v1256 = vld [vmem:[%s1227 + $0xe0] sm:$0xff]
        %v1257 = vld [vmem:[%s1227 + $0xe8] sm:$0xff]
        %v1258 = vld [vmem:[%s1227 + $0xf0] sm:$0xff]
        %v1259 = vld [vmem:[%s1227 + $0xf8] sm:$0xff]
        %v1261 = vshrl.u32 %v1225, 16
        %v1263 = vshll.u32 %v1225, 16
        %v1265 = vrot.slane %v1263, 1
        %v1266 = vor.u32 %v1261, %v1265
        %v1268 = vshrl.u32 %v1226, 16
        %v1270 = vshll.u32 %v1226, 16
        %v1272 = vrot.slane %v1270, 1
        %v1273 = vor.u32 %v1268, %v1272
        %v1308 = vunpack.c.l.b16 %v1228
        %v1309 = vunpack.c.h.b16 %v1228
        %v1310 = vunpack.c.l.b16 %v1229
        %v1311 = vunpack.c.h.b16 %v1229
        %v1312 = vunpack.c.l.b16 %v1230
        %v1313 = vunpack.c.h.b16 %v1230
        %v1314 = vunpack.c.l.b16 %v1231
        %v1315 = vunpack.c.h.b16 %v1231
        %v1316 = vunpack.c.l.b16 %v1232
        %v1317 = vunpack.c.h.b16 %v1232
        %v1318 = vunpack.c.l.b16 %v1233
        %v1319 = vunpack.c.h.b16 %v1233
        %v1320 = vunpack.c.l.b16 %v1234
        %v1321 = vunpack.c.h.b16 %v1234
        %v1322 = vunpack.c.l.b16 %v1235
        %v1323 = vunpack.c.h.b16 %v1235
        %v1324 = vunpack.c.l.b16 %v1236
        %v1325 = vunpack.c.h.b16 %v1236
        %v1326 = vunpack.c.l.b16 %v1237
        %v1327 = vunpack.c.h.b16 %v1237
        %v1328 = vunpack.c.l.b16 %v1238
        %v1329 = vunpack.c.h.b16 %v1238
        %v1330 = vunpack.c.l.b16 %v1239
        %v1331 = vunpack.c.h.b16 %v1239
        %v1332 = vunpack.c.l.b16 %v1240
        %v1333 = vunpack.c.h.b16 %v1240
        %v1334 = vunpack.c.l.b16 %v1241
        %v1335 = vunpack.c.h.b16 %v1241
        %v1336 = vunpack.c.l.b16 %v1242
        %v1337 = vunpack.c.h.b16 %v1242
        %v1338 = vunpack.c.l.b16 %v1243
        %v1339 = vunpack.c.h.b16 %v1243
        %v1340 = vunpack.c.l.b16 %v1244
        %v1341 = vunpack.c.h.b16 %v1244
        %v1342 = vunpack.c.l.b16 %v1245
        %v1343 = vunpack.c.h.b16 %v1245
        %v1344 = vunpack.c.l.b16 %v1246
        %v1345 = vunpack.c.h.b16 %v1246
        %v1346 = vunpack.c.l.b16 %v1247
        %v1347 = vunpack.c.h.b16 %v1247
        %v1348 = vunpack.c.l.b16 %v1248
        %v1349 = vunpack.c.h.b16 %v1248
        %v1350 = vunpack.c.l.b16 %v1249
        %v1351 = vunpack.c.h.b16 %v1249
        %v1352 = vunpack.c.l.b16 %v1250
        %v1353 = vunpack.c.h.b16 %v1250
        %v1354 = vunpack.c.l.b16 %v1251
        %v1355 = vunpack.c.h.b16 %v1251
        %v1356 = vunpack.c.l.b16 %v1252
        %v1357 = vunpack.c.h.b16 %v1252
        %v1358 = vunpack.c.l.b16 %v1253
        %v1359 = vunpack.c.h.b16 %v1253
        %v1360 = vunpack.c.l.b16 %v1254
        %v1361 = vunpack.c.h.b16 %v1254
        %v1362 = vunpack.c.l.b16 %v1255
        %v1363 = vunpack.c.h.b16 %v1255
        %v1364 = vunpack.c.l.b16 %v1256
        %v1365 = vunpack.c.h.b16 %v1256
        %v1366 = vunpack.c.l.b16 %v1257
        %v1367 = vunpack.c.h.b16 %v1257
        %v1368 = vunpack.c.l.b16 %v1258
        %v1369 = vunpack.c.h.b16 %v1258
        %v1370 = vunpack.c.l.b16 %v1259
        %v1371 = vunpack.c.h.b16 %v1259
        %v1372 = vpack.c.b16 %v1310, %v1308
        %v1373 = vpack.c.b16 %v1311, %v1309
        %v1374 = vpack.c.b16 %v1314, %v1312
        %v1375 = vpack.c.b16 %v1315, %v1313
        %v1376 = vpack.c.b16 %v1318, %v1316
        %v1377 = vpack.c.b16 %v1319, %v1317
        %v1378 = vpack.c.b16 %v1322, %v1320
        %v1379 = vpack.c.b16 %v1323, %v1321
        %v1380 = vpack.c.b16 %v1326, %v1324
        %v1381 = vpack.c.b16 %v1327, %v1325
        %v1382 = vpack.c.b16 %v1330, %v1328
        %v1383 = vpack.c.b16 %v1331, %v1329
        %v1384 = vpack.c.b16 %v1334, %v1332
        %v1385 = vpack.c.b16 %v1335, %v1333
        %v1386 = vpack.c.b16 %v1338, %v1336
        %v1387 = vpack.c.b16 %v1339, %v1337
        %v1388 = vpack.c.b16 %v1342, %v1340
        %v1389 = vpack.c.b16 %v1343, %v1341
        %v1390 = vpack.c.b16 %v1346, %v1344
        %v1391 = vpack.c.b16 %v1347, %v1345
        %v1392 = vpack.c.b16 %v1350, %v1348
        %v1393 = vpack.c.b16 %v1351, %v1349
        %v1394 = vpack.c.b16 %v1354, %v1352
        %v1395 = vpack.c.b16 %v1355, %v1353
        %v1396 = vpack.c.b16 %v1358, %v1356
        %v1397 = vpack.c.b16 %v1359, %v1357
        %v1398 = vpack.c.b16 %v1362, %v1360
        %v1399 = vpack.c.b16 %v1363, %v1361
        %v1400 = vpack.c.b16 %v1366, %v1364
        %v1401 = vpack.c.b16 %v1367, %v1365
        %v1402 = vpack.c.b16 %v1370, %v1368
        %v1403 = vpack.c.b16 %v1371, %v1369
        %1436 = vmatpush.bf16.msra.mxu0 %v1386
        %1437 = vmatpush.bf16.msra.mxu0 %v1384
        %1438 = vmatpush.bf16.msra.mxu0 %v1382
        %1439 = vmatpush.bf16.msra.mxu0 %v1380
        %1440 = vmatpush.bf16.msra.mxu0 %v1378
        %1441 = vmatpush.bf16.msra.mxu0 %v1376
        %1442 = vmatpush.bf16.msra.mxu0 %v1374
        %1443 = vmatpush.bf16.msra.mxu0 %v1372
        %1444 = vmatmul.bf16.gmra.mxu0 %v1266
        %v1445 = vpop.f32.mrf.mxu0
        %v1446 = vadd.f32 0.0, %v1445
        %v1447 = vpop.f32.mrf.mxu0
        %1448 = vdwg.mxu0
        %1449 = vmatpush.bf16.msra.mxu0 %v1402
        %1450 = vmatpush.bf16.msra.mxu0 %v1400
        %1451 = vmatpush.bf16.msra.mxu0 %v1398
        %1452 = vmatpush.bf16.msra.mxu0 %v1396
        %1453 = vmatpush.bf16.msra.mxu0 %v1394
        %1454 = vmatpush.bf16.msra.mxu0 %v1392
        %1455 = vmatpush.bf16.msra.mxu0 %v1390
        %1456 = vmatpush.bf16.msra.mxu0 %v1388
        %1457 = vmatmul.bf16.gmra.mxu0 %v1273
        %v1458 = vpop.f32.mrf.mxu0
        %v1459 = vadd.f32 %v1446, %v1458
        %v1460 = vpop.f32.mrf.mxu0
        %1461 = vdwg.mxu0
        %1462 = vmatpush.bf16.msra.mxu0 %v1387
        %1463 = vmatpush.bf16.msra.mxu0 %v1385
        %1464 = vmatpush.bf16.msra.mxu0 %v1383
        %1465 = vmatpush.bf16.msra.mxu0 %v1381
        %1466 = vmatpush.bf16.msra.mxu0 %v1379
        %1467 = vmatpush.bf16.msra.mxu0 %v1377
        %1468 = vmatpush.bf16.msra.mxu0 %v1375
        %1469 = vmatpush.bf16.msra.mxu0 %v1373
        %1470 = vmatmul.bf16.gmra.mxu0 %v1266
        %v1471 = vpop.f32.mrf.mxu0
        %v1472 = vadd.f32 0.0, %v1471
        %v1473 = vpop.f32.mrf.mxu0
        %1474 = vdwg.mxu0
        %1475 = vmatpush.bf16.msra.mxu0 %v1403
        %1476 = vmatpush.bf16.msra.mxu0 %v1401
        %1477 = vmatpush.bf16.msra.mxu0 %v1399
        %1478 = vmatpush.bf16.msra.mxu0 %v1397
        %1479 = vmatpush.bf16.msra.mxu0 %v1395
        %1480 = vmatpush.bf16.msra.mxu0 %v1393
        %1481 = vmatpush.bf16.msra.mxu0 %v1391
        %1482 = vmatpush.bf16.msra.mxu0 %v1389
        %1483 = vmatmul.bf16.gmra.mxu0 %v1273
        %v1484 = vpop.f32.mrf.mxu0
        %v1485 = vadd.f32 %v1472, %v1484
        %v1486 = vpop.f32.mrf.mxu0
        %1487 = vdwg.mxu0
        %v1520 = vunpack.c.l.b16 %v1189
        %v1521 = vunpack.c.h.b16 %v1189
        %v1522 = vunpack.c.l.b16 %v1190
        %v1523 = vunpack.c.h.b16 %v1190
        %v1524 = vunpack.c.l.b16 %v1191
        %v1525 = vunpack.c.h.b16 %v1191
        %v1526 = vunpack.c.l.b16 %v1192
        %v1527 = vunpack.c.h.b16 %v1192
        %v1528 = vunpack.c.l.b16 %v1193
        %v1529 = vunpack.c.h.b16 %v1193
        %v1530 = vunpack.c.l.b16 %v1194
        %v1531 = vunpack.c.h.b16 %v1194
        %v1532 = vunpack.c.l.b16 %v1195
        %v1533 = vunpack.c.h.b16 %v1195
        %v1534 = vunpack.c.l.b16 %v1196
        %v1535 = vunpack.c.h.b16 %v1196
        %v1536 = vunpack.c.l.b16 %v1197
        %v1537 = vunpack.c.h.b16 %v1197
        %v1538 = vunpack.c.l.b16 %v1198
        %v1539 = vunpack.c.h.b16 %v1198
        %v1540 = vunpack.c.l.b16 %v1199
        %v1541 = vunpack.c.h.b16 %v1199
        %v1542 = vunpack.c.l.b16 %v1200
        %v1543 = vunpack.c.h.b16 %v1200
        %v1544 = vunpack.c.l.b16 %v1201
        %v1545 = vunpack.c.h.b16 %v1201
        %v1546 = vunpack.c.l.b16 %v1202
        %v1547 = vunpack.c.h.b16 %v1202
        %v1548 = vunpack.c.l.b16 %v1203
        %v1549 = vunpack.c.h.b16 %v1203
        %v1550 = vunpack.c.l.b16 %v1204
        %v1551 = vunpack.c.h.b16 %v1204
        %v1552 = vunpack.c.l.b16 %v1205
        %v1553 = vunpack.c.h.b16 %v1205
        %v1554 = vunpack.c.l.b16 %v1206
        %v1555 = vunpack.c.h.b16 %v1206
        %v1556 = vunpack.c.l.b16 %v1207
        %v1557 = vunpack.c.h.b16 %v1207
        %v1558 = vunpack.c.l.b16 %v1208
        %v1559 = vunpack.c.h.b16 %v1208
        %v1560 = vunpack.c.l.b16 %v1209
        %v1561 = vunpack.c.h.b16 %v1209
        %v1562 = vunpack.c.l.b16 %v1210
        %v1563 = vunpack.c.h.b16 %v1210
        %v1564 = vunpack.c.l.b16 %v1211
        %v1565 = vunpack.c.h.b16 %v1211
        %v1566 = vunpack.c.l.b16 %v1212
        %v1567 = vunpack.c.h.b16 %v1212
        %v1568 = vunpack.c.l.b16 %v1213
        %v1569 = vunpack.c.h.b16 %v1213
        %v1570 = vunpack.c.l.b16 %v1214
        %v1571 = vunpack.c.h.b16 %v1214
        %v1572 = vunpack.c.l.b16 %v1215
        %v1573 = vunpack.c.h.b16 %v1215
        %v1574 = vunpack.c.l.b16 %v1216
        %v1575 = vunpack.c.h.b16 %v1216
        %v1576 = vunpack.c.l.b16 %v1217
        %v1577 = vunpack.c.h.b16 %v1217
        %v1578 = vunpack.c.l.b16 %v1218
        %v1579 = vunpack.c.h.b16 %v1218
        %v1580 = vunpack.c.l.b16 %v1219
        %v1581 = vunpack.c.h.b16 %v1219
        %v1582 = vunpack.c.l.b16 %v1220
        %v1583 = vunpack.c.h.b16 %v1220
        %v1584 = vpack.c.b16 %v1522, %v1520
        %v1585 = vpack.c.b16 %v1523, %v1521
        %v1586 = vpack.c.b16 %v1526, %v1524
        %v1587 = vpack.c.b16 %v1527, %v1525
        %v1588 = vpack.c.b16 %v1530, %v1528
        %v1589 = vpack.c.b16 %v1531, %v1529
        %v1590 = vpack.c.b16 %v1534, %v1532
        %v1591 = vpack.c.b16 %v1535, %v1533
        %v1592 = vpack.c.b16 %v1538, %v1536
        %v1593 = vpack.c.b16 %v1539, %v1537
        %v1594 = vpack.c.b16 %v1542, %v1540
        %v1595 = vpack.c.b16 %v1543, %v1541
        %v1596 = vpack.c.b16 %v1546, %v1544
        %v1597 = vpack.c.b16 %v1547, %v1545
        %v1598 = vpack.c.b16 %v1550, %v1548
        %v1599 = vpack.c.b16 %v1551, %v1549
        %v1600 = vpack.c.b16 %v1554, %v1552
        %v1601 = vpack.c.b16 %v1555, %v1553
        %v1602 = vpack.c.b16 %v1558, %v1556
        %v1603 = vpack.c.b16 %v1559, %v1557
        %v1604 = vpack.c.b16 %v1562, %v1560
        %v1605 = vpack.c.b16 %v1563, %v1561
        %v1606 = vpack.c.b16 %v1566, %v1564
        %v1607 = vpack.c.b16 %v1567, %v1565
        %v1608 = vpack.c.b16 %v1570, %v1568
        %v1609 = vpack.c.b16 %v1571, %v1569
        %v1610 = vpack.c.b16 %v1574, %v1572
        %v1611 = vpack.c.b16 %v1575, %v1573
        %v1612 = vpack.c.b16 %v1578, %v1576
        %v1613 = vpack.c.b16 %v1579, %v1577
        %v1614 = vpack.c.b16 %v1582, %v1580
        %v1615 = vpack.c.b16 %v1583, %v1581
        %1648 = vmatpush.bf16.msra.mxu0 %v1598
        %1649 = vmatpush.bf16.msra.mxu0 %v1596
        %1650 = vmatpush.bf16.msra.mxu0 %v1594
        %1651 = vmatpush.bf16.msra.mxu0 %v1592
        %1652 = vmatpush.bf16.msra.mxu0 %v1590
        %1653 = vmatpush.bf16.msra.mxu0 %v1588
        %1654 = vmatpush.bf16.msra.mxu0 %v1586
        %1655 = vmatpush.bf16.msra.mxu0 %v1584
        %1656 = vmatmul.bf16.gmra.mxu0 %v1187
        %v1657 = vpop.f32.mrf.mxu0
        %v1658 = vadd.f32 %v1459, %v1657
        %v1659 = vpop.f32.mrf.mxu0
        %1660 = vdwg.mxu0
        %1661 = vmatpush.bf16.msra.mxu0 %v1614
        %1662 = vmatpush.bf16.msra.mxu0 %v1612
        %1663 = vmatpush.bf16.msra.mxu0 %v1610
        %1664 = vmatpush.bf16.msra.mxu0 %v1608
        %1665 = vmatpush.bf16.msra.mxu0 %v1606
        %1666 = vmatpush.bf16.msra.mxu0 %v1604
        %1667 = vmatpush.bf16.msra.mxu0 %v1602
        %1668 = vmatpush.bf16.msra.mxu0 %v1600
        %1669 = vmatmul.bf16.gmra.mxu0 %v1188
        %v1670 = vpop.f32.mrf.mxu0
        %v1671 = vadd.f32 %v1658, %v1670
        %v1672 = vpop.f32.mrf.mxu0
        %1673 = vdwg.mxu0
        %1674 = vmatpush.bf16.msra.mxu0 %v1599
        %1675 = vmatpush.bf16.msra.mxu0 %v1597
        %1676 = vmatpush.bf16.msra.mxu0 %v1595
        %1677 = vmatpush.bf16.msra.mxu0 %v1593
        %1678 = vmatpush.bf16.msra.mxu0 %v1591
        %1679 = vmatpush.bf16.msra.mxu0 %v1589
        %1680 = vmatpush.bf16.msra.mxu0 %v1587
        %1681 = vmatpush.bf16.msra.mxu0 %v1585
        %1682 = vmatmul.bf16.gmra.mxu0 %v1187
        %v1683 = vpop.f32.mrf.mxu0
        %v1684 = vadd.f32 %v1485, %v1683
        %v1685 = vpop.f32.mrf.mxu0
        %1686 = vdwg.mxu0
        %1687 = vmatpush.bf16.msra.mxu0 %v1615
        %1688 = vmatpush.bf16.msra.mxu0 %v1613
        %1689 = vmatpush.bf16.msra.mxu0 %v1611
        %1690 = vmatpush.bf16.msra.mxu0 %v1609
        %1691 = vmatpush.bf16.msra.mxu0 %v1607
        %1692 = vmatpush.bf16.msra.mxu0 %v1605
        %1693 = vmatpush.bf16.msra.mxu0 %v1603
        %1694 = vmatpush.bf16.msra.mxu0 %v1601
        %1695 = vmatmul.bf16.gmra.mxu0 %v1188
        %v1696 = vpop.f32.mrf.mxu0
        %v1697 = vadd.f32 %v1684, %v1696
        %v1698 = vpop.f32.mrf.mxu0
        %1699 = vdwg.mxu0
        %v1700 = vld [vmem:[#allocation3] sm:$0xfc]
        %v1701 = vld [vmem:[#allocation3 + $0x8] sm:$0xfc]
        %v1702 = vld [vmem:[#allocation3 + $0x10] sm:$0x3]
        %v1703 = vld [vmem:[#allocation3 + $0x18] sm:$0x3]
        %v1704 = vpack.c.bf16 %v1702, %v1700
        %v1705 = vpack.c.bf16 %v1703, %v1701
        %s1706 = scalar_lea.vmem [#allocation6], 512
        %v1707 = vld [vmem:[%s1706] sm:$0xff]
        %v1708 = vld [vmem:[%s1706 + $0x8] sm:$0xff]
        %v1709 = vld [vmem:[%s1706 + $0x10] sm:$0xff]
        %v1710 = vld [vmem:[%s1706 + $0x18] sm:$0xff]
        %v1711 = vld [vmem:[%s1706 + $0x20] sm:$0xff]
        %v1712 = vld [vmem:[%s1706 + $0x28] sm:$0xff]
        %v1713 = vld [vmem:[%s1706 + $0x30] sm:$0xff]
        %v1714 = vld [vmem:[%s1706 + $0x38] sm:$0xff]
        %v1715 = vld [vmem:[%s1706 + $0x40] sm:$0xff]
        %v1716 = vld [vmem:[%s1706 + $0x48] sm:$0xff]
        %v1717 = vld [vmem:[%s1706 + $0x50] sm:$0xff]
        %v1718 = vld [vmem:[%s1706 + $0x58] sm:$0xff]
        %v1719 = vld [vmem:[%s1706 + $0x60] sm:$0xff]
        %v1720 = vld [vmem:[%s1706 + $0x68] sm:$0xff]
        %v1721 = vld [vmem:[%s1706 + $0x70] sm:$0xff]
        %v1722 = vld [vmem:[%s1706 + $0x78] sm:$0xff]
        %v1723 = vld [vmem:[%s1706 + $0x80] sm:$0xff]
        %v1724 = vld [vmem:[%s1706 + $0x88] sm:$0xff]
        %v1725 = vld [vmem:[%s1706 + $0x90] sm:$0xff]
        %v1726 = vld [vmem:[%s1706 + $0x98] sm:$0xff]
        %v1727 = vld [vmem:[%s1706 + $0xa0] sm:$0xff]
        %v1728 = vld [vmem:[%s1706 + $0xa8] sm:$0xff]
        %v1729 = vld [vmem:[%s1706 + $0xb0] sm:$0xff]
        %v1730 = vld [vmem:[%s1706 + $0xb8] sm:$0xff]
        %v1731 = vld [vmem:[%s1706 + $0xc0] sm:$0xff]
        %v1732 = vld [vmem:[%s1706 + $0xc8] sm:$0xff]
        %v1733 = vld [vmem:[%s1706 + $0xd0] sm:$0xff]
        %v1734 = vld [vmem:[%s1706 + $0xd8] sm:$0xff]
        %v1735 = vld [vmem:[%s1706 + $0xe0] sm:$0xff]
        %v1736 = vld [vmem:[%s1706 + $0xe8] sm:$0xff]
        %v1737 = vld [vmem:[%s1706 + $0xf0] sm:$0xff]
        %v1738 = vld [vmem:[%s1706 + $0xf8] sm:$0xff]
        %v1741 = vrot.slane %v1704, 1
        %v1742 = vrot.slane %v1705, 1
        %v1777 = vunpack.c.l.b16 %v1707
        %v1778 = vunpack.c.h.b16 %v1707
        %v1779 = vunpack.c.l.b16 %v1708
        %v1780 = vunpack.c.h.b16 %v1708
        %v1781 = vunpack.c.l.b16 %v1709
        %v1782 = vunpack.c.h.b16 %v1709
        %v1783 = vunpack.c.l.b16 %v1710
        %v1784 = vunpack.c.h.b16 %v1710
        %v1785 = vunpack.c.l.b16 %v1711
        %v1786 = vunpack.c.h.b16 %v1711
        %v1787 = vunpack.c.l.b16 %v1712
        %v1788 = vunpack.c.h.b16 %v1712
        %v1789 = vunpack.c.l.b16 %v1713
        %v1790 = vunpack.c.h.b16 %v1713
        %v1791 = vunpack.c.l.b16 %v1714
        %v1792 = vunpack.c.h.b16 %v1714
        %v1793 = vunpack.c.l.b16 %v1715
        %v1794 = vunpack.c.h.b16 %v1715
        %v1795 = vunpack.c.l.b16 %v1716
        %v1796 = vunpack.c.h.b16 %v1716
        %v1797 = vunpack.c.l.b16 %v1717
        %v1798 = vunpack.c.h.b16 %v1717
        %v1799 = vunpack.c.l.b16 %v1718
        %v1800 = vunpack.c.h.b16 %v1718
        %v1801 = vunpack.c.l.b16 %v1719
        %v1802 = vunpack.c.h.b16 %v1719
        %v1803 = vunpack.c.l.b16 %v1720
        %v1804 = vunpack.c.h.b16 %v1720
        %v1805 = vunpack.c.l.b16 %v1721
        %v1806 = vunpack.c.h.b16 %v1721
        %v1807 = vunpack.c.l.b16 %v1722
        %v1808 = vunpack.c.h.b16 %v1722
        %v1809 = vunpack.c.l.b16 %v1723
        %v1810 = vunpack.c.h.b16 %v1723
        %v1811 = vunpack.c.l.b16 %v1724
        %v1812 = vunpack.c.h.b16 %v1724
        %v1813 = vunpack.c.l.b16 %v1725
        %v1814 = vunpack.c.h.b16 %v1725
        %v1815 = vunpack.c.l.b16 %v1726
        %v1816 = vunpack.c.h.b16 %v1726
        %v1817 = vunpack.c.l.b16 %v1727
        %v1818 = vunpack.c.h.b16 %v1727
        %v1819 = vunpack.c.l.b16 %v1728
        %v1820 = vunpack.c.h.b16 %v1728
        %v1821 = vunpack.c.l.b16 %v1729
        %v1822 = vunpack.c.h.b16 %v1729
        %v1823 = vunpack.c.l.b16 %v1730
        %v1824 = vunpack.c.h.b16 %v1730
        %v1825 = vunpack.c.l.b16 %v1731
        %v1826 = vunpack.c.h.b16 %v1731
        %v1827 = vunpack.c.l.b16 %v1732
        %v1828 = vunpack.c.h.b16 %v1732
        %v1829 = vunpack.c.l.b16 %v1733
        %v1830 = vunpack.c.h.b16 %v1733
        %v1831 = vunpack.c.l.b16 %v1734
        %v1832 = vunpack.c.h.b16 %v1734
        %v1833 = vunpack.c.l.b16 %v1735
        %v1834 = vunpack.c.h.b16 %v1735
        %v1835 = vunpack.c.l.b16 %v1736
        %v1836 = vunpack.c.h.b16 %v1736
        %v1837 = vunpack.c.l.b16 %v1737
        %v1838 = vunpack.c.h.b16 %v1737
        %v1839 = vunpack.c.l.b16 %v1738
        %v1840 = vunpack.c.h.b16 %v1738
        %v1841 = vpack.c.b16 %v1779, %v1777
        %v1842 = vpack.c.b16 %v1780, %v1778
        %v1843 = vpack.c.b16 %v1783, %v1781
        %v1844 = vpack.c.b16 %v1784, %v1782
        %v1845 = vpack.c.b16 %v1787, %v1785
        %v1846 = vpack.c.b16 %v1788, %v1786
        %v1847 = vpack.c.b16 %v1791, %v1789
        %v1848 = vpack.c.b16 %v1792, %v1790
        %v1849 = vpack.c.b16 %v1795, %v1793
        %v1850 = vpack.c.b16 %v1796, %v1794
        %v1851 = vpack.c.b16 %v1799, %v1797
        %v1852 = vpack.c.b16 %v1800, %v1798
        %v1853 = vpack.c.b16 %v1803, %v1801
        %v1854 = vpack.c.b16 %v1804, %v1802
        %v1855 = vpack.c.b16 %v1807, %v1805
        %v1856 = vpack.c.b16 %v1808, %v1806
        %v1857 = vpack.c.b16 %v1811, %v1809
        %v1858 = vpack.c.b16 %v1812, %v1810
        %v1859 = vpack.c.b16 %v1815, %v1813
        %v1860 = vpack.c.b16 %v1816, %v1814
        %v1861 = vpack.c.b16 %v1819, %v1817
        %v1862 = vpack.c.b16 %v1820, %v1818
        %v1863 = vpack.c.b16 %v1823, %v1821
        %v1864 = vpack.c.b16 %v1824, %v1822
        %v1865 = vpack.c.b16 %v1827, %v1825
        %v1866 = vpack.c.b16 %v1828, %v1826
        %v1867 = vpack.c.b16 %v1831, %v1829
        %v1868 = vpack.c.b16 %v1832, %v1830
        %v1869 = vpack.c.b16 %v1835, %v1833
        %v1870 = vpack.c.b16 %v1836, %v1834
        %v1871 = vpack.c.b16 %v1839, %v1837
        %v1872 = vpack.c.b16 %v1840, %v1838
        %1905 = vmatpush.bf16.msra.mxu0 %v1855
        %1906 = vmatpush.bf16.msra.mxu0 %v1853
        %1907 = vmatpush.bf16.msra.mxu0 %v1851
        %1908 = vmatpush.bf16.msra.mxu0 %v1849
        %1909 = vmatpush.bf16.msra.mxu0 %v1847
        %1910 = vmatpush.bf16.msra.mxu0 %v1845
        %1911 = vmatpush.bf16.msra.mxu0 %v1843
        %1912 = vmatpush.bf16.msra.mxu0 %v1841
        %1913 = vmatmul.bf16.gmra.mxu0 %v1741
        %v1914 = vpop.f32.mrf.mxu0
        %v1915 = vadd.f32 0.0, %v1914
        %v1916 = vpop.f32.mrf.mxu0
        %1917 = vdwg.mxu0
        %1918 = vmatpush.bf16.msra.mxu0 %v1871
        %1919 = vmatpush.bf16.msra.mxu0 %v1869
        %1920 = vmatpush.bf16.msra.mxu0 %v1867
        %1921 = vmatpush.bf16.msra.mxu0 %v1865
        %1922 = vmatpush.bf16.msra.mxu0 %v1863
        %1923 = vmatpush.bf16.msra.mxu0 %v1861
        %1924 = vmatpush.bf16.msra.mxu0 %v1859
        %1925 = vmatpush.bf16.msra.mxu0 %v1857
        %1926 = vmatmul.bf16.gmra.mxu0 %v1742
        %v1927 = vpop.f32.mrf.mxu0
        %v1928 = vadd.f32 %v1915, %v1927
        %v1929 = vpop.f32.mrf.mxu0
        %1930 = vdwg.mxu0
        %1931 = vmatpush.bf16.msra.mxu0 %v1856
        %1932 = vmatpush.bf16.msra.mxu0 %v1854
        %1933 = vmatpush.bf16.msra.mxu0 %v1852
        %1934 = vmatpush.bf16.msra.mxu0 %v1850
        %1935 = vmatpush.bf16.msra.mxu0 %v1848
        %1936 = vmatpush.bf16.msra.mxu0 %v1846
        %1937 = vmatpush.bf16.msra.mxu0 %v1844
        %1938 = vmatpush.bf16.msra.mxu0 %v1842
        %1939 = vmatmul.bf16.gmra.mxu0 %v1741
        %v1940 = vpop.f32.mrf.mxu0
        %v1941 = vadd.f32 0.0, %v1940
        %v1942 = vpop.f32.mrf.mxu0
        %1943 = vdwg.mxu0
        %1944 = vmatpush.bf16.msra.mxu0 %v1872
        %1945 = vmatpush.bf16.msra.mxu0 %v1870
        %1946 = vmatpush.bf16.msra.mxu0 %v1868
        %1947 = vmatpush.bf16.msra.mxu0 %v1866
        %1948 = vmatpush.bf16.msra.mxu0 %v1864
        %1949 = vmatpush.bf16.msra.mxu0 %v1862
        %1950 = vmatpush.bf16.msra.mxu0 %v1860
        %1951 = vmatpush.bf16.msra.mxu0 %v1858
        %1952 = vmatmul.bf16.gmra.mxu0 %v1742
        %v1953 = vpop.f32.mrf.mxu0
        %v1954 = vadd.f32 %v1941, %v1953
        %v1955 = vpop.f32.mrf.mxu0
        %1956 = vdwg.mxu0
        %v1957 = vadd.f32 %v1671, %v1928
        %v1958 = vadd.f32 %v1697, %v1954
        %v1959 = vld [vmem:[%s4] sm:$0x3]
        %v1961 = vperm.slane %v1959, 0
        %v1962 = vperm.slane %v1959, 1
        %v1965 = vadd.f32 %v1957, %v1961
        %v1966 = vadd.f32 %v1958, %v1962
        %v1967 = vmax.f32 %v1965, 0.0
        %v1968 = vmax.f32 %v1966, 0.0
        %v1969 = vmax.f32 %v1967, %v1968
        %v1971 = vrot.slane %v1969, 1
        %v1973 = vmax.f32 %v1969, %v1971
        %v1975 = vrot.slane %v1973, 1
        %v1977 = vrot.slane %v1973, 2
        %v1979 = vrot.slane %v1973, 3
        %v1981 = vsel %vm1145, %v1973, %v1975
        %v1982 = vsel %vm1148, %v1981, %v1977
        %v1983 = vsel %vm1151, %v1982, %v1979
        %1984 = vst [vmem:[#allocation4] sm:$0x1] 0.0
        %1985 = vst [vmem:[#allocation4 + $0x5] sm:$0x1] 0.0
        %1986 = vst [vmem:[#allocation4 + $0x1] sm:$0xf] %v1983
        %v1987 = vld [vmem:[#allocation4] sm:$0xf]
        %v1988 = vpack.c.bf16 %v1987, %v1987
        %v1989 = vld [vmem:[#allocation8] sm:$0xff]
        %v1990 = vld [vmem:[#allocation8 + $0x8] sm:$0xff]
        %v1991 = vld [vmem:[#allocation8 + $0x10] sm:$0xff]
        %v1992 = vld [vmem:[#allocation8 + $0x18] sm:$0xff]
        %v1993 = vld [vmem:[#allocation8 + $0x20] sm:$0xff]
        %v1994 = vld [vmem:[#allocation8 + $0x28] sm:$0xff]
        %v1995 = vld [vmem:[#allocation8 + $0x30] sm:$0xff]
        %v1996 = vld [vmem:[#allocation8 + $0x38] sm:$0xff]
        %v1997 = vld [vmem:[#allocation8 + $0x40] sm:$0xff]
        %v1998 = vld [vmem:[#allocation8 + $0x48] sm:$0xff]
        %v1999 = vld [vmem:[#allocation8 + $0x50] sm:$0xff]
        %v2000 = vld [vmem:[#allocation8 + $0x58] sm:$0xff]
        %v2001 = vld [vmem:[#allocation8 + $0x60] sm:$0xff]
        %v2002 = vld [vmem:[#allocation8 + $0x68] sm:$0xff]
        %v2003 = vld [vmem:[#allocation8 + $0x70] sm:$0xff]
        %v2004 = vld [vmem:[#allocation8 + $0x78] sm:$0xff]
        %v2005 = vld [vmem:[#allocation4 + $0x1] sm:$0xf]
        %v2006 = vpack.c.bf16 %v2005, %v2005
        %s2007 = scalar_lea.vmem [#allocation8], 128
        %v2008 = vld [vmem:[%s2007] sm:$0xff]
        %v2009 = vld [vmem:[%s2007 + $0x8] sm:$0xff]
        %v2010 = vld [vmem:[%s2007 + $0x10] sm:$0xff]
        %v2011 = vld [vmem:[%s2007 + $0x18] sm:$0xff]
        %v2012 = vld [vmem:[%s2007 + $0x20] sm:$0xff]
        %v2013 = vld [vmem:[%s2007 + $0x28] sm:$0xff]
        %v2014 = vld [vmem:[%s2007 + $0x30] sm:$0xff]
        %v2015 = vld [vmem:[%s2007 + $0x38] sm:$0xff]
        %v2016 = vld [vmem:[%s2007 + $0x40] sm:$0xff]
        %v2017 = vld [vmem:[%s2007 + $0x48] sm:$0xff]
        %v2018 = vld [vmem:[%s2007 + $0x50] sm:$0xff]
        %v2019 = vld [vmem:[%s2007 + $0x58] sm:$0xff]
        %v2020 = vld [vmem:[%s2007 + $0x60] sm:$0xff]
        %v2021 = vld [vmem:[%s2007 + $0x68] sm:$0xff]
        %v2022 = vld [vmem:[%s2007 + $0x70] sm:$0xff]
        %v2023 = vld [vmem:[%s2007 + $0x78] sm:$0xff]
        %v2040 = vunpack.c.l.b16 %v2008
        %v2041 = vunpack.c.h.b16 %v2008
        %v2042 = vunpack.c.l.b16 %v2009
        %v2043 = vunpack.c.h.b16 %v2009
        %v2044 = vunpack.c.l.b16 %v2010
        %v2045 = vunpack.c.h.b16 %v2010
        %v2046 = vunpack.c.l.b16 %v2011
        %v2047 = vunpack.c.h.b16 %v2011
        %v2048 = vunpack.c.l.b16 %v2012
        %v2049 = vunpack.c.h.b16 %v2012
        %v2050 = vunpack.c.l.b16 %v2013
        %v2051 = vunpack.c.h.b16 %v2013
        %v2052 = vunpack.c.l.b16 %v2014
        %v2053 = vunpack.c.h.b16 %v2014
        %v2054 = vunpack.c.l.b16 %v2015
        %v2055 = vunpack.c.h.b16 %v2015
        %v2056 = vunpack.c.l.b16 %v2016
        %v2057 = vunpack.c.h.b16 %v2016
        %v2058 = vunpack.c.l.b16 %v2017
        %v2059 = vunpack.c.h.b16 %v2017
        %v2060 = vunpack.c.l.b16 %v2018
        %v2061 = vunpack.c.h.b16 %v2018
        %v2062 = vunpack.c.l.b16 %v2019
        %v2063 = vunpack.c.h.b16 %v2019
        %v2064 = vunpack.c.l.b16 %v2020
        %v2065 = vunpack.c.h.b16 %v2020
        %v2066 = vunpack.c.l.b16 %v2021
        %v2067 = vunpack.c.h.b16 %v2021
        %v2068 = vunpack.c.l.b16 %v2022
        %v2069 = vunpack.c.h.b16 %v2022
        %v2070 = vunpack.c.l.b16 %v2023
        %v2071 = vunpack.c.h.b16 %v2023
        %v2072 = vpack.c.b16 %v2042, %v2040
        %v2073 = vpack.c.b16 %v2043, %v2041
        %v2074 = vpack.c.b16 %v2046, %v2044
        %v2075 = vpack.c.b16 %v2047, %v2045
        %v2076 = vpack.c.b16 %v2050, %v2048
        %v2077 = vpack.c.b16 %v2051, %v2049
        %v2078 = vpack.c.b16 %v2054, %v2052
        %v2079 = vpack.c.b16 %v2055, %v2053
        %v2080 = vpack.c.b16 %v2058, %v2056
        %v2081 = vpack.c.b16 %v2059, %v2057
        %v2082 = vpack.c.b16 %v2062, %v2060
        %v2083 = vpack.c.b16 %v2063, %v2061
        %v2084 = vpack.c.b16 %v2066, %v2064
        %v2085 = vpack.c.b16 %v2067, %v2065
        %v2086 = vpack.c.b16 %v2070, %v2068
        %v2087 = vpack.c.b16 %v2071, %v2069
        %2104 = vmatpush.bf16.msra.mxu0 %v2086
        %2105 = vmatpush.bf16.msra.mxu0 %v2084
        %2106 = vmatpush.bf16.msra.mxu0 %v2082
        %2107 = vmatpush.bf16.msra.mxu0 %v2080
        %2108 = vmatpush.bf16.msra.mxu0 %v2078
        %2109 = vmatpush.bf16.msra.mxu0 %v2076
        %2110 = vmatpush.bf16.msra.mxu0 %v2074
        %2111 = vmatpush.bf16.msra.mxu0 %v2072
        %2112 = vmatmul.bf16.gmra.mxu0 %v2006
        %v2113 = vpop.f32.mrf.mxu0
        %v2114 = vadd.f32 0.0, %v2113
        %v2115 = vpop.f32.mrf.mxu0
        %2116 = vdwg.mxu0
        %2117 = vmatpush.bf16.msra.mxu0 %v2087
        %2118 = vmatpush.bf16.msra.mxu0 %v2085
        %2119 = vmatpush.bf16.msra.mxu0 %v2083
        %2120 = vmatpush.bf16.msra.mxu0 %v2081
        %2121 = vmatpush.bf16.msra.mxu0 %v2079
        %2122 = vmatpush.bf16.msra.mxu0 %v2077
        %2123 = vmatpush.bf16.msra.mxu0 %v2075
        %2124 = vmatpush.bf16.msra.mxu0 %v2073
        %2125 = vmatmul.bf16.gmra.mxu0 %v2006
        %v2126 = vpop.f32.mrf.mxu0
        %v2127 = vadd.f32 0.0, %v2126
        %v2128 = vpop.f32.mrf.mxu0
        %2129 = vdwg.mxu0
        %v2146 = vunpack.c.l.b16 %v1989
        %v2147 = vunpack.c.h.b16 %v1989
        %v2148 = vunpack.c.l.b16 %v1990
        %v2149 = vunpack.c.h.b16 %v1990
        %v2150 = vunpack.c.l.b16 %v1991
        %v2151 = vunpack.c.h.b16 %v1991
        %v2152 = vunpack.c.l.b16 %v1992
        %v2153 = vunpack.c.h.b16 %v1992
        %v2154 = vunpack.c.l.b16 %v1993
        %v2155 = vunpack.c.h.b16 %v1993
        %v2156 = vunpack.c.l.b16 %v1994
        %v2157 = vunpack.c.h.b16 %v1994
        %v2158 = vunpack.c.l.b16 %v1995
        %v2159 = vunpack.c.h.b16 %v1995
        %v2160 = vunpack.c.l.b16 %v1996
        %v2161 = vunpack.c.h.b16 %v1996
        %v2162 = vunpack.c.l.b16 %v1997
        %v2163 = vunpack.c.h.b16 %v1997
        %v2164 = vunpack.c.l.b16 %v1998
        %v2165 = vunpack.c.h.b16 %v1998
        %v2166 = vunpack.c.l.b16 %v1999
        %v2167 = vunpack.c.h.b16 %v1999
        %v2168 = vunpack.c.l.b16 %v2000
        %v2169 = vunpack.c.h.b16 %v2000
        %v2170 = vunpack.c.l.b16 %v2001
        %v2171 = vunpack.c.h.b16 %v2001
        %v2172 = vunpack.c.l.b16 %v2002
        %v2173 = vunpack.c.h.b16 %v2002
        %v2174 = vunpack.c.l.b16 %v2003
        %v2175 = vunpack.c.h.b16 %v2003
        %v2176 = vunpack.c.l.b16 %v2004
        %v2177 = vunpack.c.h.b16 %v2004
        %v2178 = vpack.c.b16 %v2148, %v2146
        %v2179 = vpack.c.b16 %v2149, %v2147
        %v2180 = vpack.c.b16 %v2152, %v2150
        %v2181 = vpack.c.b16 %v2153, %v2151
        %v2182 = vpack.c.b16 %v2156, %v2154
        %v2183 = vpack.c.b16 %v2157, %v2155
        %v2184 = vpack.c.b16 %v2160, %v2158
        %v2185 = vpack.c.b16 %v2161, %v2159
        %v2186 = vpack.c.b16 %v2164, %v2162
        %v2187 = vpack.c.b16 %v2165, %v2163
        %v2188 = vpack.c.b16 %v2168, %v2166
        %v2189 = vpack.c.b16 %v2169, %v2167
        %v2190 = vpack.c.b16 %v2172, %v2170
        %v2191 = vpack.c.b16 %v2173, %v2171
        %v2192 = vpack.c.b16 %v2176, %v2174
        %v2193 = vpack.c.b16 %v2177, %v2175
        %2210 = vmatpush.bf16.msra.mxu0 %v2192
        %2211 = vmatpush.bf16.msra.mxu0 %v2190
        %2212 = vmatpush.bf16.msra.mxu0 %v2188
        %2213 = vmatpush.bf16.msra.mxu0 %v2186
        %2214 = vmatpush.bf16.msra.mxu0 %v2184
        %2215 = vmatpush.bf16.msra.mxu0 %v2182
        %2216 = vmatpush.bf16.msra.mxu0 %v2180
        %2217 = vmatpush.bf16.msra.mxu0 %v2178
        %2218 = vmatmul.bf16.gmra.mxu0 %v1988
        %v2219 = vpop.f32.mrf.mxu0
        %v2220 = vadd.f32 %v2114, %v2219
        %v2221 = vpop.f32.mrf.mxu0
        %2222 = vdwg.mxu0
        %2223 = vmatpush.bf16.msra.mxu0 %v2193
        %2224 = vmatpush.bf16.msra.mxu0 %v2191
        %2225 = vmatpush.bf16.msra.mxu0 %v2189
        %2226 = vmatpush.bf16.msra.mxu0 %v2187
        %2227 = vmatpush.bf16.msra.mxu0 %v2185
        %2228 = vmatpush.bf16.msra.mxu0 %v2183
        %2229 = vmatpush.bf16.msra.mxu0 %v2181
        %2230 = vmatpush.bf16.msra.mxu0 %v2179
        %2231 = vmatmul.bf16.gmra.mxu0 %v1988
        %v2232 = vpop.f32.mrf.mxu0
        %v2233 = vadd.f32 %v2127, %v2232
        %v2234 = vpop.f32.mrf.mxu0
        %2235 = vdwg.mxu0
        %v2236 = vld [vmem:[#allocation4 + $0x2] sm:$0xf]
        %v2237 = vpack.c.bf16 %v2236, %v2236
        %s2238 = scalar_lea.vmem [#allocation8], 256
        %v2239 = vld [vmem:[%s2238] sm:$0xff]
        %v2240 = vld [vmem:[%s2238 + $0x8] sm:$0xff]
        %v2241 = vld [vmem:[%s2238 + $0x10] sm:$0xff]
        %v2242 = vld [vmem:[%s2238 + $0x18] sm:$0xff]
        %v2243 = vld [vmem:[%s2238 + $0x20] sm:$0xff]
        %v2244 = vld [vmem:[%s2238 + $0x28] sm:$0xff]
        %v2245 = vld [vmem:[%s2238 + $0x30] sm:$0xff]
        %v2246 = vld [vmem:[%s2238 + $0x38] sm:$0xff]
        %v2247 = vld [vmem:[%s2238 + $0x40] sm:$0xff]
        %v2248 = vld [vmem:[%s2238 + $0x48] sm:$0xff]
        %v2249 = vld [vmem:[%s2238 + $0x50] sm:$0xff]
        %v2250 = vld [vmem:[%s2238 + $0x58] sm:$0xff]
        %v2251 = vld [vmem:[%s2238 + $0x60] sm:$0xff]
        %v2252 = vld [vmem:[%s2238 + $0x68] sm:$0xff]
        %v2253 = vld [vmem:[%s2238 + $0x70] sm:$0xff]
        %v2254 = vld [vmem:[%s2238 + $0x78] sm:$0xff]
        %v2271 = vunpack.c.l.b16 %v2239
        %v2272 = vunpack.c.h.b16 %v2239
        %v2273 = vunpack.c.l.b16 %v2240
        %v2274 = vunpack.c.h.b16 %v2240
        %v2275 = vunpack.c.l.b16 %v2241
        %v2276 = vunpack.c.h.b16 %v2241
        %v2277 = vunpack.c.l.b16 %v2242
        %v2278 = vunpack.c.h.b16 %v2242
        %v2279 = vunpack.c.l.b16 %v2243
        %v2280 = vunpack.c.h.b16 %v2243
        %v2281 = vunpack.c.l.b16 %v2244
        %v2282 = vunpack.c.h.b16 %v2244
        %v2283 = vunpack.c.l.b16 %v2245
        %v2284 = vunpack.c.h.b16 %v2245
        %v2285 = vunpack.c.l.b16 %v2246
        %v2286 = vunpack.c.h.b16 %v2246
        %v2287 = vunpack.c.l.b16 %v2247
        %v2288 = vunpack.c.h.b16 %v2247
        %v2289 = vunpack.c.l.b16 %v2248
        %v2290 = vunpack.c.h.b16 %v2248
        %v2291 = vunpack.c.l.b16 %v2249
        %v2292 = vunpack.c.h.b16 %v2249
        %v2293 = vunpack.c.l.b16 %v2250
        %v2294 = vunpack.c.h.b16 %v2250
        %v2295 = vunpack.c.l.b16 %v2251
        %v2296 = vunpack.c.h.b16 %v2251
        %v2297 = vunpack.c.l.b16 %v2252
        %v2298 = vunpack.c.h.b16 %v2252
        %v2299 = vunpack.c.l.b16 %v2253
        %v2300 = vunpack.c.h.b16 %v2253
        %v2301 = vunpack.c.l.b16 %v2254
        %v2302 = vunpack.c.h.b16 %v2254
        %v2303 = vpack.c.b16 %v2273, %v2271
        %v2304 = vpack.c.b16 %v2274, %v2272
        %v2305 = vpack.c.b16 %v2277, %v2275
        %v2306 = vpack.c.b16 %v2278, %v2276
        %v2307 = vpack.c.b16 %v2281, %v2279
        %v2308 = vpack.c.b16 %v2282, %v2280
        %v2309 = vpack.c.b16 %v2285, %v2283
        %v2310 = vpack.c.b16 %v2286, %v2284
        %v2311 = vpack.c.b16 %v2289, %v2287
        %v2312 = vpack.c.b16 %v2290, %v2288
        %v2313 = vpack.c.b16 %v2293, %v2291
        %v2314 = vpack.c.b16 %v2294, %v2292
        %v2315 = vpack.c.b16 %v2297, %v2295
        %v2316 = vpack.c.b16 %v2298, %v2296
        %v2317 = vpack.c.b16 %v2301, %v2299
        %v2318 = vpack.c.b16 %v2302, %v2300
        %2335 = vmatpush.bf16.msra.mxu0 %v2317
        %2336 = vmatpush.bf16.msra.mxu0 %v2315
        %2337 = vmatpush.bf16.msra.mxu0 %v2313
        %2338 = vmatpush.bf16.msra.mxu0 %v2311
        %2339 = vmatpush.bf16.msra.mxu0 %v2309
        %2340 = vmatpush.bf16.msra.mxu0 %v2307
        %2341 = vmatpush.bf16.msra.mxu0 %v2305
        %2342 = vmatpush.bf16.msra.mxu0 %v2303
        %2343 = vmatmul.bf16.gmra.mxu0 %v2237
        %v2344 = vpop.f32.mrf.mxu0
        %v2345 = vadd.f32 0.0, %v2344
        %v2346 = vpop.f32.mrf.mxu0
        %2347 = vdwg.mxu0
        %2348 = vmatpush.bf16.msra.mxu0 %v2318
        %2349 = vmatpush.bf16.msra.mxu0 %v2316
        %2350 = vmatpush.bf16.msra.mxu0 %v2314
        %2351 = vmatpush.bf16.msra.mxu0 %v2312
        %2352 = vmatpush.bf16.msra.mxu0 %v2310
        %2353 = vmatpush.bf16.msra.mxu0 %v2308
        %2354 = vmatpush.bf16.msra.mxu0 %v2306
        %2355 = vmatpush.bf16.msra.mxu0 %v2304
        %2356 = vmatmul.bf16.gmra.mxu0 %v2237
        %v2357 = vpop.f32.mrf.mxu0
        %v2358 = vadd.f32 0.0, %v2357
        %v2359 = vpop.f32.mrf.mxu0
        %2360 = vdwg.mxu0
        %v2361 = vadd.f32 %v2220, %v2345
        %v2362 = vadd.f32 %v2233, %v2358
        %v2363 = vld [vmem:[%s6] sm:$0x3]
        %v2365 = vperm.slane %v2363, 0
        %v2366 = vperm.slane %v2363, 1
        %v2369 = vadd.f32 %v2361, %v2365
        %v2370 = vadd.f32 %v2362, %v2366
        %v2371 = vmax.f32 %v2369, 0.0
        %v2372 = vmax.f32 %v2370, 0.0
        %v2373 = vmax.f32 %v2371, %v2372
        %v2375 = vrot.slane %v2373, 1
        %v2377 = vmax.f32 %v2373, %v2375
        %v2379 = vrot.slane %v2377, 1
        %v2381 = vsel %vm1145, %v2377, %v2379
        %2382 = vst [vmem:[#allocation5] sm:$0x1] 0.0
        %2383 = vst [vmem:[#allocation5 + $0x3] sm:$0x1] 0.0
        %2384 = vst [vmem:[#allocation5 + $0x1] sm:$0x3] %v2381
        %v2385 = vld [vmem:[#allocation5] sm:$0x3]
        %v2386 = vpack.c.bf16 %v2385, %v2385
        %v2387 = vld [vmem:[#allocation10] sm:$0xf]
        %v2388 = vld [vmem:[#allocation10 + $0x4] sm:$0xf]
        %v2389 = vld [vmem:[#allocation10 + $0x8] sm:$0xf]
        %v2390 = vld [vmem:[#allocation10 + $0xc] sm:$0xf]
        %v2391 = vld [vmem:[#allocation10 + $0x10] sm:$0xf]
        %v2392 = vld [vmem:[#allocation10 + $0x14] sm:$0xf]
        %v2393 = vld [vmem:[#allocation10 + $0x18] sm:$0xf]
        %v2394 = vld [vmem:[#allocation10 + $0x1c] sm:$0xf]
        %v2395 = vld [vmem:[#allocation10 + $0x20] sm:$0xf]
        %v2396 = vld [vmem:[#allocation10 + $0x24] sm:$0xf]
        %v2397 = vld [vmem:[#allocation10 + $0x28] sm:$0xf]
        %v2398 = vld [vmem:[#allocation10 + $0x2c] sm:$0xf]
        %v2399 = vld [vmem:[#allocation10 + $0x30] sm:$0xf]
        %v2400 = vld [vmem:[#allocation10 + $0x34] sm:$0xf]
        %v2401 = vld [vmem:[#allocation10 + $0x38] sm:$0xf]
        %v2402 = vld [vmem:[#allocation10 + $0x3c] sm:$0xf]
        %v2403 = vld [vmem:[#allocation5 + $0x1] sm:$0x3]
        %v2404 = vpack.c.bf16 %v2403, %v2403
        %s2405 = scalar_lea.vmem [#allocation10], 64
        %v2406 = vld [vmem:[%s2405] sm:$0xf]
        %v2407 = vld [vmem:[%s2405 + $0x4] sm:$0xf]
        %v2408 = vld [vmem:[%s2405 + $0x8] sm:$0xf]
        %v2409 = vld [vmem:[%s2405 + $0xc] sm:$0xf]
        %v2410 = vld [vmem:[%s2405 + $0x10] sm:$0xf]
        %v2411 = vld [vmem:[%s2405 + $0x14] sm:$0xf]
        %v2412 = vld [vmem:[%s2405 + $0x18] sm:$0xf]
        %v2413 = vld [vmem:[%s2405 + $0x1c] sm:$0xf]
        %v2414 = vld [vmem:[%s2405 + $0x20] sm:$0xf]
        %v2415 = vld [vmem:[%s2405 + $0x24] sm:$0xf]
        %v2416 = vld [vmem:[%s2405 + $0x28] sm:$0xf]
        %v2417 = vld [vmem:[%s2405 + $0x2c] sm:$0xf]
        %v2418 = vld [vmem:[%s2405 + $0x30] sm:$0xf]
        %v2419 = vld [vmem:[%s2405 + $0x34] sm:$0xf]
        %v2420 = vld [vmem:[%s2405 + $0x38] sm:$0xf]
        %v2421 = vld [vmem:[%s2405 + $0x3c] sm:$0xf]
        %v2438 = vunpack.c.l.b16 %v2406
        %v2439 = vunpack.c.l.b16 %v2407
        %v2440 = vunpack.c.l.b16 %v2408
        %v2441 = vunpack.c.l.b16 %v2409
        %v2442 = vunpack.c.l.b16 %v2410
        %v2443 = vunpack.c.l.b16 %v2411
        %v2444 = vunpack.c.l.b16 %v2412
        %v2445 = vunpack.c.l.b16 %v2413
        %v2446 = vunpack.c.l.b16 %v2414
        %v2447 = vunpack.c.l.b16 %v2415
        %v2448 = vunpack.c.l.b16 %v2416
        %v2449 = vunpack.c.l.b16 %v2417
        %v2450 = vunpack.c.l.b16 %v2418
        %v2451 = vunpack.c.l.b16 %v2419
        %v2452 = vunpack.c.l.b16 %v2420
        %v2453 = vunpack.c.l.b16 %v2421
        %v2454 = vpack.c.b16 %v2439, %v2438
        %v2455 = vpack.c.b16 %v2441, %v2440
        %v2456 = vpack.c.b16 %v2443, %v2442
        %v2457 = vpack.c.b16 %v2445, %v2444
        %v2458 = vpack.c.b16 %v2447, %v2446
        %v2459 = vpack.c.b16 %v2449, %v2448
        %v2460 = vpack.c.b16 %v2451, %v2450
        %v2461 = vpack.c.b16 %v2453, %v2452
        %2470 = vmatpush.bf16.msra.mxu0 %v2461
        %2471 = vmatpush.bf16.msra.mxu0 %v2460
        %2472 = vmatpush.bf16.msra.mxu0 %v2459
        %2473 = vmatpush.bf16.msra.mxu0 %v2458
        %2474 = vmatpush.bf16.msra.mxu0 %v2457
        %2475 = vmatpush.bf16.msra.mxu0 %v2456
        %2476 = vmatpush.bf16.msra.mxu0 %v2455
        %2477 = vmatpush.bf16.msra.mxu0 %v2454
        %2478 = vmatmul.bf16.gmra.mxu0 %v2404
        %v2479 = vpop.f32.mrf.mxu0
        %v2480 = vadd.f32 0.0, %v2479
        %v2481 = vpop.f32.mrf.mxu0
        %2482 = vdwg.mxu0
        %v2499 = vunpack.c.l.b16 %v2387
        %v2500 = vunpack.c.l.b16 %v2388
        %v2501 = vunpack.c.l.b16 %v2389
        %v2502 = vunpack.c.l.b16 %v2390
        %v2503 = vunpack.c.l.b16 %v2391
        %v2504 = vunpack.c.l.b16 %v2392
        %v2505 = vunpack.c.l.b16 %v2393
        %v2506 = vunpack.c.l.b16 %v2394
        %v2507 = vunpack.c.l.b16 %v2395
        %v2508 = vunpack.c.l.b16 %v2396
        %v2509 = vunpack.c.l.b16 %v2397
        %v2510 = vunpack.c.l.b16 %v2398
        %v2511 = vunpack.c.l.b16 %v2399
        %v2512 = vunpack.c.l.b16 %v2400
        %v2513 = vunpack.c.l.b16 %v2401
        %v2514 = vunpack.c.l.b16 %v2402
        %v2515 = vpack.c.b16 %v2500, %v2499
        %v2516 = vpack.c.b16 %v2502, %v2501
        %v2517 = vpack.c.b16 %v2504, %v2503
        %v2518 = vpack.c.b16 %v2506, %v2505
        %v2519 = vpack.c.b16 %v2508, %v2507
        %v2520 = vpack.c.b16 %v2510, %v2509
        %v2521 = vpack.c.b16 %v2512, %v2511
        %v2522 = vpack.c.b16 %v2514, %v2513
        %2531 = vmatpush.bf16.msra.mxu0 %v2522
        %2532 = vmatpush.bf16.msra.mxu0 %v2521
        %2533 = vmatpush.bf16.msra.mxu0 %v2520
        %2534 = vmatpush.bf16.msra.mxu0 %v2519
        %2535 = vmatpush.bf16.msra.mxu0 %v2518
        %2536 = vmatpush.bf16.msra.mxu0 %v2517
        %2537 = vmatpush.bf16.msra.mxu0 %v2516
        %2538 = vmatpush.bf16.msra.mxu0 %v2515
        %2539 = vmatmul.bf16.gmra.mxu0 %v2386
        %v2540 = vpop.f32.mrf.mxu0
        %v2541 = vadd.f32 %v2480, %v2540
        %v2542 = vpop.f32.mrf.mxu0
        %2543 = vdwg.mxu0
        %v2544 = vld [vmem:[#allocation5 + $0x2] sm:$0x3]
        %v2545 = vpack.c.bf16 %v2544, %v2544
        %s2546 = scalar_lea.vmem [#allocation10], 128
        %v2547 = vld [vmem:[%s2546] sm:$0xf]
        %v2548 = vld [vmem:[%s2546 + $0x4] sm:$0xf]
        %v2549 = vld [vmem:[%s2546 + $0x8] sm:$0xf]
        %v2550 = vld [vmem:[%s2546 + $0xc] sm:$0xf]
        %v2551 = vld [vmem:[%s2546 + $0x10] sm:$0xf]
        %v2552 = vld [vmem:[%s2546 + $0x14] sm:$0xf]
        %v2553 = vld [vmem:[%s2546 + $0x18] sm:$0xf]
        %v2554 = vld [vmem:[%s2546 + $0x1c] sm:$0xf]
        %v2555 = vld [vmem:[%s2546 + $0x20] sm:$0xf]
        %v2556 = vld [vmem:[%s2546 + $0x24] sm:$0xf]
        %v2557 = vld [vmem:[%s2546 + $0x28] sm:$0xf]
        %v2558 = vld [vmem:[%s2546 + $0x2c] sm:$0xf]
        %v2559 = vld [vmem:[%s2546 + $0x30] sm:$0xf]
        %v2560 = vld [vmem:[%s2546 + $0x34] sm:$0xf]
        %v2561 = vld [vmem:[%s2546 + $0x38] sm:$0xf]
        %v2562 = vld [vmem:[%s2546 + $0x3c] sm:$0xf]
        %v2579 = vunpack.c.l.b16 %v2547
        %v2580 = vunpack.c.l.b16 %v2548
        %v2581 = vunpack.c.l.b16 %v2549
        %v2582 = vunpack.c.l.b16 %v2550
        %v2583 = vunpack.c.l.b16 %v2551
        %v2584 = vunpack.c.l.b16 %v2552
        %v2585 = vunpack.c.l.b16 %v2553
        %v2586 = vunpack.c.l.b16 %v2554
        %v2587 = vunpack.c.l.b16 %v2555
        %v2588 = vunpack.c.l.b16 %v2556
        %v2589 = vunpack.c.l.b16 %v2557
        %v2590 = vunpack.c.l.b16 %v2558
        %v2591 = vunpack.c.l.b16 %v2559
        %v2592 = vunpack.c.l.b16 %v2560
        %v2593 = vunpack.c.l.b16 %v2561
        %v2594 = vunpack.c.l.b16 %v2562
        %v2595 = vpack.c.b16 %v2580, %v2579
        %v2596 = vpack.c.b16 %v2582, %v2581
        %v2597 = vpack.c.b16 %v2584, %v2583
        %v2598 = vpack.c.b16 %v2586, %v2585
        %v2599 = vpack.c.b16 %v2588, %v2587
        %v2600 = vpack.c.b16 %v2590, %v2589
        %v2601 = vpack.c.b16 %v2592, %v2591
        %v2602 = vpack.c.b16 %v2594, %v2593
        %2611 = vmatpush.bf16.msra.mxu0 %v2602
        %2612 = vmatpush.bf16.msra.mxu0 %v2601
        %2613 = vmatpush.bf16.msra.mxu0 %v2600
        %2614 = vmatpush.bf16.msra.mxu0 %v2599
        %2615 = vmatpush.bf16.msra.mxu0 %v2598
        %2616 = vmatpush.bf16.msra.mxu0 %v2597
        %2617 = vmatpush.bf16.msra.mxu0 %v2596
        %2618 = vmatpush.bf16.msra.mxu0 %v2595
        %2619 = vmatmul.bf16.gmra.mxu0 %v2545
        %v2620 = vpop.f32.mrf.mxu0
        %v2621 = vadd.f32 0.0, %v2620
        %v2622 = vpop.f32.mrf.mxu0
        %2623 = vdwg.mxu0
        %v2624 = vadd.f32 %v2541, %v2621
        %v2625 = vld [vmem:[%s8] sm:$0x1]
        %v2627 = vperm.slane %v2625, 0
        %v2629 = vadd.f32 %v2624, %v2627
        %v2630 = vmax.f32 %v2629, 0.0
        %2632 = vrot.lane.b32.xlu0 %v2630, 64
        %v2633 = vpop.permute.xlu0 %2632
        %v2635 = vmax.f32 %v2630, %v2633
        %v2637 = vrot.slane %v2635, 1
        %v2639 = vmax.f32 %v2635, %v2637
        %v2640 = vpack.c.bf16 %v2639, %v2639
        %v2641 = vld [vmem:[#allocation11] sm:$0xff]
        %v2642 = vld [vmem:[#allocation11 + $0x8] sm:$0xff]
        %v2643 = vld [vmem:[#allocation11 + $0x10] sm:$0xff]
        %v2644 = vld [vmem:[#allocation11 + $0x18] sm:$0xff]
        %v2645 = vld [vmem:[#allocation11 + $0x20] sm:$0xff]
        %v2646 = vld [vmem:[#allocation11 + $0x28] sm:$0xff]
        %v2647 = vld [vmem:[#allocation11 + $0x30] sm:$0xff]
        %v2648 = vld [vmem:[#allocation11 + $0x38] sm:$0xff]
        %v2649 = vld [vmem:[#allocation11 + $0x40] sm:$0xff]
        %v2650 = vld [vmem:[#allocation11 + $0x48] sm:$0xff]
        %v2651 = vld [vmem:[#allocation11 + $0x50] sm:$0xff]
        %v2652 = vld [vmem:[#allocation11 + $0x58] sm:$0xff]
        %v2653 = vld [vmem:[#allocation11 + $0x60] sm:$0xff]
        %v2654 = vld [vmem:[#allocation11 + $0x68] sm:$0xff]
        %v2655 = vld [vmem:[#allocation11 + $0x70] sm:$0xff]
        %v2656 = vld [vmem:[#allocation11 + $0x78] sm:$0xff]
        %v2657 = vld [vmem:[#allocation11 + $0x80] sm:$0xff]
        %v2658 = vld [vmem:[#allocation11 + $0x88] sm:$0xff]
        %v2659 = vld [vmem:[#allocation11 + $0x90] sm:$0xff]
        %v2660 = vld [vmem:[#allocation11 + $0x98] sm:$0xff]
        %v2661 = vld [vmem:[#allocation11 + $0xa0] sm:$0xff]
        %v2662 = vld [vmem:[#allocation11 + $0xa8] sm:$0xff]
        %v2663 = vld [vmem:[#allocation11 + $0xb0] sm:$0xff]
        %v2664 = vld [vmem:[#allocation11 + $0xb8] sm:$0xff]
        %v2665 = vld [vmem:[#allocation11 + $0xc0] sm:$0xff]
        %v2666 = vld [vmem:[#allocation11 + $0xc8] sm:$0xff]
        %v2667 = vld [vmem:[#allocation11 + $0xd0] sm:$0xff]
        %v2668 = vld [vmem:[#allocation11 + $0xd8] sm:$0xff]
        %v2669 = vld [vmem:[#allocation11 + $0xe0] sm:$0xff]
        %v2670 = vld [vmem:[#allocation11 + $0xe8] sm:$0xff]
        %v2671 = vld [vmem:[#allocation11 + $0xf0] sm:$0xff]
        %v2672 = vld [vmem:[#allocation11 + $0xf8] sm:$0xff]
        %v2673 = vld [vmem:[%s10] sm:$0xff]
        %v2706 = vunpack.c.l.b16 %v2641
        %v2707 = vunpack.c.h.b16 %v2641
        %v2708 = vunpack.c.l.b16 %v2642
        %v2709 = vunpack.c.h.b16 %v2642
        %v2710 = vunpack.c.l.b16 %v2643
        %v2711 = vunpack.c.h.b16 %v2643
        %v2712 = vunpack.c.l.b16 %v2644
        %v2713 = vunpack.c.h.b16 %v2644
        %v2714 = vunpack.c.l.b16 %v2645
        %v2715 = vunpack.c.h.b16 %v2645
        %v2716 = vunpack.c.l.b16 %v2646
        %v2717 = vunpack.c.h.b16 %v2646
        %v2718 = vunpack.c.l.b16 %v2647
        %v2719 = vunpack.c.h.b16 %v2647
        %v2720 = vunpack.c.l.b16 %v2648
        %v2721 = vunpack.c.h.b16 %v2648
        %v2722 = vunpack.c.l.b16 %v2649
        %v2723 = vunpack.c.h.b16 %v2649
        %v2724 = vunpack.c.l.b16 %v2650
        %v2725 = vunpack.c.h.b16 %v2650
        %v2726 = vunpack.c.l.b16 %v2651
        %v2727 = vunpack.c.h.b16 %v2651
        %v2728 = vunpack.c.l.b16 %v2652
        %v2729 = vunpack.c.h.b16 %v2652
        %v2730 = vunpack.c.l.b16 %v2653
        %v2731 = vunpack.c.h.b16 %v2653
        %v2732 = vunpack.c.l.b16 %v2654
        %v2733 = vunpack.c.h.b16 %v2654
        %v2734 = vunpack.c.l.b16 %v2655
        %v2735 = vunpack.c.h.b16 %v2655
        %v2736 = vunpack.c.l.b16 %v2656
        %v2737 = vunpack.c.h.b16 %v2656
        %v2738 = vunpack.c.l.b16 %v2657
        %v2739 = vunpack.c.h.b16 %v2657
        %v2740 = vunpack.c.l.b16 %v2658
        %v2741 = vunpack.c.h.b16 %v2658
        %v2742 = vunpack.c.l.b16 %v2659
        %v2743 = vunpack.c.h.b16 %v2659
        %v2744 = vunpack.c.l.b16 %v2660
        %v2745 = vunpack.c.h.b16 %v2660
        %v2746 = vunpack.c.l.b16 %v2661
        %v2747 = vunpack.c.h.b16 %v2661
        %v2748 = vunpack.c.l.b16 %v2662
        %v2749 = vunpack.c.h.b16 %v2662
        %v2750 = vunpack.c.l.b16 %v2663
        %v2751 = vunpack.c.h.b16 %v2663
        %v2752 = vunpack.c.l.b16 %v2664
        %v2753 = vunpack.c.h.b16 %v2664
        %v2754 = vunpack.c.l.b16 %v2665
        %v2755 = vunpack.c.h.b16 %v2665
        %v2756 = vunpack.c.l.b16 %v2666
        %v2757 = vunpack.c.h.b16 %v2666
        %v2758 = vunpack.c.l.b16 %v2667
        %v2759 = vunpack.c.h.b16 %v2667
        %v2760 = vunpack.c.l.b16 %v2668
        %v2761 = vunpack.c.h.b16 %v2668
        %v2762 = vunpack.c.l.b16 %v2669
        %v2763 = vunpack.c.h.b16 %v2669
        %v2764 = vunpack.c.l.b16 %v2670
        %v2765 = vunpack.c.h.b16 %v2670
        %v2766 = vunpack.c.l.b16 %v2671
        %v2767 = vunpack.c.h.b16 %v2671
        %v2768 = vunpack.c.l.b16 %v2672
        %v2769 = vunpack.c.h.b16 %v2672
        %v2770 = vpack.c.b16 %v2714, %v2706
        %v2771 = vpack.c.b16 %v2715, %v2707
        %v2772 = vpack.c.b16 %v2716, %v2708
        %v2773 = vpack.c.b16 %v2717, %v2709
        %v2774 = vpack.c.b16 %v2718, %v2710
        %v2775 = vpack.c.b16 %v2719, %v2711
        %v2776 = vpack.c.b16 %v2720, %v2712
        %v2777 = vpack.c.b16 %v2721, %v2713
        %v2778 = vpack.c.b16 %v2730, %v2722
        %v2779 = vpack.c.b16 %v2731, %v2723
        %v2780 = vpack.c.b16 %v2732, %v2724
        %v2781 = vpack.c.b16 %v2733, %v2725
        %v2782 = vpack.c.b16 %v2734, %v2726
        %v2783 = vpack.c.b16 %v2735, %v2727
        %v2784 = vpack.c.b16 %v2736, %v2728
        %v2785 = vpack.c.b16 %v2737, %v2729
        %v2786 = vpack.c.b16 %v2746, %v2738
        %v2787 = vpack.c.b16 %v2747, %v2739
        %v2788 = vpack.c.b16 %v2748, %v2740
        %v2789 = vpack.c.b16 %v2749, %v2741
        %v2790 = vpack.c.b16 %v2750, %v2742
        %v2791 = vpack.c.b16 %v2751, %v2743
        %v2792 = vpack.c.b16 %v2752, %v2744
        %v2793 = vpack.c.b16 %v2753, %v2745
        %v2794 = vpack.c.b16 %v2762, %v2754
        %v2795 = vpack.c.b16 %v2763, %v2755
        %v2796 = vpack.c.b16 %v2764, %v2756
        %v2797 = vpack.c.b16 %v2765, %v2757
        %v2798 = vpack.c.b16 %v2766, %v2758
        %v2799 = vpack.c.b16 %v2767, %v2759
        %v2800 = vpack.c.b16 %v2768, %v2760
        %v2801 = vpack.c.b16 %v2769, %v2761
        %v2835 = vperm.slane %v2673, 0
        %v2836 = vperm.slane %v2673, 1
        %v2837 = vperm.slane %v2673, 2
        %v2838 = vperm.slane %v2673, 3
        %v2839 = vperm.slane %v2673, 4
        %v2840 = vperm.slane %v2673, 5
        %v2841 = vperm.slane %v2673, 6
        %v2842 = vperm.slane %v2673, 7
        %v2852 = vsel %vm580, %v2640, 0
        %2854 = vmatpush.bf16.msra.mxu0 0
        %2855 = vmatpush.bf16.msra.mxu0 0
        %2856 = vmatpush.bf16.msra.mxu0 0
        %2857 = vmatpush.bf16.msra.mxu0 0
        %2858 = vmatpush.bf16.msra.mxu0 %v2794
        %2859 = vmatpush.bf16.msra.mxu0 %v2786
        %2860 = vmatpush.bf16.msra.mxu0 %v2778
        %2861 = vmatpush.bf16.msra.mxu0 %v2770
        %2862 = vmatmul.bf16.gmra.mxu0 %v2852
        %v2863 = vpop.f32.mrf.mxu0
        %v2864 = vadd.f32 %v2835, %v2863
        %v2865 = vpop.f32.mrf.mxu0
        %2866 = vdwg.mxu0
        %2867 = vmatpush.bf16.msra.mxu0 0
        %2868 = vmatpush.bf16.msra.mxu0 0
        %2869 = vmatpush.bf16.msra.mxu0 0
        %2870 = vmatpush.bf16.msra.mxu0 0
        %2871 = vmatpush.bf16.msra.mxu0 %v2795
        %2872 = vmatpush.bf16.msra.mxu0 %v2787
        %2873 = vmatpush.bf16.msra.mxu0 %v2779
        %2874 = vmatpush.bf16.msra.mxu0 %v2771
        %2875 = vmatmul.bf16.gmra.mxu0 %v2852
        %v2876 = vpop.f32.mrf.mxu0
        %v2877 = vadd.f32 %v2836, %v2876
        %v2878 = vpop.f32.mrf.mxu0
        %2879 = vdwg.mxu0
        %2880 = vmatpush.bf16.msra.mxu0 0
        %2881 = vmatpush.bf16.msra.mxu0 0
        %2882 = vmatpush.bf16.msra.mxu0 0
        %2883 = vmatpush.bf16.msra.mxu0 0
        %2884 = vmatpush.bf16.msra.mxu0 %v2796
        %2885 = vmatpush.bf16.msra.mxu0 %v2788
        %2886 = vmatpush.bf16.msra.mxu0 %v2780
        %2887 = vmatpush.bf16.msra.mxu0 %v2772
        %2888 = vmatmul.bf16.gmra.mxu0 %v2852
        %v2889 = vpop.f32.mrf.mxu0
        %v2890 = vadd.f32 %v2837, %v2889
        %v2891 = vpop.f32.mrf.mxu0
        %2892 = vdwg.mxu0
        %2893 = vmatpush.bf16.msra.mxu0 0
        %2894 = vmatpush.bf16.msra.mxu0 0
        %2895 = vmatpush.bf16.msra.mxu0 0
        %2896 = vmatpush.bf16.msra.mxu0 0
        %2897 = vmatpush.bf16.msra.mxu0 %v2797
        %2898 = vmatpush.bf16.msra.mxu0 %v2789
        %2899 = vmatpush.bf16.msra.mxu0 %v2781
        %2900 = vmatpush.bf16.msra.mxu0 %v2773
        %2901 = vmatmul.bf16.gmra.mxu0 %v2852
        %v2902 = vpop.f32.mrf.mxu0
        %v2903 = vadd.f32 %v2838, %v2902
        %v2904 = vpop.f32.mrf.mxu0
        %2905 = vdwg.mxu0
        %2906 = vmatpush.bf16.msra.mxu0 0
        %2907 = vmatpush.bf16.msra.mxu0 0
        %2908 = vmatpush.bf16.msra.mxu0 0
        %2909 = vmatpush.bf16.msra.mxu0 0
        %2910 = vmatpush.bf16.msra.mxu0 %v2798
        %2911 = vmatpush.bf16.msra.mxu0 %v2790
        %2912 = vmatpush.bf16.msra.mxu0 %v2782
        %2913 = vmatpush.bf16.msra.mxu0 %v2774
        %2914 = vmatmul.bf16.gmra.mxu0 %v2852
        %v2915 = vpop.f32.mrf.mxu0
        %v2916 = vadd.f32 %v2839, %v2915
        %v2917 = vpop.f32.mrf.mxu0
        %2918 = vdwg.mxu0
        %2919 = vmatpush.bf16.msra.mxu0 0
        %2920 = vmatpush.bf16.msra.mxu0 0
        %2921 = vmatpush.bf16.msra.mxu0 0
        %2922 = vmatpush.bf16.msra.mxu0 0
        %2923 = vmatpush.bf16.msra.mxu0 %v2799
        %2924 = vmatpush.bf16.msra.mxu0 %v2791
        %2925 = vmatpush.bf16.msra.mxu0 %v2783
        %2926 = vmatpush.bf16.msra.mxu0 %v2775
        %2927 = vmatmul.bf16.gmra.mxu0 %v2852
        %v2928 = vpop.f32.mrf.mxu0
        %v2929 = vadd.f32 %v2840, %v2928
        %v2930 = vpop.f32.mrf.mxu0
        %2931 = vdwg.mxu0
        %2932 = vmatpush.bf16.msra.mxu0 0
        %2933 = vmatpush.bf16.msra.mxu0 0
        %2934 = vmatpush.bf16.msra.mxu0 0
        %2935 = vmatpush.bf16.msra.mxu0 0
        %2936 = vmatpush.bf16.msra.mxu0 %v2800
        %2937 = vmatpush.bf16.msra.mxu0 %v2792
        %2938 = vmatpush.bf16.msra.mxu0 %v2784
        %2939 = vmatpush.bf16.msra.mxu0 %v2776
        %2940 = vmatmul.bf16.gmra.mxu0 %v2852
        %v2941 = vpop.f32.mrf.mxu0
        %v2942 = vadd.f32 %v2841, %v2941
        %v2943 = vpop.f32.mrf.mxu0
        %2944 = vdwg.mxu0
        %2945 = vmatpush.bf16.msra.mxu0 0
        %2946 = vmatpush.bf16.msra.mxu0 0
        %2947 = vmatpush.bf16.msra.mxu0 0
        %2948 = vmatpush.bf16.msra.mxu0 0
        %2949 = vmatpush.bf16.msra.mxu0 %v2801
        %2950 = vmatpush.bf16.msra.mxu0 %v2793
        %2951 = vmatpush.bf16.msra.mxu0 %v2785
        %2952 = vmatpush.bf16.msra.mxu0 %v2777
        %2953 = vmatmul.bf16.gmra.mxu0 %v2852
        %v2954 = vpop.f32.mrf.mxu0
        %v2955 = vadd.f32 %v2842, %v2954
        %v2956 = vpop.f32.mrf.mxu0
        %2957 = vdwg.mxu0
        %v2958 = vmax.f32 %v2864, 0.0
        %v2959 = vmax.f32 %v2877, 0.0
        %v2960 = vmax.f32 %v2890, 0.0
        %v2961 = vmax.f32 %v2903, 0.0
        %v2962 = vmax.f32 %v2916, 0.0
        %v2963 = vmax.f32 %v2929, 0.0
        %v2964 = vmax.f32 %v2942, 0.0
        %v2965 = vmax.f32 %v2955, 0.0
        %v2966 = vpack.c.bf16 %v2958, %v2958
        %v2967 = vpack.c.bf16 %v2959, %v2959
        %v2968 = vpack.c.bf16 %v2960, %v2960
        %v2969 = vpack.c.bf16 %v2961, %v2961
        %v2970 = vpack.c.bf16 %v2962, %v2962
        %v2971 = vpack.c.bf16 %v2963, %v2963
        %v2972 = vpack.c.bf16 %v2964, %v2964
        %v2973 = vpack.c.bf16 %v2965, %v2965
        %v2974 = vld [vmem:[#allocation13] sm:$0xf]
        %v2975 = vld [vmem:[#allocation13 + $0x4] sm:$0xf]
        %v2976 = vld [vmem:[#allocation13 + $0x8] sm:$0xf]
        %v2977 = vld [vmem:[#allocation13 + $0xc] sm:$0xf]
        %v2978 = vld [vmem:[#allocation13 + $0x10] sm:$0xf]
        %v2979 = vld [vmem:[#allocation13 + $0x14] sm:$0xf]
        %v2980 = vld [vmem:[#allocation13 + $0x18] sm:$0xf]
        %v2981 = vld [vmem:[#allocation13 + $0x1c] sm:$0xf]
        %v2982 = vld [vmem:[#allocation13 + $0x20] sm:$0xf]
        %v2983 = vld [vmem:[#allocation13 + $0x24] sm:$0xf]
        %v2984 = vld [vmem:[#allocation13 + $0x28] sm:$0xf]
        %v2985 = vld [vmem:[#allocation13 + $0x2c] sm:$0xf]
        %v2986 = vld [vmem:[#allocation13 + $0x30] sm:$0xf]
        %v2987 = vld [vmem:[#allocation13 + $0x34] sm:$0xf]
        %v2988 = vld [vmem:[#allocation13 + $0x38] sm:$0xf]
        %v2989 = vld [vmem:[#allocation13 + $0x3c] sm:$0xf]
        %v2990 = vld [vmem:[#allocation13 + $0x40] sm:$0xf]
        %v2991 = vld [vmem:[#allocation13 + $0x44] sm:$0xf]
        %v2992 = vld [vmem:[#allocation13 + $0x48] sm:$0xf]
        %v2993 = vld [vmem:[#allocation13 + $0x4c] sm:$0xf]
        %v2994 = vld [vmem:[#allocation13 + $0x50] sm:$0xf]
        %v2995 = vld [vmem:[#allocation13 + $0x54] sm:$0xf]
        %v2996 = vld [vmem:[#allocation13 + $0x58] sm:$0xf]
        %v2997 = vld [vmem:[#allocation13 + $0x5c] sm:$0xf]
        %v2998 = vld [vmem:[#allocation13 + $0x60] sm:$0xf]
        %v2999 = vld [vmem:[#allocation13 + $0x64] sm:$0xf]
        %v3000 = vld [vmem:[#allocation13 + $0x68] sm:$0xf]
        %v3001 = vld [vmem:[#allocation13 + $0x6c] sm:$0xf]
        %v3002 = vld [vmem:[#allocation13 + $0x70] sm:$0xf]
        %v3003 = vld [vmem:[#allocation13 + $0x74] sm:$0xf]
        %v3004 = vld [vmem:[#allocation13 + $0x78] sm:$0xf]
        %v3005 = vld [vmem:[#allocation13 + $0x7c] sm:$0xf]
        %v3006 = vld [vmem:[#allocation13 + $0x80] sm:$0xf]
        %v3007 = vld [vmem:[#allocation13 + $0x84] sm:$0xf]
        %v3008 = vld [vmem:[#allocation13 + $0x88] sm:$0xf]
        %v3009 = vld [vmem:[#allocation13 + $0x8c] sm:$0xf]
        %v3010 = vld [vmem:[#allocation13 + $0x90] sm:$0xf]
        %v3011 = vld [vmem:[#allocation13 + $0x94] sm:$0xf]
        %v3012 = vld [vmem:[#allocation13 + $0x98] sm:$0xf]
        %v3013 = vld [vmem:[#allocation13 + $0x9c] sm:$0xf]
        %v3014 = vld [vmem:[#allocation13 + $0xa0] sm:$0xf]
        %v3015 = vld [vmem:[#allocation13 + $0xa4] sm:$0xf]
        %v3016 = vld [vmem:[#allocation13 + $0xa8] sm:$0xf]
        %v3017 = vld [vmem:[#allocation13 + $0xac] sm:$0xf]
        %v3018 = vld [vmem:[#allocation13 + $0xb0] sm:$0xf]
        %v3019 = vld [vmem:[#allocation13 + $0xb4] sm:$0xf]
        %v3020 = vld [vmem:[#allocation13 + $0xb8] sm:$0xf]
        %v3021 = vld [vmem:[#allocation13 + $0xbc] sm:$0xf]
        %v3022 = vld [vmem:[#allocation13 + $0xc0] sm:$0xf]
        %v3023 = vld [vmem:[#allocation13 + $0xc4] sm:$0xf]
        %v3024 = vld [vmem:[#allocation13 + $0xc8] sm:$0xf]
        %v3025 = vld [vmem:[#allocation13 + $0xcc] sm:$0xf]
        %v3026 = vld [vmem:[#allocation13 + $0xd0] sm:$0xf]
        %v3027 = vld [vmem:[#allocation13 + $0xd4] sm:$0xf]
        %v3028 = vld [vmem:[#allocation13 + $0xd8] sm:$0xf]
        %v3029 = vld [vmem:[#allocation13 + $0xdc] sm:$0xf]
        %v3030 = vld [vmem:[#allocation13 + $0xe0] sm:$0xf]
        %v3031 = vld [vmem:[#allocation13 + $0xe4] sm:$0xf]
        %v3032 = vld [vmem:[#allocation13 + $0xe8] sm:$0xf]
        %v3033 = vld [vmem:[#allocation13 + $0xec] sm:$0xf]
        %v3034 = vld [vmem:[#allocation13 + $0xf0] sm:$0xf]
        %v3035 = vld [vmem:[#allocation13 + $0xf4] sm:$0xf]
        %v3036 = vld [vmem:[#allocation13 + $0xf8] sm:$0xf]
        %v3037 = vld [vmem:[#allocation13 + $0xfc] sm:$0xf]
        %v3038 = vld [vmem:[#allocation13 + $0x100] sm:$0xf]
        %v3039 = vld [vmem:[#allocation13 + $0x104] sm:$0xf]
        %v3040 = vld [vmem:[#allocation13 + $0x108] sm:$0xf]
        %v3041 = vld [vmem:[#allocation13 + $0x10c] sm:$0xf]
        %v3042 = vld [vmem:[#allocation13 + $0x110] sm:$0xf]
        %v3043 = vld [vmem:[#allocation13 + $0x114] sm:$0xf]
        %v3044 = vld [vmem:[#allocation13 + $0x118] sm:$0xf]
        %v3045 = vld [vmem:[#allocation13 + $0x11c] sm:$0xf]
        %v3046 = vld [vmem:[#allocation13 + $0x120] sm:$0xf]
        %v3047 = vld [vmem:[#allocation13 + $0x124] sm:$0xf]
        %v3048 = vld [vmem:[#allocation13 + $0x128] sm:$0xf]
        %v3049 = vld [vmem:[#allocation13 + $0x12c] sm:$0xf]
        %v3050 = vld [vmem:[#allocation13 + $0x130] sm:$0xf]
        %v3051 = vld [vmem:[#allocation13 + $0x134] sm:$0xf]
        %v3052 = vld [vmem:[#allocation13 + $0x138] sm:$0xf]
        %v3053 = vld [vmem:[#allocation13 + $0x13c] sm:$0xf]
        %v3054 = vld [vmem:[#allocation13 + $0x140] sm:$0xf]
        %v3055 = vld [vmem:[#allocation13 + $0x144] sm:$0xf]
        %v3056 = vld [vmem:[#allocation13 + $0x148] sm:$0xf]
        %v3057 = vld [vmem:[#allocation13 + $0x14c] sm:$0xf]
        %v3058 = vld [vmem:[#allocation13 + $0x150] sm:$0xf]
        %v3059 = vld [vmem:[#allocation13 + $0x154] sm:$0xf]
        %v3060 = vld [vmem:[#allocation13 + $0x158] sm:$0xf]
        %v3061 = vld [vmem:[#allocation13 + $0x15c] sm:$0xf]
        %v3062 = vld [vmem:[#allocation13 + $0x160] sm:$0xf]
        %v3063 = vld [vmem:[#allocation13 + $0x164] sm:$0xf]
        %v3064 = vld [vmem:[#allocation13 + $0x168] sm:$0xf]
        %v3065 = vld [vmem:[#allocation13 + $0x16c] sm:$0xf]
        %v3066 = vld [vmem:[#allocation13 + $0x170] sm:$0xf]
        %v3067 = vld [vmem:[#allocation13 + $0x174] sm:$0xf]
        %v3068 = vld [vmem:[#allocation13 + $0x178] sm:$0xf]
        %v3069 = vld [vmem:[#allocation13 + $0x17c] sm:$0xf]
        %v3070 = vld [vmem:[#allocation13 + $0x180] sm:$0xf]
        %v3071 = vld [vmem:[#allocation13 + $0x184] sm:$0xf]
        %v3072 = vld [vmem:[#allocation13 + $0x188] sm:$0xf]
        %v3073 = vld [vmem:[#allocation13 + $0x18c] sm:$0xf]
        %v3074 = vld [vmem:[#allocation13 + $0x190] sm:$0xf]
        %v3075 = vld [vmem:[#allocation13 + $0x194] sm:$0xf]
        %v3076 = vld [vmem:[#allocation13 + $0x198] sm:$0xf]
        %v3077 = vld [vmem:[#allocation13 + $0x19c] sm:$0xf]
        %v3078 = vld [vmem:[#allocation13 + $0x1a0] sm:$0xf]
        %v3079 = vld [vmem:[#allocation13 + $0x1a4] sm:$0xf]
        %v3080 = vld [vmem:[#allocation13 + $0x1a8] sm:$0xf]
        %v3081 = vld [vmem:[#allocation13 + $0x1ac] sm:$0xf]
        %v3082 = vld [vmem:[#allocation13 + $0x1b0] sm:$0xf]
        %v3083 = vld [vmem:[#allocation13 + $0x1b4] sm:$0xf]
        %v3084 = vld [vmem:[#allocation13 + $0x1b8] sm:$0xf]
        %v3085 = vld [vmem:[#allocation13 + $0x1bc] sm:$0xf]
        %v3086 = vld [vmem:[#allocation13 + $0x1c0] sm:$0xf]
        %v3087 = vld [vmem:[#allocation13 + $0x1c4] sm:$0xf]
        %v3088 = vld [vmem:[#allocation13 + $0x1c8] sm:$0xf]
        %v3089 = vld [vmem:[#allocation13 + $0x1cc] sm:$0xf]
        %v3090 = vld [vmem:[#allocation13 + $0x1d0] sm:$0xf]
        %v3091 = vld [vmem:[#allocation13 + $0x1d4] sm:$0xf]
        %v3092 = vld [vmem:[#allocation13 + $0x1d8] sm:$0xf]
        %v3093 = vld [vmem:[#allocation13 + $0x1dc] sm:$0xf]
        %v3094 = vld [vmem:[#allocation13 + $0x1e0] sm:$0xf]
        %v3095 = vld [vmem:[#allocation13 + $0x1e4] sm:$0xf]
        %v3096 = vld [vmem:[#allocation13 + $0x1e8] sm:$0xf]
        %v3097 = vld [vmem:[#allocation13 + $0x1ec] sm:$0xf]
        %v3098 = vld [vmem:[#allocation13 + $0x1f0] sm:$0xf]
        %v3099 = vld [vmem:[#allocation13 + $0x1f4] sm:$0xf]
        %v3100 = vld [vmem:[#allocation13 + $0x1f8] sm:$0xf]
        %v3101 = vld [vmem:[#allocation13 + $0x1fc] sm:$0xf]
        %v3102 = vld [vmem:[%s12] sm:$0x1]
        %v3231 = vunpack.c.l.b16 %v2974
        %v3232 = vunpack.c.l.b16 %v2975
        %v3233 = vunpack.c.l.b16 %v2976
        %v3234 = vunpack.c.l.b16 %v2977
        %v3235 = vunpack.c.l.b16 %v2978
        %v3236 = vunpack.c.l.b16 %v2979
        %v3237 = vunpack.c.l.b16 %v2980
        %v3238 = vunpack.c.l.b16 %v2981
        %v3239 = vunpack.c.l.b16 %v2982
        %v3240 = vunpack.c.l.b16 %v2983
        %v3241 = vunpack.c.l.b16 %v2984
        %v3242 = vunpack.c.l.b16 %v2985
        %v3243 = vunpack.c.l.b16 %v2986
        %v3244 = vunpack.c.l.b16 %v2987
        %v3245 = vunpack.c.l.b16 %v2988
        %v3246 = vunpack.c.l.b16 %v2989
        %v3247 = vunpack.c.l.b16 %v2990
        %v3248 = vunpack.c.l.b16 %v2991
        %v3249 = vunpack.c.l.b16 %v2992
        %v3250 = vunpack.c.l.b16 %v2993
        %v3251 = vunpack.c.l.b16 %v2994
        %v3252 = vunpack.c.l.b16 %v2995
        %v3253 = vunpack.c.l.b16 %v2996
        %v3254 = vunpack.c.l.b16 %v2997
        %v3255 = vunpack.c.l.b16 %v2998
        %v3256 = vunpack.c.l.b16 %v2999
        %v3257 = vunpack.c.l.b16 %v3000
        %v3258 = vunpack.c.l.b16 %v3001
        %v3259 = vunpack.c.l.b16 %v3002
        %v3260 = vunpack.c.l.b16 %v3003
        %v3261 = vunpack.c.l.b16 %v3004
        %v3262 = vunpack.c.l.b16 %v3005
        %v3263 = vunpack.c.l.b16 %v3006
        %v3264 = vunpack.c.l.b16 %v3007
        %v3265 = vunpack.c.l.b16 %v3008
        %v3266 = vunpack.c.l.b16 %v3009
        %v3267 = vunpack.c.l.b16 %v3010
        %v3268 = vunpack.c.l.b16 %v3011
        %v3269 = vunpack.c.l.b16 %v3012
        %v3270 = vunpack.c.l.b16 %v3013
        %v3271 = vunpack.c.l.b16 %v3014
        %v3272 = vunpack.c.l.b16 %v3015
        %v3273 = vunpack.c.l.b16 %v3016
        %v3274 = vunpack.c.l.b16 %v3017
        %v3275 = vunpack.c.l.b16 %v3018
        %v3276 = vunpack.c.l.b16 %v3019
        %v3277 = vunpack.c.l.b16 %v3020
        %v3278 = vunpack.c.l.b16 %v3021
        %v3279 = vunpack.c.l.b16 %v3022
        %v3280 = vunpack.c.l.b16 %v3023
        %v3281 = vunpack.c.l.b16 %v3024
        %v3282 = vunpack.c.l.b16 %v3025
        %v3283 = vunpack.c.l.b16 %v3026
        %v3284 = vunpack.c.l.b16 %v3027
        %v3285 = vunpack.c.l.b16 %v3028
        %v3286 = vunpack.c.l.b16 %v3029
        %v3287 = vunpack.c.l.b16 %v3030
        %v3288 = vunpack.c.l.b16 %v3031
        %v3289 = vunpack.c.l.b16 %v3032
        %v3290 = vunpack.c.l.b16 %v3033
        %v3291 = vunpack.c.l.b16 %v3034
        %v3292 = vunpack.c.l.b16 %v3035
        %v3293 = vunpack.c.l.b16 %v3036
        %v3294 = vunpack.c.l.b16 %v3037
        %v3295 = vunpack.c.l.b16 %v3038
        %v3296 = vunpack.c.l.b16 %v3039
        %v3297 = vunpack.c.l.b16 %v3040
        %v3298 = vunpack.c.l.b16 %v3041
        %v3299 = vunpack.c.l.b16 %v3042
        %v3300 = vunpack.c.l.b16 %v3043
        %v3301 = vunpack.c.l.b16 %v3044
        %v3302 = vunpack.c.l.b16 %v3045
        %v3303 = vunpack.c.l.b16 %v3046
        %v3304 = vunpack.c.l.b16 %v3047
        %v3305 = vunpack.c.l.b16 %v3048
        %v3306 = vunpack.c.l.b16 %v3049
        %v3307 = vunpack.c.l.b16 %v3050
        %v3308 = vunpack.c.l.b16 %v3051
        %v3309 = vunpack.c.l.b16 %v3052
        %v3310 = vunpack.c.l.b16 %v3053
        %v3311 = vunpack.c.l.b16 %v3054
        %v3312 = vunpack.c.l.b16 %v3055
        %v3313 = vunpack.c.l.b16 %v3056
        %v3314 = vunpack.c.l.b16 %v3057
        %v3315 = vunpack.c.l.b16 %v3058
        %v3316 = vunpack.c.l.b16 %v3059
        %v3317 = vunpack.c.l.b16 %v3060
        %v3318 = vunpack.c.l.b16 %v3061
        %v3319 = vunpack.c.l.b16 %v3062
        %v3320 = vunpack.c.l.b16 %v3063
        %v3321 = vunpack.c.l.b16 %v3064
        %v3322 = vunpack.c.l.b16 %v3065
        %v3323 = vunpack.c.l.b16 %v3066
        %v3324 = vunpack.c.l.b16 %v3067
        %v3325 = vunpack.c.l.b16 %v3068
        %v3326 = vunpack.c.l.b16 %v3069
        %v3327 = vunpack.c.l.b16 %v3070
        %v3328 = vunpack.c.l.b16 %v3071
        %v3329 = vunpack.c.l.b16 %v3072
        %v3330 = vunpack.c.l.b16 %v3073
        %v3331 = vunpack.c.l.b16 %v3074
        %v3332 = vunpack.c.l.b16 %v3075
        %v3333 = vunpack.c.l.b16 %v3076
        %v3334 = vunpack.c.l.b16 %v3077
        %v3335 = vunpack.c.l.b16 %v3078
        %v3336 = vunpack.c.l.b16 %v3079
        %v3337 = vunpack.c.l.b16 %v3080
        %v3338 = vunpack.c.l.b16 %v3081
        %v3339 = vunpack.c.l.b16 %v3082
        %v3340 = vunpack.c.l.b16 %v3083
        %v3341 = vunpack.c.l.b16 %v3084
        %v3342 = vunpack.c.l.b16 %v3085
        %v3343 = vunpack.c.l.b16 %v3086
        %v3344 = vunpack.c.l.b16 %v3087
        %v3345 = vunpack.c.l.b16 %v3088
        %v3346 = vunpack.c.l.b16 %v3089
        %v3347 = vunpack.c.l.b16 %v3090
        %v3348 = vunpack.c.l.b16 %v3091
        %v3349 = vunpack.c.l.b16 %v3092
        %v3350 = vunpack.c.l.b16 %v3093
        %v3351 = vunpack.c.l.b16 %v3094
        %v3352 = vunpack.c.l.b16 %v3095
        %v3353 = vunpack.c.l.b16 %v3096
        %v3354 = vunpack.c.l.b16 %v3097
        %v3355 = vunpack.c.l.b16 %v3098
        %v3356 = vunpack.c.l.b16 %v3099
        %v3357 = vunpack.c.l.b16 %v3100
        %v3358 = vunpack.c.l.b16 %v3101
        %v3359 = vpack.c.b16 %v3232, %v3231
        %v3360 = vpack.c.b16 %v3234, %v3233
        %v3361 = vpack.c.b16 %v3236, %v3235
        %v3362 = vpack.c.b16 %v3238, %v3237
        %v3363 = vpack.c.b16 %v3240, %v3239
        %v3364 = vpack.c.b16 %v3242, %v3241
        %v3365 = vpack.c.b16 %v3244, %v3243
        %v3366 = vpack.c.b16 %v3246, %v3245
        %v3367 = vpack.c.b16 %v3248, %v3247
        %v3368 = vpack.c.b16 %v3250, %v3249
        %v3369 = vpack.c.b16 %v3252, %v3251
        %v3370 = vpack.c.b16 %v3254, %v3253
        %v3371 = vpack.c.b16 %v3256, %v3255
        %v3372 = vpack.c.b16 %v3258, %v3257
        %v3373 = vpack.c.b16 %v3260, %v3259
        %v3374 = vpack.c.b16 %v3262, %v3261
        %v3375 = vpack.c.b16 %v3264, %v3263
        %v3376 = vpack.c.b16 %v3266, %v3265
        %v3377 = vpack.c.b16 %v3268, %v3267
        %v3378 = vpack.c.b16 %v3270, %v3269
        %v3379 = vpack.c.b16 %v3272, %v3271
        %v3380 = vpack.c.b16 %v3274, %v3273
        %v3381 = vpack.c.b16 %v3276, %v3275
        %v3382 = vpack.c.b16 %v3278, %v3277
        %v3383 = vpack.c.b16 %v3280, %v3279
        %v3384 = vpack.c.b16 %v3282, %v3281
        %v3385 = vpack.c.b16 %v3284, %v3283
        %v3386 = vpack.c.b16 %v3286, %v3285
        %v3387 = vpack.c.b16 %v3288, %v3287
        %v3388 = vpack.c.b16 %v3290, %v3289
        %v3389 = vpack.c.b16 %v3292, %v3291
        %v3390 = vpack.c.b16 %v3294, %v3293
        %v3391 = vpack.c.b16 %v3296, %v3295
        %v3392 = vpack.c.b16 %v3298, %v3297
        %v3393 = vpack.c.b16 %v3300, %v3299
        %v3394 = vpack.c.b16 %v3302, %v3301
        %v3395 = vpack.c.b16 %v3304, %v3303
        %v3396 = vpack.c.b16 %v3306, %v3305
        %v3397 = vpack.c.b16 %v3308, %v3307
        %v3398 = vpack.c.b16 %v3310, %v3309
        %v3399 = vpack.c.b16 %v3312, %v3311
        %v3400 = vpack.c.b16 %v3314, %v3313
        %v3401 = vpack.c.b16 %v3316, %v3315
        %v3402 = vpack.c.b16 %v3318, %v3317
        %v3403 = vpack.c.b16 %v3320, %v3319
        %v3404 = vpack.c.b16 %v3322, %v3321
        %v3405 = vpack.c.b16 %v3324, %v3323
        %v3406 = vpack.c.b16 %v3326, %v3325
        %v3407 = vpack.c.b16 %v3328, %v3327
        %v3408 = vpack.c.b16 %v3330, %v3329
        %v3409 = vpack.c.b16 %v3332, %v3331
        %v3410 = vpack.c.b16 %v3334, %v3333
        %v3411 = vpack.c.b16 %v3336, %v3335
        %v3412 = vpack.c.b16 %v3338, %v3337
        %v3413 = vpack.c.b16 %v3340, %v3339
        %v3414 = vpack.c.b16 %v3342, %v3341
        %v3415 = vpack.c.b16 %v3344, %v3343
        %v3416 = vpack.c.b16 %v3346, %v3345
        %v3417 = vpack.c.b16 %v3348, %v3347
        %v3418 = vpack.c.b16 %v3350, %v3349
        %v3419 = vpack.c.b16 %v3352, %v3351
        %v3420 = vpack.c.b16 %v3354, %v3353
        %v3421 = vpack.c.b16 %v3356, %v3355
        %v3422 = vpack.c.b16 %v3358, %v3357
        %3487 = vmatpush.bf16.msra.mxu0 %v3366
        %3488 = vmatpush.bf16.msra.mxu0 %v3365
        %3489 = vmatpush.bf16.msra.mxu0 %v3364
        %3490 = vmatpush.bf16.msra.mxu0 %v3363
        %3491 = vmatpush.bf16.msra.mxu0 %v3362
        %3492 = vmatpush.bf16.msra.mxu0 %v3361
        %3493 = vmatpush.bf16.msra.mxu0 %v3360
        %3494 = vmatpush.bf16.msra.mxu0 %v3359
        %3495 = vmatmul.bf16.gmra.mxu0 %v2966
        %v3496 = vpop.f32.mrf.mxu0
        %v3497 = vadd.f32 %v3102, %v3496
        %v3498 = vpop.f32.mrf.mxu0
        %3499 = vdwg.mxu0
        %3500 = vmatpush.bf16.msra.mxu0 %v3374
        %3501 = vmatpush.bf16.msra.mxu0 %v3373
        %3502 = vmatpush.bf16.msra.mxu0 %v3372
        %3503 = vmatpush.bf16.msra.mxu0 %v3371
        %3504 = vmatpush.bf16.msra.mxu0 %v3370
        %3505 = vmatpush.bf16.msra.mxu0 %v3369
        %3506 = vmatpush.bf16.msra.mxu0 %v3368
        %3507 = vmatpush.bf16.msra.mxu0 %v3367
        %3508 = vmatmul.bf16.gmra.mxu0 %v2967
        %v3509 = vpop.f32.mrf.mxu0
        %v3510 = vadd.f32 %v3497, %v3509
        %v3511 = vpop.f32.mrf.mxu0
        %3512 = vdwg.mxu0
        %3513 = vmatpush.bf16.msra.mxu0 %v3382
        %3514 = vmatpush.bf16.msra.mxu0 %v3381
        %3515 = vmatpush.bf16.msra.mxu0 %v3380
        %3516 = vmatpush.bf16.msra.mxu0 %v3379
        %3517 = vmatpush.bf16.msra.mxu0 %v3378
        %3518 = vmatpush.bf16.msra.mxu0 %v3377
        %3519 = vmatpush.bf16.msra.mxu0 %v3376
        %3520 = vmatpush.bf16.msra.mxu0 %v3375
        %3521 = vmatmul.bf16.gmra.mxu0 %v2968
        %v3522 = vpop.f32.mrf.mxu0
        %v3523 = vadd.f32 %v3510, %v3522
        %v3524 = vpop.f32.mrf.mxu0
        %3525 = vdwg.mxu0
        %3526 = vmatpush.bf16.msra.mxu0 %v3390
        %3527 = vmatpush.bf16.msra.mxu0 %v3389
        %3528 = vmatpush.bf16.msra.mxu0 %v3388
        %3529 = vmatpush.bf16.msra.mxu0 %v3387
        %3530 = vmatpush.bf16.msra.mxu0 %v3386
        %3531 = vmatpush.bf16.msra.mxu0 %v3385
        %3532 = vmatpush.bf16.msra.mxu0 %v3384
        %3533 = vmatpush.bf16.msra.mxu0 %v3383
        %3534 = vmatmul.bf16.gmra.mxu0 %v2969
        %v3535 = vpop.f32.mrf.mxu0
        %v3536 = vadd.f32 %v3523, %v3535
        %v3537 = vpop.f32.mrf.mxu0
        %3538 = vdwg.mxu0
        %3539 = vmatpush.bf16.msra.mxu0 %v3398
        %3540 = vmatpush.bf16.msra.mxu0 %v3397
        %3541 = vmatpush.bf16.msra.mxu0 %v3396
        %3542 = vmatpush.bf16.msra.mxu0 %v3395
        %3543 = vmatpush.bf16.msra.mxu0 %v3394
        %3544 = vmatpush.bf16.msra.mxu0 %v3393
        %3545 = vmatpush.bf16.msra.mxu0 %v3392
        %3546 = vmatpush.bf16.msra.mxu0 %v3391
        %3547 = vmatmul.bf16.gmra.mxu0 %v2970
        %v3548 = vpop.f32.mrf.mxu0
        %v3549 = vadd.f32 %v3536, %v3548
        %v3550 = vpop.f32.mrf.mxu0
        %3551 = vdwg.mxu0
        %3552 = vmatpush.bf16.msra.mxu0 %v3406
        %3553 = vmatpush.bf16.msra.mxu0 %v3405
        %3554 = vmatpush.bf16.msra.mxu0 %v3404
        %3555 = vmatpush.bf16.msra.mxu0 %v3403
        %3556 = vmatpush.bf16.msra.mxu0 %v3402
        %3557 = vmatpush.bf16.msra.mxu0 %v3401
        %3558 = vmatpush.bf16.msra.mxu0 %v3400
        %3559 = vmatpush.bf16.msra.mxu0 %v3399
        %3560 = vmatmul.bf16.gmra.mxu0 %v2971
        %v3561 = vpop.f32.mrf.mxu0
        %v3562 = vadd.f32 %v3549, %v3561
        %v3563 = vpop.f32.mrf.mxu0
        %3564 = vdwg.mxu0
        %3565 = vmatpush.bf16.msra.mxu0 %v3414
        %3566 = vmatpush.bf16.msra.mxu0 %v3413
        %3567 = vmatpush.bf16.msra.mxu0 %v3412
        %3568 = vmatpush.bf16.msra.mxu0 %v3411
        %3569 = vmatpush.bf16.msra.mxu0 %v3410
        %3570 = vmatpush.bf16.msra.mxu0 %v3409
        %3571 = vmatpush.bf16.msra.mxu0 %v3408
        %3572 = vmatpush.bf16.msra.mxu0 %v3407
        %3573 = vmatmul.bf16.gmra.mxu0 %v2972
        %v3574 = vpop.f32.mrf.mxu0
        %v3575 = vadd.f32 %v3562, %v3574
        %v3576 = vpop.f32.mrf.mxu0
        %3577 = vdwg.mxu0
        %3578 = vmatpush.bf16.msra.mxu0 %v3422
        %3579 = vmatpush.bf16.msra.mxu0 %v3421
        %3580 = vmatpush.bf16.msra.mxu0 %v3420
        %3581 = vmatpush.bf16.msra.mxu0 %v3419
        %3582 = vmatpush.bf16.msra.mxu0 %v3418
        %3583 = vmatpush.bf16.msra.mxu0 %v3417
        %3584 = vmatpush.bf16.msra.mxu0 %v3416
        %3585 = vmatpush.bf16.msra.mxu0 %v3415
        %3586 = vmatmul.bf16.gmra.mxu0 %v2973
        %v3587 = vpop.f32.mrf.mxu0
        %v3588 = vadd.f32 %v3575, %v3587
        %v3589 = vpop.f32.mrf.mxu0
        %3590 = vdwg.mxu0
        %3591 = vst [vmem:[%s516] sm:$0x1] %v3588
        %p3592 = scmp.lt.s32.totalorder %s27, 1
        %s3593 = scalar_select %p3592, %s27, 1
        %s3594 = scalar_lea.vmem %s13, %s3593
        // Predicated region
        $region93: #{model_forward.1} parent=71 // pred_check
          %p3595 = pneg %p323
        $region94: #{model_forward.1} parent=71 // pred_check_branch
          %3597 = sbr.rel (%p3595) target = $region96
        $region95: #{model_forward.1} parent=71 // pred_region
          _
        $region96: #{model_forward.1} parent=71 // pred_fallthru
          _
      $region72: #{model_forward.1} parent=5 // pred_fallthru
        _
      %p3598 = scmp.le.s32.totalorder 2, %s22
      // Predicated region
      $region97: #{model_forward.1} parent=5 // pred_check
        %p3599 = pneg %p3598
      $region98: #{model_forward.1} parent=5 // pred_check_branch
        %3601 = sbr.rel (%p3599) target = $region100
      $region99: #{model_forward.1} parent=5 // pred_region
        %s3602 = ssub.s32 %s22, 2
        // Predicated region
        $region101: #{model_forward.1} parent=99 // pred_check
          %p3603 = pneg %p329
        $region102: #{model_forward.1} parent=99 // pred_check_branch
          %3605 = sbr.rel (%p3603) target = $region104
        $region103: #{model_forward.1} parent=99 // pred_region
          %p3606 = scmp.lt.s32.totalorder %s28, 1
          %s3607 = scalar_select %p3606, %s28, 1
          %s3608 = scalar_lea.vmem %s13, %s3607
        $region104: #{model_forward.1} parent=99 // pred_fallthru
          _
      $region100: #{model_forward.1} parent=5 // pred_fallthru
        _
    $region6: #{model_forward.1} parent=1 // loop_footer
      %s26 = sadd.s32 1, %s22
    $region7: #{model_forward.1} parent=1 // loop_footer_branch
      %21 = sbr.rel target = $region3
    $region8: #{model_forward.1} parent=1 // loop_exit
      _
    %3609 = vsyncpa [#allocation7], 1
    %s3610 = scalar_lea.sflag [#allocation7], 1
    %3611 = vsyncpa %s3610, 1
    %3612 = vsyncpa [#allocation9], 1
    %3613 = vsyncpa [#allocation12], 1

</llo_original>
